<compile_context>
chip_gen: v7x
topology: tpu7x:2x2x1
jax: 0.10.0
libtpu: 0.0.40
codegen_flags: <defaults>
</compile_context>

<pallas_src>
import functools

import jax
import jax.numpy as jnp
from jax.experimental import pallas as pl
from jax.experimental.pallas import tpu as pltpu

NUM_HEADS = 4
LANE = 128        # lane width: every channel-like dim padded to a multiple of this
SUBLANE = 8       # f32 sublanes: sequence length rounded up to a multiple of this
KV_TILE = 256     # key/value tile for the online-softmax attention loop


def _round_up(x, m):
    return ((x + m - 1) // m) * m


def _vmem_capacity_bytes():
    """Per-generation VMEM capacity (falls back to the v7x 64 MiB if unknown)."""
    try:
        info = pltpu.get_tpu_info()
        for name in ("vmem_capacity_bytes", "vmem_bytes", "vmem_size_bytes"):
            v = getattr(info, name, None)
            if v:
                return int(v)
    except Exception:
        pass
    return 64 * 1024 * 1024


# ---------------------------------------------------------------------------
# Pallas kernel
# ---------------------------------------------------------------------------
def temporal_block_kernel(x_ref, w1_ref, b1_ref, w2_ref, b2_ref, wd_ref, bd_ref,
                          wqkv_ref, bqkv_ref, wo_ref, bo_ref, o_ref, hp_ref,
                          *, dilation, num_heads, seq_len, kv_tile):
    f32, bf16 = jnp.float32, jnp.bfloat16
    Bt, Lp, E_p = o_ref.shape
    K = w1_ref.shape[0]
    Dh_p = wo_ref.shape[1]               # per-head dim, padded to a multiple of 128
    HD = num_heads * Dh_p
    pad = dilation * (K - 1)
    M = Bt * Lp

    # ---- conv1 -> chomp1 -> relu1 (dropout1: identity) ---------------------
    # x_ref is causally front-padded by `pad` rows in the wrapper, already bf16.
    acc1 = jnp.zeros((M, E_p), f32)
    x_last = None
    for kk in range(K):
        xk = x_ref[:, kk * dilation:kk * dilation + Lp, :].reshape(M, -1)
        if kk == K - 1:                  # unshifted input; reused by the residual path
            x_last = xk
        acc1 = acc1 + jnp.dot(xk, w1_ref[kk], preferred_element_type=f32)

    # residual 1x1 conv: computed here so the input block dies before attention;
    # `res` doubles as the accumulator for the attention output.
    res = jnp.dot(x_last, wd_ref[...], preferred_element_type=f32) + bd_ref[...]

    h1 = jnp.maximum(acc1 + b1_ref[...], 0.0).astype(bf16)

    # stage conv1 output (bf16) behind a 16-row-aligned block of leading zeros so
    # the second causal conv can read shifted windows; stores stay tile aligned.
    pad_al = hp_ref.shape[1] - Lp
    if pad_al > 0:
        hp_ref[:, :pad_al, :] = jnp.zeros((Bt, pad_al, E_p), bf16)
    hp_ref[:, pad_al:, :] = h1.reshape(Bt, Lp, E_p)

    # ---- conv2 -> chomp2 -> relu2 (dropout2: identity) ---------------------
    base = pad_al - pad
    acc2 = jnp.zeros((M, E_p), f32)
    for kk in range(K):
        hk = hp_ref[:, base + kk * dilation:base + kk * dilation + Lp, :]
        acc2 = acc2 + jnp.dot(hk.reshape(M, E_p), w2_ref[kk],
                              preferred_element_type=f32)
    h2b = jnp.maximum(acc2 + b2_ref[...], 0.0).astype(bf16)

    # ---- multi-head self-attention (q = k = v = conv output) ---------------
    # single fused q|k|v projection (1/sqrt(Dh) is baked into the packed q columns)
    qkv = jnp.dot(h2b, wqkv_ref[...], preferred_element_type=f32) + bqkv_ref[...]
    q3 = qkv[:, :HD].astype(bf16).reshape(Bt, Lp, HD)
    k3 = qkv[:, HD:2 * HD].astype(bf16).reshape(Bt, Lp, HD)
    v3 = qkv[:, 2 * HD:].astype(bf16).reshape(Bt, Lp, HD)

    nk = Lp // kv_tile
    need_mask = Lp != seq_len            # only padded key positions get masked
    if need_mask:
        kmask = (jax.lax.broadcasted_iota(jnp.int32, (1, 1, kv_tile), 2)
                 + (nk - 1) * kv_tile) < seq_len

    acc_out = res                        # (M, E_p) f32: residual + sum of head outputs
    for hd in range(num_heads):
        lo = hd * Dh_p
        qh = q3[:, :, lo:lo + Dh_p]      # whole-lane-tile slice (Dh_p % 128 == 0)
        m_run = jnp.full((Bt, Lp, 1), -1e30, f32)
        l_run = jnp.zeros((Bt, Lp, 1), f32)
        o_run = jnp.zeros((Bt, Lp, Dh_p), f32)
        # online (flash-style) softmax over key/value tiles: the score tile is
        # bounded to (Bt, Lp, kv_tile) instead of the full (Bt, Lp, Lp).
        for kb in range(nk):
            ks = kb * kv_tile
            kh = k3[:, ks:ks + kv_tile, lo:lo + Dh_p]
            vh = v3[:, ks:ks + kv_tile, lo:lo + Dh_p]
            s = jnp.einsum('bqd,bkd->bqk', qh, kh, preferred_element_type=f32)
            if need_mask and kb == nk - 1:
                s = jnp.where(kmask, s, -1e30)
            m_new = jnp.maximum(m_run, jnp.max(s, axis=-1, keepdims=True))
            alpha = jnp.exp(m_run - m_new)
            p = jnp.exp(s - m_new)
            l_run = alpha * l_run + jnp.sum(p, axis=-1, keepdims=True)
            o_run = alpha * o_run + jnp.einsum('bqk,bkd->bqd', p.astype(bf16), vh,
                                               preferred_element_type=f32)
            m_run = m_new
        oh = o_run * pl.reciprocal(l_run, approx=True)        # EUP reciprocal
        # fold the output projection per head (padded head rows of wo are zero)
        acc_out = acc_out + jnp.dot(oh.reshape(M, Dh_p).astype(bf16), wo_ref[hd],
                                    preferred_element_type=f32)

    # ---- + out-proj bias, final relu ----------------------------------------
    out = jnp.maximum(acc_out + bo_ref[...], 0.0)
    o_ref[...] = out.reshape(Bt, Lp, E_p).astype(o_ref.dtype)


# ---------------------------------------------------------------------------
# wrapper
# ---------------------------------------------------------------------------
def temporal_block(x_ncl, packed_params, *, out_channels, kernel_size, dilation,
                   num_heads=NUM_HEADS, batch_tile=None, kv_tile=None):
    """x_ncl: (N, Cin, L) like PyTorch; returns (N, Cout, L) float32."""
    (w1, b1, w2, b2, wd, bd, wqkv, bqkv, wo, bo) = packed_params
    N, Cin, L = x_ncl.shape
    E = out_channels
    K = kernel_size
    H = num_heads
    Cp, E_p = wd.shape
    Dh_p = wo.shape[1]
    HD = H * Dh_p
    pad = dilation * (K - 1)

    # sequence padding + flash key-tile size (kv_tile must divide the padded L)
    if kv_tile is None:
        Ls = _round_up(L, SUBLANE)
        kv_tile = Ls if Ls <= KV_TILE else KV_TILE
    assert kv_tile % SUBLANE == 0
    Lp = _round_up(L, kv_tile)
    PL = pad + Lp                                               # padded input rows
    HP = (_round_up(pad, 2 * SUBLANE) if pad else 0) + Lp       # staging scratch rows

    # ---- per-generation VMEM budget -> batch tile + vmem limit -------------
    vmem_cap = _vmem_capacity_bytes()
    budget = int(0.70 * vmem_cap)
    w_bytes = (2 * 2 * (w1.size + w2.size + wd.size + wqkv.size + wo.size)
               + 2 * 4 * (b1.size + b2.size + bd.size + bqkv.size + bo.size))

    def vmem_estimate(bt):
        m = bt * Lp
        return (w_bytes
                + 2 * bt * PL * Cp * 2          # bf16 input block, double-buffered
                + 2 * bt * Lp * E_p * 4         # f32 output block, double-buffered
                + bt * HP * E_p * 2             # bf16 conv1 staging scratch
                + m * E_p * 4 * 2               # f32 conv / attention accumulators
                + m * E_p * 2                   # bf16 conv2 output
                + m * 3 * HD * (4 + 2)          # qkv f32 + bf16 copies
                + bt * Lp * kv_tile * 4 * 2     # score tile + exp(p)
                + bt * Lp * Dh_p * 4)           # per-head flash accumulator

    if batch_tile is None:
        cands = [b for b in range(1, min(N, 16) + 1) if N % b == 0]
        fits = [b for b in cands if vmem_estimate(b) <= budget] or [1]
        pref = [b for b in fits if N // b >= 2] or fits     # keep >= 2 grid steps
        batch_tile = max(pref)
    Bt = batch_tile
    while N % Bt:
        Bt -= 1
    vmem_limit = int(min(0.9 * vmem_cap,
                         max(1.25 * vmem_estimate(Bt), 32 * 1024 * 1024)))

    # channels-last bf16; causal front pad + round L up to a kv_tile multiple;
    # lane-pad channels.
    xt = jnp.transpose(x_ncl, (0, 2, 1))                        # (N, L, Cin)
    xp = jnp.pad(xt, ((0, 0), (pad, Lp - L), (0, Cp - Cin))).astype(jnp.bfloat16)

    kern = functools.partial(temporal_block_kernel, dilation=dilation,
                             num_heads=H, seq_len=L, kv_tile=kv_tile)

    def const_spec(shape):
        # constant weight block (same tile every grid step)
        return pl.BlockSpec(shape, lambda n, _r=len(shape): (0,) * _r)

    out = pl.pallas_call(
        kern,
        grid=(N // Bt,),
        in_specs=[
            pl.BlockSpec((Bt, PL, Cp), lambda n: (n, 0, 0)),      # x (padded, bf16)
            const_spec(w1.shape), const_spec(b1.shape),           # conv1
            const_spec(w2.shape), const_spec(b2.shape),           # conv2
            const_spec(wd.shape), const_spec(bd.shape),           # downsample (1x1)
            const_spec(wqkv.shape), const_spec(bqkv.shape),       # fused q|k|v proj
            const_spec(wo.shape), const_spec(bo.shape),           # out proj
        ],
        out_specs=pl.BlockSpec((Bt, Lp, E_p), lambda n: (n, 0, 0)),
        out_shape=jax.ShapeDtypeStruct((N, Lp, E_p), jnp.float32),
        scratch_shapes=[pltpu.VMEM((Bt, HP, E_p), jnp.bfloat16)],  # conv1 staging
        compiler_params=pltpu.CompilerParams(
            dimension_semantics=("parallel",),
            vmem_limit_bytes=vmem_limit),
    )(xp, w1, b1, w2, b2, wd, bd, wqkv, bqkv, wo, bo)

    out = out[:, :L, :E]                       # drop lane / sequence padding
    return jnp.transpose(out, (0, 2, 1))       # back to PyTorch NCL


# ---------------------------------------------------------------------------
# parameter construction / packing
# ---------------------------------------------------------------------------
def init_params(key, in_channels, out_channels, kernel_size):
    """Deterministic synthetic parameters with PyTorch-module shapes."""
    E = out_channels
    ks = jax.random.split(key, 10)
    s = 0.1
    return dict(
        conv1_w=s * jax.random.normal(ks[0], (E, in_channels, kernel_size), jnp.float32),
        conv1_b=s * jax.random.normal(ks[1], (E,), jnp.float32),
        conv2_w=s * jax.random.normal(ks[2], (E, E, kernel_size), jnp.float32),
        conv2_b=s * jax.random.normal(ks[3], (E,), jnp.float32),
        down_w=s * jax.random.normal(ks[4], (E, in_channels, 1), jnp.float32),
        down_b=s * jax.random.normal(ks[5], (E,), jnp.float32),
        in_proj_w=s * jax.random.normal(ks[6], (3 * E, E), jnp.float32),
        in_proj_b=s * jax.random.normal(ks[7], (3 * E,), jnp.float32),
        out_proj_w=s * jax.random.normal(ks[8], (E, E), jnp.float32),
        out_proj_b=s * jax.random.normal(ks[9], (E,), jnp.float32),
    )


def pack_params(p, *, num_heads=NUM_HEADS):
    """Repack PyTorch-shaped params into lane-dense, head-padded kernel layouts."""
    E, Cin, _K = p['conv1_w'].shape
    H = num_heads
    assert E % H == 0
    Dh = E // H
    Cp = _round_up(Cin, LANE)
    E_p = _round_up(E, LANE)
    Dh_p = _round_up(Dh, LANE)        # each head padded to whole 128-lane tiles
    HD = H * Dh_p
    bf16 = jnp.bfloat16
    scale = Dh ** -0.5

    # conv weights: (Cout, Cin, K) -> (K, Cin_p, Cout_p); biases -> (1, Cout_p) f32
    w1 = jnp.pad(jnp.transpose(p['conv1_w'], (2, 1, 0)),
                 ((0, 0), (0, Cp - Cin), (0, E_p - E))).astype(bf16)
    b1 = jnp.pad(p['conv1_b'], (0, E_p - E)).reshape(1, E_p)
    w2 = jnp.pad(jnp.transpose(p['conv2_w'], (2, 1, 0)),
                 ((0, 0), (0, E_p - E), (0, E_p - E))).astype(bf16)
    b2 = jnp.pad(p['conv2_b'], (0, E_p - E)).reshape(1, E_p)
    wd = jnp.pad(p['down_w'][:, :, 0].T, ((0, Cp - Cin), (0, E_p - E))).astype(bf16)
    bd = jnp.pad(p['down_b'], (0, E_p - E)).reshape(1, E_p)

    def head_cols(w_rows, b, s=1.0):
        # w_rows: (E_out, E_in) PyTorch linear weight; returns (E_p, H*Dh_p) with each
        # head's Dh output columns zero-padded to Dh_p (exact math, lane-aligned).
        w = w_rows.T.reshape(E, H, Dh) * s
        w = jnp.pad(w, ((0, E_p - E), (0, 0), (0, Dh_p - Dh))).reshape(E_p, HD)
        bb = jnp.pad((b * s).reshape(H, Dh), ((0, 0), (0, Dh_p - Dh))).reshape(1, HD)
        return w, bb

    in_w, in_b = p['in_proj_w'], p['in_proj_b']
    wq, bq = head_cols(in_w[:E], in_b[:E], scale)   # 1/sqrt(Dh) baked into q
    wk, bk = head_cols(in_w[E:2 * E], in_b[E:2 * E])
    wv, bv = head_cols(in_w[2 * E:], in_b[2 * E:])
    wqkv = jnp.concatenate([wq, wk, wv], axis=1).astype(bf16)    # (E_p, 3*HD)
    bqkv = jnp.concatenate([bq, bk, bv], axis=1)                  # (1, 3*HD) f32

    # out projection: rows are concat-head features -> (H, Dh_p, E_p)
    wo = jnp.pad(p['out_proj_w'].T.reshape(H, Dh, E),
                 ((0, 0), (0, Dh_p - Dh), (0, E_p - E))).astype(bf16)
    bo = jnp.pad(p['out_proj_b'], (0, E_p - E)).reshape(1, E_p)

    return (w1, b1, w2, b2, wd, bd, wqkv, bqkv, wo, bo)


# ---------------------------------------------------------------------------
# pure-JAX f32 reference (PyTorch semantics, inference mode)
# ---------------------------------------------------------------------------
def temporal_block_reference(x, p, *, kernel_size, dilation, num_heads):
    E = p['conv1_b'].shape[0]
    H = num_heads
    Dh = E // H
    pad = dilation * (kernel_size - 1)
    N, _, L = x.shape

    def conv(inp, w, b):
        y = jax.lax.conv_general_dilated(
            inp, w, window_strides=(1,), padding=[(pad, pad)],
            rhs_dilation=(dilation,), dimension_numbers=('NCH', 'OIH', 'NCH'))
        return y[:, :, :L] + b[None, :, None]            # conv + chomp

    h = jax.nn.relu(conv(x, p['conv1_w'], p['conv1_b']))
    h = jax.nn.relu(conv(h, p['conv2_w'], p['conv2_b']))

    hl = jnp.transpose(h, (0, 2, 1))                     # (N, L, E)
    q = (hl @ p['in_proj_w'][:E].T + p['in_proj_b'][:E]) * (Dh ** -0.5)
    k = hl @ p['in_proj_w'][E:2 * E].T + p['in_proj_b'][E:2 * E]
    v = hl @ p['in_proj_w'][2 * E:].T + p['in_proj_b'][2 * E:]

    def split(t):
        return jnp.transpose(t.reshape(N, L, H, Dh), (0, 2, 1, 3))   # (N,H,L,Dh)

    qh, kh, vh = split(q), split(k), split(v)
    s = jnp.einsum('nhqd,nhkd->nhqk', qh, kh)
    pr = jax.nn.softmax(s, axis=-1)
    o = jnp.einsum('nhqk,nhkd->nhqd', pr, vh)
    o = jnp.transpose(o, (0, 2, 1, 3)).reshape(N, L, E)
    attn = o @ p['out_proj_w'].T + p['out_proj_b']       # (N, L, E)

    res = jnp.einsum('ncl,oc->nol', x, p['down_w'][:, :, 0]) + p['down_b'][None, :, None]
    return jax.nn.relu(jnp.transpose(attn, (0, 2, 1)) + res)


# ---------------------------------------------------------------------------
if __name__ == "__main__":
    key = jax.random.PRNGKey(0)

    def run_case(N, Cin, Cout, L, kernel_size, dilation, kv_tile=None, seed=0):
        kx, kp = jax.random.split(jax.random.fold_in(key, seed))
        x = jax.random.normal(kx, (N, Cin, L), jnp.float32)     # PyTorch NCL input
        params = init_params(kp, Cin, Cout, kernel_size)
        packed = pack_params(params, num_heads=NUM_HEADS)
        out = temporal_block(x, packed, out_channels=Cout, kernel_size=kernel_size,
                             dilation=dilation, kv_tile=kv_tile)
        out = jax.block_until_ready(out)
        assert out.shape == (N, Cout, L), out.shape
        assert bool(jnp.all(out >= 0.0))                        # final ReLU
        ref = temporal_block_reference(x, params, kernel_size=kernel_size,
                                       dilation=dilation, num_heads=NUM_HEADS)
        err = float(jnp.max(jnp.abs(out - ref)))
        assert err < 3e-2, f"max abs err vs reference: {err}"   # bf16 tolerance
        return err

    # small canonical case (matches the PyTorch module defaults)
    run_case(N=2, Cin=4, Cout=8, L=16, kernel_size=3, dilation=1)
    # exercises dilation, sequence padding / key masking, and the multi-tile
    # online-softmax (flash) key loop
    run_case(N=2, Cin=4, Cout=8, L=28, kernel_size=3, dilation=2, kv_tile=16, seed=1)

    print("KERNEL_OK")
</pallas_src>

<mosaic_0001>
module attributes {stable_mosaic.version = 11 : i64} {
  func.func @temporal_block_kernel(%arg0: i32, %arg1: memref<1x18x128xbf16, #tpu.memory_space<vmem>>, %arg2: memref<3x128x128xbf16, #tpu.memory_space<vmem>>, %arg3: memref<1x128xf32, #tpu.memory_space<vmem>>, %arg4: memref<3x128x128xbf16, #tpu.memory_space<vmem>>, %arg5: memref<1x128xf32, #tpu.memory_space<vmem>>, %arg6: memref<128x128xbf16, #tpu.memory_space<vmem>>, %arg7: memref<1x128xf32, #tpu.memory_space<vmem>>, %arg8: memref<128x1536xbf16, #tpu.memory_space<vmem>>, %arg9: memref<1x1536xf32, #tpu.memory_space<vmem>>, %arg10: memref<4x128x128xbf16, #tpu.memory_space<vmem>>, %arg11: memref<1x128xf32, #tpu.memory_space<vmem>>, %arg12: memref<1x16x128xf32, #tpu.memory_space<vmem>>, %arg13: memref<1x32x128xbf16, #tpu.memory_space<vmem>>) attributes {dimension_semantics = [#tpu.dimension_semantics<parallel>], iteration_bounds = array<i64: 2>, scalar_prefetch = 0 : i64, scratch_operands = 1 : i64, tpu.core_type = #tpu.core_type<tc>, window_params = [{transform_indices = @transform_0, window_bounds = array<i64: 1, 18, 128>}, {pipeline_mode = #tpu.pipeline_mode<synchronous>, transform_indices = @transform_1, window_bounds = array<i64: 3, 128, 128>}, {pipeline_mode = #tpu.pipeline_mode<synchronous>, transform_indices = @transform_2, window_bounds = array<i64: 1, 128>}, {pipeline_mode = #tpu.pipeline_mode<synchronous>, transform_indices = @transform_3, window_bounds = array<i64: 3, 128, 128>}, {pipeline_mode = #tpu.pipeline_mode<synchronous>, transform_indices = @transform_4, window_bounds = array<i64: 1, 128>}, {pipeline_mode = #tpu.pipeline_mode<synchronous>, transform_indices = @transform_5, window_bounds = array<i64: 128, 128>}, {pipeline_mode = #tpu.pipeline_mode<synchronous>, transform_indices = @transform_6, window_bounds = array<i64: 1, 128>}, {pipeline_mode = #tpu.pipeline_mode<synchronous>, transform_indices = @transform_7, window_bounds = array<i64: 128, 1536>}, {pipeline_mode = #tpu.pipeline_mode<synchronous>, transform_indices = @transform_8, window_bounds = array<i64: 1, 1536>}, {pipeline_mode = #tpu.pipeline_mode<synchronous>, transform_indices = @transform_9, window_bounds = array<i64: 4, 128, 128>}, {pipeline_mode = #tpu.pipeline_mode<synchronous>, transform_indices = @transform_10, window_bounds = array<i64: 1, 128>}, {transform_indices = @transform_11, window_bounds = array<i64: 1, 16, 128>}]} {
    %cst = arith.constant 0.000000e+00 : f32
    %0 = vector.broadcast %cst : f32 to vector<16x128xf32>
    %c0 = arith.constant 0 : index
    %c0_0 = arith.constant 0 : index
    %c0_1 = arith.constant 0 : index
    %1 = vector.load %arg1[%c0, %c0_0, %c0_1] : memref<1x18x128xbf16, #tpu.memory_space<vmem>>, vector<1x16x128xbf16>
    %2 = vector.shape_cast %1 : vector<1x16x128xbf16> to vector<16x128xbf16>
    %c0_2 = arith.constant 0 : index
    %c0_3 = arith.constant 0 : index
    %c0_4 = arith.constant 0 : index
    %3 = vector.load %arg2[%c0_2, %c0_3, %c0_4] : memref<3x128x128xbf16, #tpu.memory_space<vmem>>, vector<1x128x128xbf16>
    %4 = vector.shape_cast %3 : vector<1x128x128xbf16> to vector<128x128xbf16>
    %cst_5 = arith.constant dense<0.000000e+00> : vector<16x128xf32>
    %5 = tpu.matmul %2, %4, %cst_5 {dimension_numbers = #tpu.dot_dimension_numbers<[1], [0], [0], [1], [0, 0, 1, 1], [], []>} : vector<16x128xbf16>, vector<128x128xbf16>, vector<16x128xf32> -> vector<16x128xf32>
    %6 = arith.addf %0, %5 : vector<16x128xf32>
    %c0_6 = arith.constant 0 : index
    %c1 = arith.constant 1 : index
    %c0_7 = arith.constant 0 : index
    %7 = vector.load %arg1[%c0_6, %c1, %c0_7] : memref<1x18x128xbf16, #tpu.memory_space<vmem>>, vector<1x16x128xbf16>
    %8 = vector.shape_cast %7 : vector<1x16x128xbf16> to vector<16x128xbf16>
    %c1_8 = arith.constant 1 : index
    %c0_9 = arith.constant 0 : index
    %c0_10 = arith.constant 0 : index
    %9 = vector.load %arg2[%c1_8, %c0_9, %c0_10] : memref<3x128x128xbf16, #tpu.memory_space<vmem>>, vector<1x128x128xbf16>
    %10 = vector.shape_cast %9 : vector<1x128x128xbf16> to vector<128x128xbf16>
    %cst_11 = arith.constant dense<0.000000e+00> : vector<16x128xf32>
    %11 = tpu.matmul %8, %10, %cst_11 {dimension_numbers = #tpu.dot_dimension_numbers<[1], [0], [0], [1], [0, 0, 1, 1], [], []>} : vector<16x128xbf16>, vector<128x128xbf16>, vector<16x128xf32> -> vector<16x128xf32>
    %12 = arith.addf %6, %11 : vector<16x128xf32>
    %c0_12 = arith.constant 0 : index
    %c2 = arith.constant 2 : index
    %c0_13 = arith.constant 0 : index
    %13 = vector.load %arg1[%c0_12, %c2, %c0_13] : memref<1x18x128xbf16, #tpu.memory_space<vmem>>, vector<1x16x128xbf16>
    %14 = vector.shape_cast %13 : vector<1x16x128xbf16> to vector<16x128xbf16>
    %c2_14 = arith.constant 2 : index
    %c0_15 = arith.constant 0 : index
    %c0_16 = arith.constant 0 : index
    %15 = vector.load %arg2[%c2_14, %c0_15, %c0_16] : memref<3x128x128xbf16, #tpu.memory_space<vmem>>, vector<1x128x128xbf16>
    %16 = vector.shape_cast %15 : vector<1x128x128xbf16> to vector<128x128xbf16>
    %cst_17 = arith.constant dense<0.000000e+00> : vector<16x128xf32>
    %17 = tpu.matmul %14, %16, %cst_17 {dimension_numbers = #tpu.dot_dimension_numbers<[1], [0], [0], [1], [0, 0, 1, 1], [], []>} : vector<16x128xbf16>, vector<128x128xbf16>, vector<16x128xf32> -> vector<16x128xf32>
    %18 = arith.addf %12, %17 : vector<16x128xf32>
    %c0_18 = arith.constant 0 : index
    %c0_19 = arith.constant 0 : index
    %19 = vector.load %arg6[%c0_18, %c0_19] : memref<128x128xbf16, #tpu.memory_space<vmem>>, vector<128x128xbf16>
    %cst_20 = arith.constant dense<0.000000e+00> : vector<16x128xf32>
    %20 = tpu.matmul %14, %19, %cst_20 {dimension_numbers = #tpu.dot_dimension_numbers<[1], [0], [0], [1], [0, 0, 1, 1], [], []>} : vector<16x128xbf16>, vector<128x128xbf16>, vector<16x128xf32> -> vector<16x128xf32>
    %c0_21 = arith.constant 0 : index
    %c0_22 = arith.constant 0 : index
    %21 = vector.load %arg7[%c0_21, %c0_22] : memref<1x128xf32, #tpu.memory_space<vmem>>, vector<1x128xf32>
    %22 = vector.broadcast %21 : vector<1x128xf32> to vector<16x128xf32>
    %23 = arith.addf %20, %22 : vector<16x128xf32>
    %c0_23 = arith.constant 0 : index
    %c0_24 = arith.constant 0 : index
    %24 = vector.load %arg3[%c0_23, %c0_24] : memref<1x128xf32, #tpu.memory_space<vmem>>, vector<1x128xf32>
    %25 = vector.broadcast %24 : vector<1x128xf32> to vector<16x128xf32>
    %26 = arith.addf %18, %25 : vector<16x128xf32>
    %cst_25 = arith.constant 0.000000e+00 : f32
    %27 = vector.broadcast %cst_25 : f32 to vector<16x128xf32>
    %28 = arith.maximumf %26, %27 : vector<16x128xf32>
    %29 = arith.truncf %28 : vector<16x128xf32> to vector<16x128xbf16>
    %cst_26 = arith.constant 0.000000e+00 : bf16
    %30 = vector.broadcast %cst_26 : bf16 to vector<1x16x128xbf16>
    %c0_27 = arith.constant 0 : index
    %c0_28 = arith.constant 0 : index
    %c0_29 = arith.constant 0 : index
    %31 = vector.load %arg13[%c0_27, %c0_28, %c0_29] : memref<1x32x128xbf16, #tpu.memory_space<vmem>>, vector<1x16x128xbf16>
    tpu.vector_store %arg13[%c0_27, %c0_28, %c0_29], %30 {strides = array<i32>} : memref<1x32x128xbf16, #tpu.memory_space<vmem>>, vector<1x16x128xbf16>,
    %32 = vector.shape_cast %29 : vector<16x128xbf16> to vector<1x16x128xbf16>
    %c0_30 = arith.constant 0 : index
    %c16 = arith.constant 16 : index
    %c0_31 = arith.constant 0 : index
    %33 = vector.load %arg13[%c0_30, %c16, %c0_31] : memref<1x32x128xbf16, #tpu.memory_space<vmem>>, vector<1x16x128xbf16>
    tpu.vector_store %arg13[%c0_30, %c16, %c0_31], %32 {strides = array<i32>} : memref<1x32x128xbf16, #tpu.memory_space<vmem>>, vector<1x16x128xbf16>,
    %cst_32 = arith.constant 0.000000e+00 : f32
    %34 = vector.broadcast %cst_32 : f32 to vector<16x128xf32>
    %c0_33 = arith.constant 0 : index
    %c14 = arith.constant 14 : index
    %c0_34 = arith.constant 0 : index
    %35 = vector.load %arg13[%c0_33, %c14, %c0_34] : memref<1x32x128xbf16, #tpu.memory_space<vmem>>, vector<1x16x128xbf16>
    %36 = vector.shape_cast %35 : vector<1x16x128xbf16> to vector<16x128xbf16>
    %c0_35 = arith.constant 0 : index
    %c0_36 = arith.constant 0 : index
    %c0_37 = arith.constant 0 : index
    %37 = vector.load %arg4[%c0_35, %c0_36, %c0_37] : memref<3x128x128xbf16, #tpu.memory_space<vmem>>, vector<1x128x128xbf16>
    %38 = vector.shape_cast %37 : vector<1x128x128xbf16> to vector<128x128xbf16>
    %cst_38 = arith.constant dense<0.000000e+00> : vector<16x128xf32>
    %39 = tpu.matmul %36, %38, %cst_38 {dimension_numbers = #tpu.dot_dimension_numbers<[1], [0], [0], [1], [0, 0, 1, 1], [], []>} : vector<16x128xbf16>, vector<128x128xbf16>, vector<16x128xf32> -> vector<16x128xf32>
    %40 = arith.addf %34, %39 : vector<16x128xf32>
    %c0_39 = arith.constant 0 : index
    %c15 = arith.constant 15 : index
    %c0_40 = arith.constant 0 : index
    %41 = vector.load %arg13[%c0_39, %c15, %c0_40] : memref<1x32x128xbf16, #tpu.memory_space<vmem>>, vector<1x16x128xbf16>
    %42 = vector.shape_cast %41 : vector<1x16x128xbf16> to vector<16x128xbf16>
    %c1_41 = arith.constant 1 : index
    %c0_42 = arith.constant 0 : index
    %c0_43 = arith.constant 0 : index
    %43 = vector.load %arg4[%c1_41, %c0_42, %c0_43] : memref<3x128x128xbf16, #tpu.memory_space<vmem>>, vector<1x128x128xbf16>
    %44 = vector.shape_cast %43 : vector<1x128x128xbf16> to vector<128x128xbf16>
    %cst_44 = arith.constant dense<0.000000e+00> : vector<16x128xf32>
    %45 = tpu.matmul %42, %44, %cst_44 {dimension_numbers = #tpu.dot_dimension_numbers<[1], [0], [0], [1], [0, 0, 1, 1], [], []>} : vector<16x128xbf16>, vector<128x128xbf16>, vector<16x128xf32> -> vector<16x128xf32>
    %46 = arith.addf %40, %45 : vector<16x128xf32>
    %c0_45 = arith.constant 0 : index
    %c16_46 = arith.constant 16 : index
    %c0_47 = arith.constant 0 : index
    %47 = vector.load %arg13[%c0_45, %c16_46, %c0_47] : memref<1x32x128xbf16, #tpu.memory_space<vmem>>, vector<1x16x128xbf16>
    %48 = vector.shape_cast %47 : vector<1x16x128xbf16> to vector<16x128xbf16>
    %c2_48 = arith.constant 2 : index
    %c0_49 = arith.constant 0 : index
    %c0_50 = arith.constant 0 : index
    %49 = vector.load %arg4[%c2_48, %c0_49, %c0_50] : memref<3x128x128xbf16, #tpu.memory_space<vmem>>, vector<1x128x128xbf16>
    %50 = vector.shape_cast %49 : vector<1x128x128xbf16> to vector<128x128xbf16>
    %cst_51 = arith.constant dense<0.000000e+00> : vector<16x128xf32>
    %51 = tpu.matmul %48, %50, %cst_51 {dimension_numbers = #tpu.dot_dimension_numbers<[1], [0], [0], [1], [0, 0, 1, 1], [], []>} : vector<16x128xbf16>, vector<128x128xbf16>, vector<16x128xf32> -> vector<16x128xf32>
    %52 = arith.addf %46, %51 : vector<16x128xf32>
    %c0_52 = arith.constant 0 : index
    %c0_53 = arith.constant 0 : index
    %53 = vector.load %arg5[%c0_52, %c0_53] : memref<1x128xf32, #tpu.memory_space<vmem>>, vector<1x128xf32>
    %54 = vector.broadcast %53 : vector<1x128xf32> to vector<16x128xf32>
    %55 = arith.addf %52, %54 : vector<16x128xf32>
    %cst_54 = arith.constant 0.000000e+00 : f32
    %56 = vector.broadcast %cst_54 : f32 to vector<16x128xf32>
    %57 = arith.maximumf %55, %56 : vector<16x128xf32>
    %58 = arith.truncf %57 : vector<16x128xf32> to vector<16x128xbf16>
    %c0_55 = arith.constant 0 : index
    %c0_56 = arith.constant 0 : index
    %59 = vector.load %arg8[%c0_55, %c0_56] : memref<128x1536xbf16, #tpu.memory_space<vmem>>, vector<128x1536xbf16>
    %cst_57 = arith.constant dense<0.000000e+00> : vector<16x1536xf32>
    %60 = tpu.matmul %58, %59, %cst_57 {dimension_numbers = #tpu.dot_dimension_numbers<[1], [0], [0], [1], [0, 0, 1, 1], [], []>} : vector<16x128xbf16>, vector<128x1536xbf16>, vector<16x1536xf32> -> vector<16x1536xf32>
    %c0_58 = arith.constant 0 : index
    %c0_59 = arith.constant 0 : index
    %61 = vector.load %arg9[%c0_58, %c0_59] : memref<1x1536xf32, #tpu.memory_space<vmem>>, vector<1x1536xf32>
    %62 = vector.broadcast %61 : vector<1x1536xf32> to vector<16x1536xf32>
    %63 = arith.addf %60, %62 : vector<16x1536xf32>
    %64 = vector.extract_strided_slice %63 {offsets = [0, 0], sizes = [16, 512], strides = [1, 1]} : vector<16x1536xf32> to vector<16x512xf32>
    %65 = arith.truncf %64 : vector<16x512xf32> to vector<16x512xbf16>
    %66 = vector.shape_cast %65 : vector<16x512xbf16> to vector<1x16x512xbf16>
    %67 = vector.extract_strided_slice %63 {offsets = [0, 512], sizes = [16, 512], strides = [1, 1]} : vector<16x1536xf32> to vector<16x512xf32>
    %68 = arith.truncf %67 : vector<16x512xf32> to vector<16x512xbf16>
    %69 = vector.shape_cast %68 : vector<16x512xbf16> to vector<1x16x512xbf16>
    %70 = vector.extract_strided_slice %63 {offsets = [0, 1024], sizes = [16, 512], strides = [1, 1]} : vector<16x1536xf32> to vector<16x512xf32>
    %71 = arith.truncf %70 : vector<16x512xf32> to vector<16x512xbf16>
    %72 = vector.shape_cast %71 : vector<16x512xbf16> to vector<1x16x512xbf16>
    %73 = vector.extract_strided_slice %66 {offsets = [0, 0, 0], sizes = [1, 16, 128], strides = [1, 1, 1]} : vector<1x16x512xbf16> to vector<1x16x128xbf16>
    %cst_60 = arith.constant -1.000000e+30 : f32
    %74 = vector.broadcast %cst_60 : f32 to vector<1x16x1xf32>
    %cst_61 = arith.constant 0.000000e+00 : f32
    %75 = vector.broadcast %cst_61 : f32 to vector<1x16x1xf32>
    %cst_62 = arith.constant 0.000000e+00 : f32
    %76 = vector.broadcast %cst_62 : f32 to vector<1x16x128xf32>
    %77 = vector.extract_strided_slice %69 {offsets = [0, 0, 0], sizes = [1, 16, 128], strides = [1, 1, 1]} : vector<1x16x512xbf16> to vector<1x16x128xbf16>
    %78 = vector.extract_strided_slice %72 {offsets = [0, 0, 0], sizes = [1, 16, 128], strides = [1, 1, 1]} : vector<1x16x512xbf16> to vector<1x16x128xbf16>
    "tpu.trace_start"() <{level = 10 : i32, message = "bqd,bkd->bqk"}> : () -> ()
    %cst_63 = arith.constant dense<0.000000e+00> : vector<1x16x16xf32>
    %79 = tpu.matmul %73, %77, %cst_63 {dimension_numbers = #tpu.dot_dimension_numbers<[2], [2], [1], [1], [0, 0, 0, 1, 1, 1], [0], [0]>} : vector<1x16x128xbf16>, vector<1x16x128xbf16>, vector<1x16x16xf32> -> vector<1x16x16xf32>
    "tpu.trace_stop"() : () -> ()
    %cst_64 = arith.constant dense<0xFF800000> : vector<1x16xf32>
    %80 = vector.multi_reduction <maximumf>, %79, %cst_64 [2] : vector<1x16x16xf32> to vector<1x16xf32>
    %81 = vector.shape_cast %80 : vector<1x16xf32> to vector<1x16x1xf32>
    %82 = arith.maximumf %74, %81 : vector<1x16x1xf32>
    %83 = arith.subf %74, %82 : vector<1x16x1xf32>
    %84 = math.exp %83 : vector<1x16x1xf32>
    %85 = vector.broadcast %82 : vector<1x16x1xf32> to vector<1x16x16xf32>
    %86 = arith.subf %79, %85 : vector<1x16x16xf32>
    %87 = math.exp %86 : vector<1x16x16xf32>
    %88 = arith.mulf %84, %75 : vector<1x16x1xf32>
    %cst_65 = arith.constant dense<0.000000e+00> : vector<1x16xf32>
    %89 = vector.multi_reduction <add>, %87, %cst_65 [2] : vector<1x16x16xf32> to vector<1x16xf32>
    %90 = vector.shape_cast %89 : vector<1x16xf32> to vector<1x16x1xf32>
    %91 = arith.addf %88, %90 : vector<1x16x1xf32>
    %92 = vector.broadcast %84 : vector<1x16x1xf32> to vector<1x16x128xf32>
    %93 = arith.mulf %92, %76 : vector<1x16x128xf32>
    %94 = arith.truncf %87 : vector<1x16x16xf32> to vector<1x16x16xbf16>
    "tpu.trace_start"() <{level = 10 : i32, message = "bqk,bkd->bqd"}> : () -> ()
    %cst_66 = arith.constant dense<0.000000e+00> : vector<1x16x128xf32>
    %95 = tpu.matmul %94, %78, %cst_66 {dimension_numbers = #tpu.dot_dimension_numbers<[2], [1], [1], [2], [0, 0, 0, 1, 1, 2], [0], [0]>} : vector<1x16x16xbf16>, vector<1x16x128xbf16>, vector<1x16x128xf32> -> vector<1x16x128xf32>
    "tpu.trace_stop"() : () -> ()
    %96 = arith.addf %93, %95 : vector<1x16x128xf32>
    %97 = tpu.reciprocal %91 {approx = true} : vector<1x16x1xf32> -> vector<1x16x1xf32>
    %98 = vector.broadcast %97 : vector<1x16x1xf32> to vector<1x16x128xf32>
    %99 = arith.mulf %96, %98 : vector<1x16x128xf32>
    %100 = vector.shape_cast %99 : vector<1x16x128xf32> to vector<16x128xf32>
    %101 = arith.truncf %100 : vector<16x128xf32> to vector<16x128xbf16>
    %c0_67 = arith.constant 0 : index
    %c0_68 = arith.constant 0 : index
    %c0_69 = arith.constant 0 : index
    %102 = vector.load %arg10[%c0_67, %c0_68, %c0_69] : memref<4x128x128xbf16, #tpu.memory_space<vmem>>, vector<1x128x128xbf16>
    %103 = vector.shape_cast %102 : vector<1x128x128xbf16> to vector<128x128xbf16>
    %cst_70 = arith.constant dense<0.000000e+00> : vector<16x128xf32>
    %104 = tpu.matmul %101, %103, %cst_70 {dimension_numbers = #tpu.dot_dimension_numbers<[1], [0], [0], [1], [0, 0, 1, 1], [], []>} : vector<16x128xbf16>, vector<128x128xbf16>, vector<16x128xf32> -> vector<16x128xf32>
    %105 = arith.addf %23, %104 : vector<16x128xf32>
    %106 = vector.extract_strided_slice %66 {offsets = [0, 0, 128], sizes = [1, 16, 128], strides = [1, 1, 1]} : vector<1x16x512xbf16> to vector<1x16x128xbf16>
    %cst_71 = arith.constant -1.000000e+30 : f32
    %107 = vector.broadcast %cst_71 : f32 to vector<1x16x1xf32>
    %cst_72 = arith.constant 0.000000e+00 : f32
    %108 = vector.broadcast %cst_72 : f32 to vector<1x16x1xf32>
    %cst_73 = arith.constant 0.000000e+00 : f32
    %109 = vector.broadcast %cst_73 : f32 to vector<1x16x128xf32>
    %110 = vector.extract_strided_slice %69 {offsets = [0, 0, 128], sizes = [1, 16, 128], strides = [1, 1, 1]} : vector<1x16x512xbf16> to vector<1x16x128xbf16>
    %111 = vector.extract_strided_slice %72 {offsets = [0, 0, 128], sizes = [1, 16, 128], strides = [1, 1, 1]} : vector<1x16x512xbf16> to vector<1x16x128xbf16>
    "tpu.trace_start"() <{level = 10 : i32, message = "bqd,bkd->bqk"}> : () -> ()
    %cst_74 = arith.constant dense<0.000000e+00> : vector<1x16x16xf32>
    %112 = tpu.matmul %106, %110, %cst_74 {dimension_numbers = #tpu.dot_dimension_numbers<[2], [2], [1], [1], [0, 0, 0, 1, 1, 1], [0], [0]>} : vector<1x16x128xbf16>, vector<1x16x128xbf16>, vector<1x16x16xf32> -> vector<1x16x16xf32>
    "tpu.trace_stop"() : () -> ()
    %cst_75 = arith.constant dense<0xFF800000> : vector<1x16xf32>
    %113 = vector.multi_reduction <maximumf>, %112, %cst_75 [2] : vector<1x16x16xf32> to vector<1x16xf32>
    %114 = vector.shape_cast %113 : vector<1x16xf32> to vector<1x16x1xf32>
    %115 = arith.maximumf %107, %114 : vector<1x16x1xf32>
    %116 = arith.subf %107, %115 : vector<1x16x1xf32>
    %117 = math.exp %116 : vector<1x16x1xf32>
    %118 = vector.broadcast %115 : vector<1x16x1xf32> to vector<1x16x16xf32>
    %119 = arith.subf %112, %118 : vector<1x16x16xf32>
    %120 = math.exp %119 : vector<1x16x16xf32>
    %121 = arith.mulf %117, %108 : vector<1x16x1xf32>
    %cst_76 = arith.constant dense<0.000000e+00> : vector<1x16xf32>
    %122 = vector.multi_reduction <add>, %120, %cst_76 [2] : vector<1x16x16xf32> to vector<1x16xf32>
    %123 = vector.shape_cast %122 : vector<1x16xf32> to vector<1x16x1xf32>
    %124 = arith.addf %121, %123 : vector<1x16x1xf32>
    %125 = vector.broadcast %117 : vector<1x16x1xf32> to vector<1x16x128xf32>
    %126 = arith.mulf %125, %109 : vector<1x16x128xf32>
    %127 = arith.truncf %120 : vector<1x16x16xf32> to vector<1x16x16xbf16>
    "tpu.trace_start"() <{level = 10 : i32, message = "bqk,bkd->bqd"}> : () -> ()
    %cst_77 = arith.constant dense<0.000000e+00> : vector<1x16x128xf32>
    %128 = tpu.matmul %127, %111, %cst_77 {dimension_numbers = #tpu.dot_dimension_numbers<[2], [1], [1], [2], [0, 0, 0, 1, 1, 2], [0], [0]>} : vector<1x16x16xbf16>, vector<1x16x128xbf16>, vector<1x16x128xf32> -> vector<1x16x128xf32>
    "tpu.trace_stop"() : () -> ()
    %129 = arith.addf %126, %128 : vector<1x16x128xf32>
    %130 = tpu.reciprocal %124 {approx = true} : vector<1x16x1xf32> -> vector<1x16x1xf32>
    %131 = vector.broadcast %130 : vector<1x16x1xf32> to vector<1x16x128xf32>
    %132 = arith.mulf %129, %131 : vector<1x16x128xf32>
    %133 = vector.shape_cast %132 : vector<1x16x128xf32> to vector<16x128xf32>
    %134 = arith.truncf %133 : vector<16x128xf32> to vector<16x128xbf16>
    %c1_78 = arith.constant 1 : index
    %c0_79 = arith.constant 0 : index
    %c0_80 = arith.constant 0 : index
    %135 = vector.load %arg10[%c1_78, %c0_79, %c0_80] : memref<4x128x128xbf16, #tpu.memory_space<vmem>>, vector<1x128x128xbf16>
    %136 = vector.shape_cast %135 : vector<1x128x128xbf16> to vector<128x128xbf16>
    %cst_81 = arith.constant dense<0.000000e+00> : vector<16x128xf32>
    %137 = tpu.matmul %134, %136, %cst_81 {dimension_numbers = #tpu.dot_dimension_numbers<[1], [0], [0], [1], [0, 0, 1, 1], [], []>} : vector<16x128xbf16>, vector<128x128xbf16>, vector<16x128xf32> -> vector<16x128xf32>
    %138 = arith.addf %105, %137 : vector<16x128xf32>
    %139 = vector.extract_strided_slice %66 {offsets = [0, 0, 256], sizes = [1, 16, 128], strides = [1, 1, 1]} : vector<1x16x512xbf16> to vector<1x16x128xbf16>
    %cst_82 = arith.constant -1.000000e+30 : f32
    %140 = vector.broadcast %cst_82 : f32 to vector<1x16x1xf32>
    %cst_83 = arith.constant 0.000000e+00 : f32
    %141 = vector.broadcast %cst_83 : f32 to vector<1x16x1xf32>
    %cst_84 = arith.constant 0.000000e+00 : f32
    %142 = vector.broadcast %cst_84 : f32 to vector<1x16x128xf32>
    %143 = vector.extract_strided_slice %69 {offsets = [0, 0, 256], sizes = [1, 16, 128], strides = [1, 1, 1]} : vector<1x16x512xbf16> to vector<1x16x128xbf16>
    %144 = vector.extract_strided_slice %72 {offsets = [0, 0, 256], sizes = [1, 16, 128], strides = [1, 1, 1]} : vector<1x16x512xbf16> to vector<1x16x128xbf16>
    "tpu.trace_start"() <{level = 10 : i32, message = "bqd,bkd->bqk"}> : () -> ()
    %cst_85 = arith.constant dense<0.000000e+00> : vector<1x16x16xf32>
    %145 = tpu.matmul %139, %143, %cst_85 {dimension_numbers = #tpu.dot_dimension_numbers<[2], [2], [1], [1], [0, 0, 0, 1, 1, 1], [0], [0]>} : vector<1x16x128xbf16>, vector<1x16x128xbf16>, vector<1x16x16xf32> -> vector<1x16x16xf32>
    "tpu.trace_stop"() : () -> ()
    %cst_86 = arith.constant dense<0xFF800000> : vector<1x16xf32>
    %146 = vector.multi_reduction <maximumf>, %145, %cst_86 [2] : vector<1x16x16xf32> to vector<1x16xf32>
    %147 = vector.shape_cast %146 : vector<1x16xf32> to vector<1x16x1xf32>
    %148 = arith.maximumf %140, %147 : vector<1x16x1xf32>
    %149 = arith.subf %140, %148 : vector<1x16x1xf32>
    %150 = math.exp %149 : vector<1x16x1xf32>
    %151 = vector.broadcast %148 : vector<1x16x1xf32> to vector<1x16x16xf32>
    %152 = arith.subf %145, %151 : vector<1x16x16xf32>
    %153 = math.exp %152 : vector<1x16x16xf32>
    %154 = arith.mulf %150, %141 : vector<1x16x1xf32>
    %cst_87 = arith.constant dense<0.000000e+00> : vector<1x16xf32>
    %155 = vector.multi_reduction <add>, %153, %cst_87 [2] : vector<1x16x16xf32> to vector<1x16xf32>
    %156 = vector.shape_cast %155 : vector<1x16xf32> to vector<1x16x1xf32>
    %157 = arith.addf %154, %156 : vector<1x16x1xf32>
    %158 = vector.broadcast %150 : vector<1x16x1xf32> to vector<1x16x128xf32>
    %159 = arith.mulf %158, %142 : vector<1x16x128xf32>
    %160 = arith.truncf %153 : vector<1x16x16xf32> to vector<1x16x16xbf16>
    "tpu.trace_start"() <{level = 10 : i32, message = "bqk,bkd->bqd"}> : () -> ()
    %cst_88 = arith.constant dense<0.000000e+00> : vector<1x16x128xf32>
    %161 = tpu.matmul %160, %144, %cst_88 {dimension_numbers = #tpu.dot_dimension_numbers<[2], [1], [1], [2], [0, 0, 0, 1, 1, 2], [0], [0]>} : vector<1x16x16xbf16>, vector<1x16x128xbf16>, vector<1x16x128xf32> -> vector<1x16x128xf32>
    "tpu.trace_stop"() : () -> ()
    %162 = arith.addf %159, %161 : vector<1x16x128xf32>
    %163 = tpu.reciprocal %157 {approx = true} : vector<1x16x1xf32> -> vector<1x16x1xf32>
    %164 = vector.broadcast %163 : vector<1x16x1xf32> to vector<1x16x128xf32>
    %165 = arith.mulf %162, %164 : vector<1x16x128xf32>
    %166 = vector.shape_cast %165 : vector<1x16x128xf32> to vector<16x128xf32>
    %167 = arith.truncf %166 : vector<16x128xf32> to vector<16x128xbf16>
    %c2_89 = arith.constant 2 : index
    %c0_90 = arith.constant 0 : index
    %c0_91 = arith.constant 0 : index
    %168 = vector.load %arg10[%c2_89, %c0_90, %c0_91] : memref<4x128x128xbf16, #tpu.memory_space<vmem>>, vector<1x128x128xbf16>
    %169 = vector.shape_cast %168 : vector<1x128x128xbf16> to vector<128x128xbf16>
    %cst_92 = arith.constant dense<0.000000e+00> : vector<16x128xf32>
    %170 = tpu.matmul %167, %169, %cst_92 {dimension_numbers = #tpu.dot_dimension_numbers<[1], [0], [0], [1], [0, 0, 1, 1], [], []>} : vector<16x128xbf16>, vector<128x128xbf16>, vector<16x128xf32> -> vector<16x128xf32>
    %171 = arith.addf %138, %170 : vector<16x128xf32>
    %172 = vector.extract_strided_slice %66 {offsets = [0, 0, 384], sizes = [1, 16, 128], strides = [1, 1, 1]} : vector<1x16x512xbf16> to vector<1x16x128xbf16>
    %cst_93 = arith.constant -1.000000e+30 : f32
    %173 = vector.broadcast %cst_93 : f32 to vector<1x16x1xf32>
    %cst_94 = arith.constant 0.000000e+00 : f32
    %174 = vector.broadcast %cst_94 : f32 to vector<1x16x1xf32>
    %cst_95 = arith.constant 0.000000e+00 : f32
    %175 = vector.broadcast %cst_95 : f32 to vector<1x16x128xf32>
    %176 = vector.extract_strided_slice %69 {offsets = [0, 0, 384], sizes = [1, 16, 128], strides = [1, 1, 1]} : vector<1x16x512xbf16> to vector<1x16x128xbf16>
    %177 = vector.extract_strided_slice %72 {offsets = [0, 0, 384], sizes = [1, 16, 128], strides = [1, 1, 1]} : vector<1x16x512xbf16> to vector<1x16x128xbf16>
    "tpu.trace_start"() <{level = 10 : i32, message = "bqd,bkd->bqk"}> : () -> ()
    %cst_96 = arith.constant dense<0.000000e+00> : vector<1x16x16xf32>
    %178 = tpu.matmul %172, %176, %cst_96 {dimension_numbers = #tpu.dot_dimension_numbers<[2], [2], [1], [1], [0, 0, 0, 1, 1, 1], [0], [0]>} : vector<1x16x128xbf16>, vector<1x16x128xbf16>, vector<1x16x16xf32> -> vector<1x16x16xf32>
    "tpu.trace_stop"() : () -> ()
    %cst_97 = arith.constant dense<0xFF800000> : vector<1x16xf32>
    %179 = vector.multi_reduction <maximumf>, %178, %cst_97 [2] : vector<1x16x16xf32> to vector<1x16xf32>
    %180 = vector.shape_cast %179 : vector<1x16xf32> to vector<1x16x1xf32>
    %181 = arith.maximumf %173, %180 : vector<1x16x1xf32>
    %182 = arith.subf %173, %181 : vector<1x16x1xf32>
    %183 = math.exp %182 : vector<1x16x1xf32>
    %184 = vector.broadcast %181 : vector<1x16x1xf32> to vector<1x16x16xf32>
    %185 = arith.subf %178, %184 : vector<1x16x16xf32>
    %186 = math.exp %185 : vector<1x16x16xf32>
    %187 = arith.mulf %183, %174 : vector<1x16x1xf32>
    %cst_98 = arith.constant dense<0.000000e+00> : vector<1x16xf32>
    %188 = vector.multi_reduction <add>, %186, %cst_98 [2] : vector<1x16x16xf32> to vector<1x16xf32>
    %189 = vector.shape_cast %188 : vector<1x16xf32> to vector<1x16x1xf32>
    %190 = arith.addf %187, %189 : vector<1x16x1xf32>
    %191 = vector.broadcast %183 : vector<1x16x1xf32> to vector<1x16x128xf32>
    %192 = arith.mulf %191, %175 : vector<1x16x128xf32>
    %193 = arith.truncf %186 : vector<1x16x16xf32> to vector<1x16x16xbf16>
    "tpu.trace_start"() <{level = 10 : i32, message = "bqk,bkd->bqd"}> : () -> ()
    %cst_99 = arith.constant dense<0.000000e+00> : vector<1x16x128xf32>
    %194 = tpu.matmul %193, %177, %cst_99 {dimension_numbers = #tpu.dot_dimension_numbers<[2], [1], [1], [2], [0, 0, 0, 1, 1, 2], [0], [0]>} : vector<1x16x16xbf16>, vector<1x16x128xbf16>, vector<1x16x128xf32> -> vector<1x16x128xf32>
    "tpu.trace_stop"() : () -> ()
    %195 = arith.addf %192, %194 : vector<1x16x128xf32>
    %196 = tpu.reciprocal %190 {approx = true} : vector<1x16x1xf32> -> vector<1x16x1xf32>
    %197 = vector.broadcast %196 : vector<1x16x1xf32> to vector<1x16x128xf32>
    %198 = arith.mulf %195, %197 : vector<1x16x128xf32>
    %199 = vector.shape_cast %198 : vector<1x16x128xf32> to vector<16x128xf32>
    %200 = arith.truncf %199 : vector<16x128xf32> to vector<16x128xbf16>
    %c3 = arith.constant 3 : index
    %c0_100 = arith.constant 0 : index
    %c0_101 = arith.constant 0 : index
    %201 = vector.load %arg10[%c3, %c0_100, %c0_101] : memref<4x128x128xbf16, #tpu.memory_space<vmem>>, vector<1x128x128xbf16>
    %202 = vector.shape_cast %201 : vector<1x128x128xbf16> to vector<128x128xbf16>
    %cst_102 = arith.constant dense<0.000000e+00> : vector<16x128xf32>
    %203 = tpu.matmul %200, %202, %cst_102 {dimension_numbers = #tpu.dot_dimension_numbers<[1], [0], [0], [1], [0, 0, 1, 1], [], []>} : vector<16x128xbf16>, vector<128x128xbf16>, vector<16x128xf32> -> vector<16x128xf32>
    %204 = arith.addf %171, %203 : vector<16x128xf32>
    %c0_103 = arith.constant 0 : index
    %c0_104 = arith.constant 0 : index
    %205 = vector.load %arg11[%c0_103, %c0_104] : memref<1x128xf32, #tpu.memory_space<vmem>>, vector<1x128xf32>
    %206 = vector.broadcast %205 : vector<1x128xf32> to vector<16x128xf32>
    %207 = arith.addf %204, %206 : vector<16x128xf32>
    %cst_105 = arith.constant 0.000000e+00 : f32
    %208 = vector.broadcast %cst_105 : f32 to vector<16x128xf32>
    %209 = arith.maximumf %207, %208 : vector<16x128xf32>
    %210 = vector.shape_cast %209 : vector<16x128xf32> to vector<1x16x128xf32>
    %c0_106 = arith.constant 0 : index
    %c0_107 = arith.constant 0 : index
    %c0_108 = arith.constant 0 : index
    %211 = vector.load %arg12[%c0_106, %c0_107, %c0_108] : memref<1x16x128xf32, #tpu.memory_space<vmem>>, vector<1x16x128xf32>
    tpu.vector_store %arg12[%c0_106, %c0_107, %c0_108], %210 {strides = array<i32>} : memref<1x16x128xf32, #tpu.memory_space<vmem>>, vector<1x16x128xf32>,
    return
  }
  func.func @transform_0(%arg0: i32) -> (i32, i32, i32) {
    %c0_i32 = arith.constant 0 : i32
    %c0_i32_0 = arith.constant 0 : i32
    %c0_i32_1 = arith.constant 0 : i32
    return %arg0, %c0_i32, %c0_i32_0 : i32, i32, i32
  }
  func.func @transform_1(%arg0: i32) -> (i32, i32, i32) {
    %c0_i32 = arith.constant 0 : i32
    %c0_i32_0 = arith.constant 0 : i32
    %c0_i32_1 = arith.constant 0 : i32
    %c0_i32_2 = arith.constant 0 : i32
    return %c0_i32, %c0_i32_0, %c0_i32_1 : i32, i32, i32
  }
  func.func @transform_2(%arg0: i32) -> (i32, i32) {
    %c0_i32 = arith.constant 0 : i32
    %c0_i32_0 = arith.constant 0 : i32
    %c0_i32_1 = arith.constant 0 : i32
    return %c0_i32, %c0_i32_0 : i32, i32
  }
  func.func @transform_3(%arg0: i32) -> (i32, i32, i32) {
    %c0_i32 = arith.constant 0 : i32
    %c0_i32_0 = arith.constant 0 : i32
    %c0_i32_1 = arith.constant 0 : i32
    %c0_i32_2 = arith.constant 0 : i32
    return %c0_i32, %c0_i32_0, %c0_i32_1 : i32, i32, i32
  }
  func.func @transform_4(%arg0: i32) -> (i32, i32) {
    %c0_i32 = arith.constant 0 : i32
    %c0_i32_0 = arith.constant 0 : i32
    %c0_i32_1 = arith.constant 0 : i32
    return %c0_i32, %c0_i32_0 : i32, i32
  }
  func.func @transform_5(%arg0: i32) -> (i32, i32) {
    %c0_i32 = arith.constant 0 : i32
    %c0_i32_0 = arith.constant 0 : i32
    %c0_i32_1 = arith.constant 0 : i32
    return %c0_i32, %c0_i32_0 : i32, i32
  }
  func.func @transform_6(%arg0: i32) -> (i32, i32) {
    %c0_i32 = arith.constant 0 : i32
    %c0_i32_0 = arith.constant 0 : i32
    %c0_i32_1 = arith.constant 0 : i32
    return %c0_i32, %c0_i32_0 : i32, i32
  }
  func.func @transform_7(%arg0: i32) -> (i32, i32) {
    %c0_i32 = arith.constant 0 : i32
    %c0_i32_0 = arith.constant 0 : i32
    %c0_i32_1 = arith.constant 0 : i32
    return %c0_i32, %c0_i32_0 : i32, i32
  }
  func.func @transform_8(%arg0: i32) -> (i32, i32) {
    %c0_i32 = arith.constant 0 : i32
    %c0_i32_0 = arith.constant 0 : i32
    %c0_i32_1 = arith.constant 0 : i32
    return %c0_i32, %c0_i32_0 : i32, i32
  }
  func.func @transform_9(%arg0: i32) -> (i32, i32, i32) {
    %c0_i32 = arith.constant 0 : i32
    %c0_i32_0 = arith.constant 0 : i32
    %c0_i32_1 = arith.constant 0 : i32
    %c0_i32_2 = arith.constant 0 : i32
    return %c0_i32, %c0_i32_0, %c0_i32_1 : i32, i32, i32
  }
  func.func @transform_10(%arg0: i32) -> (i32, i32) {
    %c0_i32 = arith.constant 0 : i32
    %c0_i32_0 = arith.constant 0 : i32
    %c0_i32_1 = arith.constant 0 : i32
    return %c0_i32, %c0_i32_0 : i32, i32
  }
  func.func @transform_11(%arg0: i32) -> (i32, i32, i32) {
    %c0_i32 = arith.constant 0 : i32
    %c0_i32_0 = arith.constant 0 : i32
    %c0_i32_1 = arith.constant 0 : i32
    return %arg0, %c0_i32, %c0_i32_0 : i32, i32, i32
  }
}

</mosaic_0001>

<llo_original>
// kernel: tpu_custom_call.1
$region0: #{tpu_custom_call.1}
  #allocation0 [shape = 'u32[]', space=smem, size = 0x4, offset = 0x4, fixed_abs, tag = 'smem constant byte address 0x4 - core index']
  #allocation1 [shape = 'u32[144,128]{1,0:T(1,128)}', space=vmem, size = 0x12000, scoped, tag = 'internal scratch']
  #allocation2 [shape = 'bf16[1,32,128]{2,1,0:T(16,128)(2,1)}', space=vmem, size = 0x2000, scoped, tag = 'scratch operand']
  %s0 = inlined_call_operand.vmem [shape: bf16[2,18,128], index: 0, kind: input, shape index: {}]
  %s1 = inlined_call_operand.hbm [shape: bf16[3,128,128], index: 1, kind: input, shape index: {}]
  %s2 = inlined_call_operand.vmem [shape: f32[1,128], index: 2, kind: input, shape index: {}]
  %s3 = inlined_call_operand.hbm [shape: bf16[3,128,128], index: 3, kind: input, shape index: {}]
  %s4 = inlined_call_operand.vmem [shape: f32[1,128], index: 4, kind: input, shape index: {}]
  %s5 = inlined_call_operand.hbm [shape: bf16[128,128], index: 5, kind: input, shape index: {}]
  %s6 = inlined_call_operand.vmem [shape: f32[1,128], index: 6, kind: input, shape index: {}]
  %s7 = inlined_call_operand.hbm [shape: bf16[128,1536], index: 7, kind: input, shape index: {}]
  %s8 = inlined_call_operand.vmem [shape: f32[1,1536], index: 8, kind: input, shape index: {}]
  %s9 = inlined_call_operand.hbm [shape: bf16[4,128,128], index: 9, kind: input, shape index: {}]
  %s10 = inlined_call_operand.vmem [shape: f32[1,128], index: 10, kind: input, shape index: {}]
  %s11 = inlined_call_operand.hbm [shape: f32[2,16,128], index: 11, kind: output, shape index: {}]
  %s12 = sld [smem:[#allocation0]]
  $region97: #{tpu_custom_call.1} parent=0
    _
  %s14 = ssub.s32 1, %s12
  %s15 = scalar_select 0, %s14, %s12
  $region1: #{tpu_custom_call.1} parent=0
    #allocation3 [shape = 'u8[98304]{0}', space=vmem, size = 0x18000, scoped, tag = 'input window, operand 1, single buffered']
    #allocation4 [shape = 's32[2]{0}', space=sflag, size = 0x8, scoped, tag = 'scoped memory for tpu_custom_call.1']
    #allocation5 [shape = 's32[2]{0}', space=sflag, size = 0x8, scoped, tag = 'scoped memory for tpu_custom_call.1']
    #allocation6 [shape = 'u8[98304]{0}', space=vmem, size = 0x18000, scoped, tag = 'input window, operand 3, single buffered']
    #allocation7 [shape = 's32[1]{0}', space=sflag, size = 0x4, scoped, tag = 'scoped memory for tpu_custom_call.1']
    #allocation8 [shape = 'u8[32768]{0}', space=vmem, size = 0x8000, scoped, tag = 'input window, operand 5, single buffered']
    #allocation9 [shape = 'u8[393216]{0}', space=vmem, size = 0x60000, scoped, tag = 'input window, operand 7, single buffered']
    #allocation10 [shape = 's32[1]{0}', space=sflag, size = 0x4, scoped, tag = 'scoped memory for tpu_custom_call.1']
    #allocation11 [shape = 'u8[131072]{0}', space=vmem, size = 0x20000, scoped, tag = 'input window, operand 9, single buffered']
    #allocation12 [shape = 'u8[16384]{0}', space=vmem, size = 0x4000, scoped, tag = 'output window, operand 0']
    %16 = vsyncpa [#allocation4], 0
    %17 = vsyncpa [#allocation7], 0
    %18 = vsyncpa [#allocation10], 0
    %19 = vsyncpa [#allocation5], 0
    %s20 = scalar_lea.sflag [#allocation5], 1
    %21 = vsyncpa %s20, 0
    loop: start=0, step=1, limit=4
    $region2: #{tpu_custom_call.1} parent=1 // loop_pre_header
      _
    $region3: #{tpu_custom_call.1} parent=1 // loop_header
      %s23 = sphi 0, %s27
      %p24 = scmp.ge.s32.totalorder %s23, 4
      %s33 = sphi 0, %s35
      %s36 = sphi 0, %s33
      %s37 = sphi 0, %s36
      %s53 = sphi 0, %s37
      %s57 = sphi 0, %s57
      %s59 = sphi 0, %s57
      %s60 = sphi 0, %s59
      %s74 = sphi 0, %s60
      %s78 = sphi 0, %s78
      %s80 = sphi 0, %s78
      %s81 = sphi 0, %s80
      %s95 = sphi 0, %s81
      %s99 = sphi 0, %s99
      %s101 = sphi 0, %s99
      %s102 = sphi 0, %s101
      %s116 = sphi 0, %s102
      %s120 = sphi 0, %s120
      %s122 = sphi 0, %s120
      %s123 = sphi 0, %s122
      %s137 = sphi 0, %s123
      %s141 = sphi 0, %s141
      %s143 = sphi 0, %s141
      %s144 = sphi 0, %s143
      %s158 = sphi 0, %s144
      %s162 = sphi 0, %s162
      %s164 = sphi 0, %s162
      %s165 = sphi 0, %s164
      %s179 = sphi 0, %s165
      %s183 = sphi 0, %s183
      %s185 = sphi 0, %s183
      %s186 = sphi 0, %s185
      %s200 = sphi 0, %s186
      %s204 = sphi 0, %s204
      %s206 = sphi 0, %s204
      %s207 = sphi 0, %s206
      %s221 = sphi 0, %s207
      %s225 = sphi 0, %s225
      %s227 = sphi 0, %s225
      %s228 = sphi 0, %s227
      %s242 = sphi 0, %s228
      %s246 = sphi 0, %s246
      %s248 = sphi 0, %s246
      %s249 = sphi 0, %s248
      %s263 = sphi 0, %s249
      %s269 = sphi 0, %s271
      %s272 = sphi 0, %s269
      %s273 = sphi 0, %s272
      %s289 = sphi 0, %s273
    $region4: #{tpu_custom_call.1} parent=1 // loop_header_branch
      %26 = sbr.rel (%p24) target = $region8
    $region5: #{tpu_custom_call.1} parent=1 // loop_body
      %s28 = ssub.s32 %s23, 1
      %s29 = ssub.s32 %s23, 2
      %s30 = sadd.s32 %s23, 1
      %s31 = ssub.s32 %s23, %s30
      %p32 = scmp.eq.s32.totalorder %s31, 0
      %s34 = sadd.s32 %s33, 1
      %s35 = scalar_select %p32, %s33, %s34
      %p38 = pneg %p32
      %p39 = scmp.eq.s32.totalorder %s23, 1
      %p40 = por %p38, %p39
      %p41 = scmp.ne.s32.totalorder %s33, %s36
      %p42 = scmp.eq.s32.totalorder %s23, 0
      %p43 = por %p41, %p42
      %p44 = scmp.ne.s32.totalorder %s33, %s36
      %p45 = scmp.eq.s32.totalorder %s28, 1
      %p46 = por %p44, %p45
      %p47 = scmp.ne.s32.totalorder %s36, %s37
      %p48 = scmp.eq.s32.totalorder %s28, 0
      %p49 = por %p47, %p48
      %p50 = scmp.ne.s32.totalorder %s36, %s37
      %p51 = scmp.eq.s32.totalorder %s29, 1
      %p52 = por %p50, %p51
      %p54 = scmp.ne.s32.totalorder %s37, %s53
      %p55 = scmp.eq.s32.totalorder %s29, 0
      %p56 = por %p54, %p55
      %s58 = sadd.s32 %s57, 1
      %p61 = scmp.eq.s32.totalorder %s23, 1
      %p62 = scmp.ne.s32.totalorder %s57, %s59
      %p63 = scmp.eq.s32.totalorder %s23, 0
      %p64 = por %p62, %p63
      %p65 = scmp.ne.s32.totalorder %s57, %s59
      %p66 = scmp.eq.s32.totalorder %s28, 1
      %p67 = por %p65, %p66
      %p68 = scmp.ne.s32.totalorder %s59, %s60
      %p69 = scmp.eq.s32.totalorder %s28, 0
      %p70 = por %p68, %p69
      %p71 = scmp.ne.s32.totalorder %s59, %s60
      %p72 = scmp.eq.s32.totalorder %s29, 1
      %p73 = por %p71, %p72
      %p75 = scmp.ne.s32.totalorder %s60, %s74
      %p76 = scmp.eq.s32.totalorder %s29, 0
      %p77 = por %p75, %p76
      %s79 = sadd.s32 %s78, 1
      %p82 = scmp.eq.s32.totalorder %s23, 1
      %p83 = scmp.ne.s32.totalorder %s78, %s80
      %p84 = scmp.eq.s32.totalorder %s23, 0
      %p85 = por %p83, %p84
      %p86 = scmp.ne.s32.totalorder %s78, %s80
      %p87 = scmp.eq.s32.totalorder %s28, 1
      %p88 = por %p86, %p87
      %p89 = scmp.ne.s32.totalorder %s80, %s81
      %p90 = scmp.eq.s32.totalorder %s28, 0
      %p91 = por %p89, %p90
      %p92 = scmp.ne.s32.totalorder %s80, %s81
      %p93 = scmp.eq.s32.totalorder %s29, 1
      %p94 = por %p92, %p93
      %p96 = scmp.ne.s32.totalorder %s81, %s95
      %p97 = scmp.eq.s32.totalorder %s29, 0
      %p98 = por %p96, %p97
      %s100 = sadd.s32 %s99, 1
      %p103 = scmp.eq.s32.totalorder %s23, 1
      %p104 = scmp.ne.s32.totalorder %s99, %s101
      %p105 = scmp.eq.s32.totalorder %s23, 0
      %p106 = por %p104, %p105
      %p107 = scmp.ne.s32.totalorder %s99, %s101
      %p108 = scmp.eq.s32.totalorder %s28, 1
      %p109 = por %p107, %p108
      %p110 = scmp.ne.s32.totalorder %s101, %s102
      %p111 = scmp.eq.s32.totalorder %s28, 0
      %p112 = por %p110, %p111
      %p113 = scmp.ne.s32.totalorder %s101, %s102
      %p114 = scmp.eq.s32.totalorder %s29, 1
      %p115 = por %p113, %p114
      %p117 = scmp.ne.s32.totalorder %s102, %s116
      %p118 = scmp.eq.s32.totalorder %s29, 0
      %p119 = por %p117, %p118
      %s121 = sadd.s32 %s120, 1
      %p124 = scmp.eq.s32.totalorder %s23, 1
      %p125 = scmp.ne.s32.totalorder %s120, %s122
      %p126 = scmp.eq.s32.totalorder %s23, 0
      %p127 = por %p125, %p126
      %p128 = scmp.ne.s32.totalorder %s120, %s122
      %p129 = scmp.eq.s32.totalorder %s28, 1
      %p130 = por %p128, %p129
      %p131 = scmp.ne.s32.totalorder %s122, %s123
      %p132 = scmp.eq.s32.totalorder %s28, 0
      %p133 = por %p131, %p132
      %p134 = scmp.ne.s32.totalorder %s122, %s123
      %p135 = scmp.eq.s32.totalorder %s29, 1
      %p136 = por %p134, %p135
      %p138 = scmp.ne.s32.totalorder %s123, %s137
      %p139 = scmp.eq.s32.totalorder %s29, 0
      %p140 = por %p138, %p139
      %s142 = sadd.s32 %s141, 1
      %p145 = scmp.eq.s32.totalorder %s23, 1
      %p146 = scmp.ne.s32.totalorder %s141, %s143
      %p147 = scmp.eq.s32.totalorder %s23, 0
      %p148 = por %p146, %p147
      %p149 = scmp.ne.s32.totalorder %s141, %s143
      %p150 = scmp.eq.s32.totalorder %s28, 1
      %p151 = por %p149, %p150
      %p152 = scmp.ne.s32.totalorder %s143, %s144
      %p153 = scmp.eq.s32.totalorder %s28, 0
      %p154 = por %p152, %p153
      %p155 = scmp.ne.s32.totalorder %s143, %s144
      %p156 = scmp.eq.s32.totalorder %s29, 1
      %p157 = por %p155, %p156
      %p159 = scmp.ne.s32.totalorder %s144, %s158
      %p160 = scmp.eq.s32.totalorder %s29, 0
      %p161 = por %p159, %p160
      %s163 = sadd.s32 %s162, 1
      %p166 = scmp.eq.s32.totalorder %s23, 1
      %p167 = scmp.ne.s32.totalorder %s162, %s164
      %p168 = scmp.eq.s32.totalorder %s23, 0
      %p169 = por %p167, %p168
      %p170 = scmp.ne.s32.totalorder %s162, %s164
      %p171 = scmp.eq.s32.totalorder %s28, 1
      %p172 = por %p170, %p171
      %p173 = scmp.ne.s32.totalorder %s164, %s165
      %p174 = scmp.eq.s32.totalorder %s28, 0
      %p175 = por %p173, %p174
      %p176 = scmp.ne.s32.totalorder %s164, %s165
      %p177 = scmp.eq.s32.totalorder %s29, 1
      %p178 = por %p176, %p177
      %p180 = scmp.ne.s32.totalorder %s165, %s179
      %p181 = scmp.eq.s32.totalorder %s29, 0
      %p182 = por %p180, %p181
      %s184 = sadd.s32 %s183, 1
      %p187 = scmp.eq.s32.totalorder %s23, 1
      %p188 = scmp.ne.s32.totalorder %s183, %s185
      %p189 = scmp.eq.s32.totalorder %s23, 0
      %p190 = por %p188, %p189
      %p191 = scmp.ne.s32.totalorder %s183, %s185
      %p192 = scmp.eq.s32.totalorder %s28, 1
      %p193 = por %p191, %p192
      %p194 = scmp.ne.s32.totalorder %s185, %s186
      %p195 = scmp.eq.s32.totalorder %s28, 0
      %p196 = por %p194, %p195
      %p197 = scmp.ne.s32.totalorder %s185, %s186
      %p198 = scmp.eq.s32.totalorder %s29, 1
      %p199 = por %p197, %p198
      %p201 = scmp.ne.s32.totalorder %s186, %s200
      %p202 = scmp.eq.s32.totalorder %s29, 0
      %p203 = por %p201, %p202
      %s205 = sadd.s32 %s204, 1
      %p208 = scmp.eq.s32.totalorder %s23, 1
      %p209 = scmp.ne.s32.totalorder %s204, %s206
      %p210 = scmp.eq.s32.totalorder %s23, 0
      %p211 = por %p209, %p210
      %p212 = scmp.ne.s32.totalorder %s204, %s206
      %p213 = scmp.eq.s32.totalorder %s28, 1
      %p214 = por %p212, %p213
      %p215 = scmp.ne.s32.totalorder %s206, %s207
      %p216 = scmp.eq.s32.totalorder %s28, 0
      %p217 = por %p215, %p216
      %p218 = scmp.ne.s32.totalorder %s206, %s207
      %p219 = scmp.eq.s32.totalorder %s29, 1
      %p220 = por %p218, %p219
      %p222 = scmp.ne.s32.totalorder %s207, %s221
      %p223 = scmp.eq.s32.totalorder %s29, 0
      %p224 = por %p222, %p223
      %s226 = sadd.s32 %s225, 1
      %p229 = scmp.eq.s32.totalorder %s23, 1
      %p230 = scmp.ne.s32.totalorder %s225, %s227
      %p231 = scmp.eq.s32.totalorder %s23, 0
      %p232 = por %p230, %p231
      %p233 = scmp.ne.s32.totalorder %s225, %s227
      %p234 = scmp.eq.s32.totalorder %s28, 1
      %p235 = por %p233, %p234
      %p236 = scmp.ne.s32.totalorder %s227, %s228
      %p237 = scmp.eq.s32.totalorder %s28, 0
      %p238 = por %p236, %p237
      %p239 = scmp.ne.s32.totalorder %s227, %s228
      %p240 = scmp.eq.s32.totalorder %s29, 1
      %p241 = por %p239, %p240
      %p243 = scmp.ne.s32.totalorder %s228, %s242
      %p244 = scmp.eq.s32.totalorder %s29, 0
      %p245 = por %p243, %p244
      %s247 = sadd.s32 %s246, 1
      %p250 = scmp.eq.s32.totalorder %s23, 1
      %p251 = scmp.ne.s32.totalorder %s246, %s248
      %p252 = scmp.eq.s32.totalorder %s23, 0
      %p253 = por %p251, %p252
      %p254 = scmp.ne.s32.totalorder %s246, %s248
      %p255 = scmp.eq.s32.totalorder %s28, 1
      %p256 = por %p254, %p255
      %p257 = scmp.ne.s32.totalorder %s248, %s249
      %p258 = scmp.eq.s32.totalorder %s28, 0
      %p259 = por %p257, %p258
      %p260 = scmp.ne.s32.totalorder %s248, %s249
      %p261 = scmp.eq.s32.totalorder %s29, 1
      %p262 = por %p260, %p261
      %p264 = scmp.ne.s32.totalorder %s249, %s263
      %p265 = scmp.eq.s32.totalorder %s29, 0
      %p266 = por %p264, %p265
      %s267 = ssub.s32 %s23, %s30
      %p268 = scmp.eq.s32.totalorder %s267, 0
      %s270 = sadd.s32 %s269, 1
      %s271 = scalar_select %p268, %s269, %s270
      %p274 = pneg %p268
      %p275 = scmp.eq.s32.totalorder %s23, 1
      %p276 = por %p274, %p275
      %p277 = scmp.ne.s32.totalorder %s269, %s272
      %p278 = scmp.eq.s32.totalorder %s23, 0
      %p279 = por %p277, %p278
      %p280 = scmp.ne.s32.totalorder %s269, %s272
      %p281 = scmp.eq.s32.totalorder %s28, 1
      %p282 = por %p280, %p281
      %p283 = scmp.ne.s32.totalorder %s272, %s273
      %p284 = scmp.eq.s32.totalorder %s28, 0
      %p285 = por %p283, %p284
      %p286 = scmp.ne.s32.totalorder %s272, %s273
      %p287 = scmp.eq.s32.totalorder %s29, 1
      %p288 = por %p286, %p287
      %p290 = scmp.ne.s32.totalorder %s273, %s289
      %p291 = scmp.eq.s32.totalorder %s29, 0
      %p292 = por %p290, %p291
      %p293 = scmp.le.s32.totalorder 1, %s23
      %p294 = scmp.lt.s32.totalorder %s23, 3
      %p295 = pnand %p293, %p294
      %p296 = pneg %p295
      // Predicated region
      $region9: #{tpu_custom_call.1} parent=5 // pred_check
        _
      $region10: #{tpu_custom_call.1} parent=5 // pred_check_branch
        %298 = sbr.rel (%p295) target = $region12
      $region11: #{tpu_custom_call.1} parent=5 // pred_region
        %s299 = ssub.s32 %s23, 1
        // Predicated region
        $region13: #{tpu_custom_call.1} parent=11 // pred_check
          %p300 = pneg %p70
        $region14: #{tpu_custom_call.1} parent=11 // pred_check_branch
          %302 = sbr.rel (%p300) target = $region16
        $region15: #{tpu_custom_call.1} parent=11 // pred_region
          %s304 = ssub.s32 3072, 3072
          %305 = vsyncadd [#allocation4], %s304
          %s306 = sshll.u32 [#allocation3], 4
          %s307 = int_to_ptr.vmem [resolvable:$true] %s306
          %312 = dma.hbm_to_vmem [thread:$0]  %s1, 3072, %s307, [#allocation4], 64, 64, 4
        $region16: #{tpu_custom_call.1} parent=11 // pred_fallthru
          _
        // Predicated region
        $region17: #{tpu_custom_call.1} parent=11 // pred_check
          %p313 = pneg %p91
        $region18: #{tpu_custom_call.1} parent=11 // pred_check_branch
          %315 = sbr.rel (%p313) target = $region20
        $region19: #{tpu_custom_call.1} parent=11 // pred_region
          _
        $region20: #{tpu_custom_call.1} parent=11 // pred_fallthru
          _
        // Predicated region
        $region21: #{tpu_custom_call.1} parent=11 // pred_check
          %p316 = pneg %p112
        $region22: #{tpu_custom_call.1} parent=11 // pred_check_branch
          %318 = sbr.rel (%p316) target = $region24
        $region23: #{tpu_custom_call.1} parent=11 // pred_region
          %s320 = ssub.s32 3072, 3072
          %321 = vsyncadd [#allocation7], %s320
          %s322 = sshll.u32 [#allocation6], 4
          %s323 = int_to_ptr.vmem [resolvable:$true] %s322
          %328 = dma.hbm_to_vmem [thread:$0]  %s3, 3072, %s323, [#allocation7], 64, 64, 4
        $region24: #{tpu_custom_call.1} parent=11 // pred_fallthru
          _
        // Predicated region
        $region25: #{tpu_custom_call.1} parent=11 // pred_check
          %p329 = pneg %p133
        $region26: #{tpu_custom_call.1} parent=11 // pred_check_branch
          %331 = sbr.rel (%p329) target = $region28
        $region27: #{tpu_custom_call.1} parent=11 // pred_region
          _
        $region28: #{tpu_custom_call.1} parent=11 // pred_fallthru
          _
        // Predicated region
        $region29: #{tpu_custom_call.1} parent=11 // pred_check
          %p332 = pneg %p154
        $region30: #{tpu_custom_call.1} parent=11 // pred_check_branch
          %334 = sbr.rel (%p332) target = $region32
        $region31: #{tpu_custom_call.1} parent=11 // pred_region
          %s336 = ssub.s32 1024, 1024
          %337 = vsyncadd [#allocation7], %s336
          %s338 = sshll.u32 [#allocation8], 4
          %s339 = int_to_ptr.vmem [resolvable:$true] %s338
          %344 = dma.hbm_to_vmem [thread:$0]  %s5, 1024, %s339, [#allocation7], 64, 64, 4
        $region32: #{tpu_custom_call.1} parent=11 // pred_fallthru
          _
        // Predicated region
        $region33: #{tpu_custom_call.1} parent=11 // pred_check
          %p345 = pneg %p175
        $region34: #{tpu_custom_call.1} parent=11 // pred_check_branch
          %347 = sbr.rel (%p345) target = $region36
        $region35: #{tpu_custom_call.1} parent=11 // pred_region
          _
        $region36: #{tpu_custom_call.1} parent=11 // pred_fallthru
          _
        // Predicated region
        $region37: #{tpu_custom_call.1} parent=11 // pred_check
          %p348 = pneg %p196
        $region38: #{tpu_custom_call.1} parent=11 // pred_check_branch
          %350 = sbr.rel (%p348) target = $region40
        $region39: #{tpu_custom_call.1} parent=11 // pred_region
          %s352 = ssub.s32 12288, 12288
          %353 = vsyncadd [#allocation10], %s352
          %s354 = sshll.u32 [#allocation9], 4
          %s355 = int_to_ptr.vmem [resolvable:$true] %s354
          %360 = dma.hbm_to_vmem [thread:$0]  %s7, 12288, %s355, [#allocation10], 768, 768, 48
        $region40: #{tpu_custom_call.1} parent=11 // pred_fallthru
          _
        // Predicated region
        $region41: #{tpu_custom_call.1} parent=11 // pred_check
          %p361 = pneg %p217
        $region42: #{tpu_custom_call.1} parent=11 // pred_check_branch
          %363 = sbr.rel (%p361) target = $region44
        $region43: #{tpu_custom_call.1} parent=11 // pred_region
          _
        $region44: #{tpu_custom_call.1} parent=11 // pred_fallthru
          _
        // Predicated region
        $region45: #{tpu_custom_call.1} parent=11 // pred_check
          %p364 = pneg %p238
        $region46: #{tpu_custom_call.1} parent=11 // pred_check_branch
          %366 = sbr.rel (%p364) target = $region48
        $region47: #{tpu_custom_call.1} parent=11 // pred_region
          %s368 = ssub.s32 4096, 4096
          %369 = vsyncadd [#allocation10], %s368
          %s370 = sshll.u32 [#allocation11], 4
          %s371 = int_to_ptr.vmem [resolvable:$true] %s370
          %376 = dma.hbm_to_vmem [thread:$0]  %s9, 4096, %s371, [#allocation10], 64, 64, 4
        $region48: #{tpu_custom_call.1} parent=11 // pred_fallthru
          _
        // Predicated region
        $region49: #{tpu_custom_call.1} parent=11 // pred_check
          %p377 = pneg %p259
        $region50: #{tpu_custom_call.1} parent=11 // pred_check_branch
          %379 = sbr.rel (%p377) target = $region52
        $region51: #{tpu_custom_call.1} parent=11 // pred_region
          _
        $region52: #{tpu_custom_call.1} parent=11 // pred_fallthru
          _
      $region12: #{tpu_custom_call.1} parent=5 // pred_fallthru
        _
      %p380 = scmp.lt.s32.totalorder %s23, 2
      // Predicated region
      $region53: #{tpu_custom_call.1} parent=5 // pred_check
        %p381 = pneg %p380
      $region54: #{tpu_custom_call.1} parent=5 // pred_check_branch
        %383 = sbr.rel (%p381) target = $region56
      $region55: #{tpu_custom_call.1} parent=5 // pred_region
        // Predicated region
        $region57: #{tpu_custom_call.1} parent=55 // pred_check
          %p384 = pneg %p43
        $region58: #{tpu_custom_call.1} parent=55 // pred_check_branch
          %386 = sbr.rel (%p384) target = $region60
        $region59: #{tpu_custom_call.1} parent=55 // pred_region
          %p387 = scmp.lt.s32.totalorder %s23, 1
          %s388 = scalar_select %p387, %s23, 1
          %s389 = smul.addr %s388, 3
          %s390 = smul.addr %s389, 4
          %s391 = scalar_lea.vmem %s0, %s390
        $region60: #{tpu_custom_call.1} parent=55 // pred_fallthru
          _
      $region56: #{tpu_custom_call.1} parent=5 // pred_fallthru
        _
      %p392 = scmp.le.s32.totalorder 1, %s23
      %p393 = scmp.lt.s32.totalorder %s23, 3
      %p394 = pnand %p392, %p393
      %p395 = pneg %p394
      // Predicated region
      $region61: #{tpu_custom_call.1} parent=5 // pred_check
        _
      $region62: #{tpu_custom_call.1} parent=5 // pred_check_branch
        %397 = sbr.rel (%p394) target = $region64
      $region63: #{tpu_custom_call.1} parent=5 // pred_region
        %s398 = ssub.s32 %s23, 1
        // Predicated region
        $region65: #{tpu_custom_call.1} parent=63 // pred_check
          %p399 = pneg %p70
        $region66: #{tpu_custom_call.1} parent=63 // pred_check_branch
          %401 = sbr.rel (%p399) target = $region68
        $region67: #{tpu_custom_call.1} parent=63 // pred_region
          %402 = dma.done [#allocation4], 3072
        $region68: #{tpu_custom_call.1} parent=63 // pred_fallthru
          _
        // Predicated region
        $region69: #{tpu_custom_call.1} parent=63 // pred_check
          %p403 = pneg %p112
        $region70: #{tpu_custom_call.1} parent=63 // pred_check_branch
          %405 = sbr.rel (%p403) target = $region72
        $region71: #{tpu_custom_call.1} parent=63 // pred_region
          %406 = dma.done [#allocation7], 3072
        $region72: #{tpu_custom_call.1} parent=63 // pred_fallthru
          _
        // Predicated region
        $region73: #{tpu_custom_call.1} parent=63 // pred_check
          %p407 = pneg %p154
        $region74: #{tpu_custom_call.1} parent=63 // pred_check_branch
          %409 = sbr.rel (%p407) target = $region76
        $region75: #{tpu_custom_call.1} parent=63 // pred_region
          %410 = dma.done [#allocation7], 1024
        $region76: #{tpu_custom_call.1} parent=63 // pred_fallthru
          _
        // Predicated region
        $region77: #{tpu_custom_call.1} parent=63 // pred_check
          %p411 = pneg %p196
        $region78: #{tpu_custom_call.1} parent=63 // pred_check_branch
          %413 = sbr.rel (%p411) target = $region80
        $region79: #{tpu_custom_call.1} parent=63 // pred_region
          %414 = dma.done [#allocation10], 12288
        $region80: #{tpu_custom_call.1} parent=63 // pred_fallthru
          _
        // Predicated region
        $region81: #{tpu_custom_call.1} parent=63 // pred_check
          %p415 = pneg %p238
        $region82: #{tpu_custom_call.1} parent=63 // pred_check_branch
          %417 = sbr.rel (%p415) target = $region84
        $region83: #{tpu_custom_call.1} parent=63 // pred_region
          %418 = dma.done [#allocation10], 4096
        $region84: #{tpu_custom_call.1} parent=63 // pred_fallthru
          _
        %p419 = scmp.lt.s32.totalorder %s28, 1
        %s420 = scalar_select %p419, %s28, 1
        %s421 = smul.addr %s420, 3
        %s422 = smul.addr %s421, 4
        %s423 = scalar_lea.vmem %s0, %s422
        %p424 = pneg %p49
        %p425 = pneg %p46
        %p426 = pneg %p70
        %p427 = pneg %p67
        %p428 = pneg %p91
        %p429 = pneg %p88
        %p430 = pneg %p112
        %p431 = pneg %p109
        %p432 = pneg %p133
        %p433 = pneg %p130
        %p434 = pneg %p154
        %p435 = pneg %p151
        %p436 = pneg %p175
        %p437 = pneg %p172
        %p438 = pneg %p196
        %p439 = pneg %p193
        %p440 = pneg %p217
        %p441 = pneg %p214
        %p442 = pneg %p238
        %p443 = pneg %p235
        %p444 = pneg %p259
        %p445 = pneg %p256
        %p446 = pneg %p285
        %p447 = pneg %p282
        %s448 = sand.u32 %s272, 1
        %s449 = scalar_lea.sflag [#allocation5], %s448
        %s450 = sand.u32 %s272, 1
        %s451 = smul.addr %s450, 16
        %s452 = scalar_lea.vmem [#allocation12], %s451
        %p453 = scmp.lt.s32.totalorder %s28, 1
        %s454 = scalar_select %p453, %s28, 1
        %s455 = smul.addr %s454, 3
        %s456 = smul.addr %s455, 4
        %s457 = scalar_lea.vmem %s0, %s456
        %v459 = vld [vmem:[%s457] sm:$0xf]
        %v460 = vld [vmem:[%s457 + $0x4] sm:$0xf]
        %v461 = vld [vmem:[#allocation3] sm:$0xf]
        %v462 = vld [vmem:[#allocation3 + $0x4] sm:$0xf]
        %v463 = vld [vmem:[#allocation3 + $0x8] sm:$0xf]
        %v464 = vld [vmem:[#allocation3 + $0xc] sm:$0xf]
        %v465 = vld [vmem:[#allocation3 + $0x10] sm:$0xf]
        %v466 = vld [vmem:[#allocation3 + $0x14] sm:$0xf]
        %v467 = vld [vmem:[#allocation3 + $0x18] sm:$0xf]
        %v468 = vld [vmem:[#allocation3 + $0x1c] sm:$0xf]
        %v469 = vld [vmem:[#allocation3 + $0x20] sm:$0xf]
        %v470 = vld [vmem:[#allocation3 + $0x24] sm:$0xf]
        %v471 = vld [vmem:[#allocation3 + $0x28] sm:$0xf]
        %v472 = vld [vmem:[#allocation3 + $0x2c] sm:$0xf]
        %v473 = vld [vmem:[#allocation3 + $0x30] sm:$0xf]
        %v474 = vld [vmem:[#allocation3 + $0x34] sm:$0xf]
        %v475 = vld [vmem:[#allocation3 + $0x38] sm:$0xf]
        %v476 = vld [vmem:[#allocation3 + $0x3c] sm:$0xf]
        %v477 = vld [vmem:[%s457 + $0x8] sm:$0x1]
        %s478 = scalar_lea.vmem [#allocation3], 64
        %v479 = vld [vmem:[%s478] sm:$0xf]
        %v480 = vld [vmem:[%s478 + $0x4] sm:$0xf]
        %v481 = vld [vmem:[%s478 + $0x8] sm:$0xf]
        %v482 = vld [vmem:[%s478 + $0xc] sm:$0xf]
        %v483 = vld [vmem:[%s478 + $0x10] sm:$0xf]
        %v484 = vld [vmem:[%s478 + $0x14] sm:$0xf]
        %v485 = vld [vmem:[%s478 + $0x18] sm:$0xf]
        %v486 = vld [vmem:[%s478 + $0x1c] sm:$0xf]
        %v487 = vld [vmem:[%s478 + $0x20] sm:$0xf]
        %v488 = vld [vmem:[%s478 + $0x24] sm:$0xf]
        %v489 = vld [vmem:[%s478 + $0x28] sm:$0xf]
        %v490 = vld [vmem:[%s478 + $0x2c] sm:$0xf]
        %v491 = vld [vmem:[%s478 + $0x30] sm:$0xf]
        %v492 = vld [vmem:[%s478 + $0x34] sm:$0xf]
        %v493 = vld [vmem:[%s478 + $0x38] sm:$0xf]
        %v494 = vld [vmem:[%s478 + $0x3c] sm:$0xf]
        %v498 = vunpack.c.l.b16 %v459
        %v499 = vunpack.c.l.b16 %v460
        %v500 = vunpack.c.l.b16 %v477
        %v501 = vpack.c.b16 %v499, %v498
        %v502 = vpack.c.b16 %v500, %v500
        %vm503 = vsmask.f32 7424
        %v505 = vshrl.u32 %v501, 16
        %v507 = vshll.u32 %v501, 16
        %v509 = vrot.slane %v507, 1
        %v510 = vor.u32 %v505, %v509
        %v512 = vshll.u32 %v502, 16
        %v514 = vrot.slane %v512, 1
        %v515 = vsel %vm503, %v510, %v514
        %v533 = vunpack.c.l.b16 %v479
        %v534 = vunpack.c.l.b16 %v480
        %v535 = vunpack.c.l.b16 %v481
        %v536 = vunpack.c.l.b16 %v482
        %v537 = vunpack.c.l.b16 %v483
        %v538 = vunpack.c.l.b16 %v484
        %v539 = vunpack.c.l.b16 %v485
        %v540 = vunpack.c.l.b16 %v486
        %v541 = vunpack.c.l.b16 %v487
        %v542 = vunpack.c.l.b16 %v488
        %v543 = vunpack.c.l.b16 %v489
        %v544 = vunpack.c.l.b16 %v490
        %v545 = vunpack.c.l.b16 %v491
        %v546 = vunpack.c.l.b16 %v492
        %v547 = vunpack.c.l.b16 %v493
        %v548 = vunpack.c.l.b16 %v494
        %v549 = vpack.c.b16 %v534, %v533
        %v550 = vpack.c.b16 %v536, %v535
        %v551 = vpack.c.b16 %v538, %v537
        %v552 = vpack.c.b16 %v540, %v539
        %v553 = vpack.c.b16 %v542, %v541
        %v554 = vpack.c.b16 %v544, %v543
        %v555 = vpack.c.b16 %v546, %v545
        %v556 = vpack.c.b16 %v548, %v547
        %565 = vmatprep.subr.bf16.mxu0 0
        %566 = vmatpush1.bf16.msra.mxu0 %v549
        %567 = vmatprep.subr.bf16.mxu0 0
        %568 = vmatpush1.bf16.msra.mxu0 %v550
        %569 = vmatprep.subr.bf16.mxu0 0
        %570 = vmatpush1.bf16.msra.mxu0 %v551
        %571 = vmatprep.subr.bf16.mxu0 0
        %572 = vmatpush1.bf16.msra.mxu0 %v552
        %573 = vmatprep.subr.bf16.mxu0 0
        %574 = vmatpush1.bf16.msra.mxu0 %v553
        %575 = vmatprep.subr.bf16.mxu0 0
        %576 = vmatpush1.bf16.msra.mxu0 %v554
        %577 = vmatprep.subr.bf16.mxu0 0
        %578 = vmatpush1.bf16.msra.mxu0 %v555
        %579 = vmatprep.subr.bf16.mxu0 0
        %580 = vmatpush1.bf16.msra.mxu0 %v556
        %581 = vmatprep.subr.bf16.mxu0 0
        %582 = vmatpush1.bf16.msra.mxu0 0
        %583 = vmatprep.subr.bf16.mxu0 0
        %584 = vmatpush1.bf16.msra.mxu0 0
        %585 = vmatprep.subr.bf16.mxu0 0
        %586 = vmatpush1.bf16.msra.mxu0 0
        %587 = vmatprep.subr.bf16.mxu0 0
        %588 = vmatpush1.bf16.msra.mxu0 0
        %589 = vmatprep.subr.bf16.mxu0 0
        %590 = vmatpush1.bf16.msra.mxu0 0
        %591 = vmatprep.subr.bf16.mxu0 0
        %592 = vmatpush1.bf16.msra.mxu0 0
        %593 = vmatprep.subr.bf16.mxu0 0
        %594 = vmatpush1.bf16.msra.mxu0 0
        %595 = vmatprep.subr.bf16.mxu0 0
        %596 = vmatpush1.bf16.msra.mxu0 0
        %597 = vmatprep.mubr.bf16.mxu0 0
        %598 = vmatmul.mubr.bf16.gmra.mrb[0].mxu0 %v515
        %v599 = vpop.f32.mrb[0].mxu0
        %v600 = vadd.f32 0.0, %v599
        %v601 = vpop.f32.mrb[0].mxu0
        %v602 = vpop.f32.mrb[0].mxu0
        %v603 = vadd.f32 0.0, %v602
        %v604 = vpop.f32.mrb[0].mxu0
        %605 = vdwg.mxu0
        %v623 = vunpack.c.l.b16 %v461
        %v624 = vunpack.c.l.b16 %v462
        %v625 = vunpack.c.l.b16 %v463
        %v626 = vunpack.c.l.b16 %v464
        %v627 = vunpack.c.l.b16 %v465
        %v628 = vunpack.c.l.b16 %v466
        %v629 = vunpack.c.l.b16 %v467
        %v630 = vunpack.c.l.b16 %v468
        %v631 = vunpack.c.l.b16 %v469
        %v632 = vunpack.c.l.b16 %v470
        %v633 = vunpack.c.l.b16 %v471
        %v634 = vunpack.c.l.b16 %v472
        %v635 = vunpack.c.l.b16 %v473
        %v636 = vunpack.c.l.b16 %v474
        %v637 = vunpack.c.l.b16 %v475
        %v638 = vunpack.c.l.b16 %v476
        %v639 = vpack.c.b16 %v624, %v623
        %v640 = vpack.c.b16 %v626, %v625
        %v641 = vpack.c.b16 %v628, %v627
        %v642 = vpack.c.b16 %v630, %v629
        %v643 = vpack.c.b16 %v632, %v631
        %v644 = vpack.c.b16 %v634, %v633
        %v645 = vpack.c.b16 %v636, %v635
        %v646 = vpack.c.b16 %v638, %v637
        %655 = vmatprep.subr.bf16.mxu0 0
        %656 = vmatpush1.bf16.msra.mxu0 %v639
        %657 = vmatprep.subr.bf16.mxu0 0
        %658 = vmatpush1.bf16.msra.mxu0 %v640
        %659 = vmatprep.subr.bf16.mxu0 0
        %660 = vmatpush1.bf16.msra.mxu0 %v641
        %661 = vmatprep.subr.bf16.mxu0 0
        %662 = vmatpush1.bf16.msra.mxu0 %v642
        %663 = vmatprep.subr.bf16.mxu0 0
        %664 = vmatpush1.bf16.msra.mxu0 %v643
        %665 = vmatprep.subr.bf16.mxu0 0
        %666 = vmatpush1.bf16.msra.mxu0 %v644
        %667 = vmatprep.subr.bf16.mxu0 0
        %668 = vmatpush1.bf16.msra.mxu0 %v645
        %669 = vmatprep.subr.bf16.mxu0 0
        %670 = vmatpush1.bf16.msra.mxu0 %v646
        %671 = vmatprep.subr.bf16.mxu0 0
        %672 = vmatpush1.bf16.msra.mxu0 0
        %673 = vmatprep.subr.bf16.mxu0 0
        %674 = vmatpush1.bf16.msra.mxu0 0
        %675 = vmatprep.subr.bf16.mxu0 0
        %676 = vmatpush1.bf16.msra.mxu0 0
        %677 = vmatprep.subr.bf16.mxu0 0
        %678 = vmatpush1.bf16.msra.mxu0 0
        %679 = vmatprep.subr.bf16.mxu0 0
        %680 = vmatpush1.bf16.msra.mxu0 0
        %681 = vmatprep.subr.bf16.mxu0 0
        %682 = vmatpush1.bf16.msra.mxu0 0
        %683 = vmatprep.subr.bf16.mxu0 0
        %684 = vmatpush1.bf16.msra.mxu0 0
        %685 = vmatprep.subr.bf16.mxu0 0
        %686 = vmatpush1.bf16.msra.mxu0 0
        %687 = vmatprep.mubr.bf16.mxu0 0
        %688 = vmatmul.mubr.bf16.gmra.mrb[0].mxu0 %v501
        %v689 = vpop.f32.mrb[0].mxu0
        %v690 = vadd.f32 %v600, %v689
        %v691 = vpop.f32.mrb[0].mxu0
        %v692 = vpop.f32.mrb[0].mxu0
        %v693 = vadd.f32 %v603, %v692
        %v694 = vpop.f32.mrb[0].mxu0
        %695 = vdwg.mxu0
        %v696 = vld [vmem:[%s457] sm:$0xe]
        %s697 = scalar_lea.vmem [#allocation3], 128
        %v698 = vld [vmem:[%s697] sm:$0xf]
        %v699 = vld [vmem:[%s697 + $0x4] sm:$0xf]
        %v700 = vld [vmem:[%s697 + $0x8] sm:$0xf]
        %v701 = vld [vmem:[%s697 + $0xc] sm:$0xf]
        %v702 = vld [vmem:[%s697 + $0x10] sm:$0xf]
        %v703 = vld [vmem:[%s697 + $0x14] sm:$0xf]
        %v704 = vld [vmem:[%s697 + $0x18] sm:$0xf]
        %v705 = vld [vmem:[%s697 + $0x1c] sm:$0xf]
        %v706 = vld [vmem:[%s697 + $0x20] sm:$0xf]
        %v707 = vld [vmem:[%s697 + $0x24] sm:$0xf]
        %v708 = vld [vmem:[%s697 + $0x28] sm:$0xf]
        %v709 = vld [vmem:[%s697 + $0x2c] sm:$0xf]
        %v710 = vld [vmem:[%s697 + $0x30] sm:$0xf]
        %v711 = vld [vmem:[%s697 + $0x34] sm:$0xf]
        %v712 = vld [vmem:[%s697 + $0x38] sm:$0xf]
        %v713 = vld [vmem:[%s697 + $0x3c] sm:$0xf]
        %v715 = vunpack.c.l.b16 %v696
        %v716 = vpack.c.b16 %v499, %v715
        %vm717 = vcmask 1046528
        %v718 = vrot.slane %v716, 1
        %v719 = vrot.slane %v502, 1
        %v720 = vsel %vm717, %v718, %v719
        %v738 = vunpack.c.l.b16 %v698
        %v739 = vunpack.c.l.b16 %v699
        %v740 = vunpack.c.l.b16 %v700
        %v741 = vunpack.c.l.b16 %v701
        %v742 = vunpack.c.l.b16 %v702
        %v743 = vunpack.c.l.b16 %v703
        %v744 = vunpack.c.l.b16 %v704
        %v745 = vunpack.c.l.b16 %v705
        %v746 = vunpack.c.l.b16 %v706
        %v747 = vunpack.c.l.b16 %v707
        %v748 = vunpack.c.l.b16 %v708
        %v749 = vunpack.c.l.b16 %v709
        %v750 = vunpack.c.l.b16 %v710
        %v751 = vunpack.c.l.b16 %v711
        %v752 = vunpack.c.l.b16 %v712
        %v753 = vunpack.c.l.b16 %v713
        %v754 = vpack.c.b16 %v739, %v738
        %v755 = vpack.c.b16 %v741, %v740
        %v756 = vpack.c.b16 %v743, %v742
        %v757 = vpack.c.b16 %v745, %v744
        %v758 = vpack.c.b16 %v747, %v746
        %v759 = vpack.c.b16 %v749, %v748
        %v760 = vpack.c.b16 %v751, %v750
        %v761 = vpack.c.b16 %v753, %v752
        %770 = vmatprep.subr.bf16.mxu0 0
        %771 = vmatpush1.bf16.msra.mxu0 %v754
        %772 = vmatprep.subr.bf16.mxu0 0
        %773 = vmatpush1.bf16.msra.mxu0 %v755
        %774 = vmatprep.subr.bf16.mxu0 0
        %775 = vmatpush1.bf16.msra.mxu0 %v756
        %776 = vmatprep.subr.bf16.mxu0 0
        %777 = vmatpush1.bf16.msra.mxu0 %v757
        %778 = vmatprep.subr.bf16.mxu0 0
        %779 = vmatpush1.bf16.msra.mxu0 %v758
        %780 = vmatprep.subr.bf16.mxu0 0
        %781 = vmatpush1.bf16.msra.mxu0 %v759
        %782 = vmatprep.subr.bf16.mxu0 0
        %783 = vmatpush1.bf16.msra.mxu0 %v760
        %784 = vmatprep.subr.bf16.mxu0 0
        %785 = vmatpush1.bf16.msra.mxu0 %v761
        %786 = vmatprep.subr.bf16.mxu0 0
        %787 = vmatpush1.bf16.msra.mxu0 0
        %788 = vmatprep.subr.bf16.mxu0 0
        %789 = vmatpush1.bf16.msra.mxu0 0
        %790 = vmatprep.subr.bf16.mxu0 0
        %791 = vmatpush1.bf16.msra.mxu0 0
        %792 = vmatprep.subr.bf16.mxu0 0
        %793 = vmatpush1.bf16.msra.mxu0 0
        %794 = vmatprep.subr.bf16.mxu0 0
        %795 = vmatpush1.bf16.msra.mxu0 0
        %796 = vmatprep.subr.bf16.mxu0 0
        %797 = vmatpush1.bf16.msra.mxu0 0
        %798 = vmatprep.subr.bf16.mxu0 0
        %799 = vmatpush1.bf16.msra.mxu0 0
        %800 = vmatprep.subr.bf16.mxu0 0
        %801 = vmatpush1.bf16.msra.mxu0 0
        %802 = vmatprep.mubr.bf16.mxu0 0
        %803 = vmatmul.mubr.bf16.gmra.mrb[0].mxu0 %v720
        %v804 = vpop.f32.mrb[0].mxu0
        %v805 = vadd.f32 0.0, %v804
        %v806 = vpop.f32.mrb[0].mxu0
        %v807 = vpop.f32.mrb[0].mxu0
        %v808 = vadd.f32 0.0, %v807
        %v809 = vpop.f32.mrb[0].mxu0
        %810 = vdwg.mxu0
        %v811 = vadd.f32 %v690, %v805
        %v812 = vadd.f32 %v693, %v808
        %v813 = vld [vmem:[#allocation8] sm:$0xf]
        %v814 = vld [vmem:[#allocation8 + $0x4] sm:$0xf]
        %v815 = vld [vmem:[#allocation8 + $0x8] sm:$0xf]
        %v816 = vld [vmem:[#allocation8 + $0xc] sm:$0xf]
        %v817 = vld [vmem:[#allocation8 + $0x10] sm:$0xf]
        %v818 = vld [vmem:[#allocation8 + $0x14] sm:$0xf]
        %v819 = vld [vmem:[#allocation8 + $0x18] sm:$0xf]
        %v820 = vld [vmem:[#allocation8 + $0x1c] sm:$0xf]
        %v821 = vld [vmem:[#allocation8 + $0x20] sm:$0xf]
        %v822 = vld [vmem:[#allocation8 + $0x24] sm:$0xf]
        %v823 = vld [vmem:[#allocation8 + $0x28] sm:$0xf]
        %v824 = vld [vmem:[#allocation8 + $0x2c] sm:$0xf]
        %v825 = vld [vmem:[#allocation8 + $0x30] sm:$0xf]
        %v826 = vld [vmem:[#allocation8 + $0x34] sm:$0xf]
        %v827 = vld [vmem:[#allocation8 + $0x38] sm:$0xf]
        %v828 = vld [vmem:[#allocation8 + $0x3c] sm:$0xf]
        %v829 = vld [vmem:[%s6] sm:$0x1]
        %v831 = vlaneseq
        %v832 = vshrl.u32 %v831, 7
        %v833 = vsub.s32 0, %v832
        %v834 = vrot.slane %v829, %v833
        %v852 = vunpack.c.l.b16 %v813
        %v853 = vunpack.c.l.b16 %v814
        %v854 = vunpack.c.l.b16 %v815
        %v855 = vunpack.c.l.b16 %v816
        %v856 = vunpack.c.l.b16 %v817
        %v857 = vunpack.c.l.b16 %v818
        %v858 = vunpack.c.l.b16 %v819
        %v859 = vunpack.c.l.b16 %v820
        %v860 = vunpack.c.l.b16 %v821
        %v861 = vunpack.c.l.b16 %v822
        %v862 = vunpack.c.l.b16 %v823
        %v863 = vunpack.c.l.b16 %v824
        %v864 = vunpack.c.l.b16 %v825
        %v865 = vunpack.c.l.b16 %v826
        %v866 = vunpack.c.l.b16 %v827
        %v867 = vunpack.c.l.b16 %v828
        %v868 = vpack.c.b16 %v853, %v852
        %v869 = vpack.c.b16 %v855, %v854
        %v870 = vpack.c.b16 %v857, %v856
        %v871 = vpack.c.b16 %v859, %v858
        %v872 = vpack.c.b16 %v861, %v860
        %v873 = vpack.c.b16 %v863, %v862
        %v874 = vpack.c.b16 %v865, %v864
        %v875 = vpack.c.b16 %v867, %v866
        %884 = vmatprep.subr.bf16.mxu0 0
        %885 = vmatpush1.bf16.msra.mxu0 %v868
        %886 = vmatprep.subr.bf16.mxu0 0
        %887 = vmatpush1.bf16.msra.mxu0 %v869
        %888 = vmatprep.subr.bf16.mxu0 0
        %889 = vmatpush1.bf16.msra.mxu0 %v870
        %890 = vmatprep.subr.bf16.mxu0 0
        %891 = vmatpush1.bf16.msra.mxu0 %v871
        %892 = vmatprep.subr.bf16.mxu0 0
        %893 = vmatpush1.bf16.msra.mxu0 %v872
        %894 = vmatprep.subr.bf16.mxu0 0
        %895 = vmatpush1.bf16.msra.mxu0 %v873
        %896 = vmatprep.subr.bf16.mxu0 0
        %897 = vmatpush1.bf16.msra.mxu0 %v874
        %898 = vmatprep.subr.bf16.mxu0 0
        %899 = vmatpush1.bf16.msra.mxu0 %v875
        %900 = vmatprep.subr.bf16.mxu0 0
        %901 = vmatpush1.bf16.msra.mxu0 0
        %902 = vmatprep.subr.bf16.mxu0 0
        %903 = vmatpush1.bf16.msra.mxu0 0
        %904 = vmatprep.subr.bf16.mxu0 0
        %905 = vmatpush1.bf16.msra.mxu0 0
        %906 = vmatprep.subr.bf16.mxu0 0
        %907 = vmatpush1.bf16.msra.mxu0 0
        %908 = vmatprep.subr.bf16.mxu0 0
        %909 = vmatpush1.bf16.msra.mxu0 0
        %910 = vmatprep.subr.bf16.mxu0 0
        %911 = vmatpush1.bf16.msra.mxu0 0
        %912 = vmatprep.subr.bf16.mxu0 0
        %913 = vmatpush1.bf16.msra.mxu0 0
        %914 = vmatprep.subr.bf16.mxu0 0
        %915 = vmatpush1.bf16.msra.mxu0 0
        %916 = vmatprep.mubr.bf16.mxu0 0
        %917 = vmatmul.mubr.bf16.gmra.mrb[0].mxu0 %v720
        %v918 = vpop.f32.mrb[0].mxu0
        %v919 = vadd.f32 %v834, %v918
        %v920 = vpop.f32.mrb[0].mxu0
        %v921 = vpop.f32.mrb[0].mxu0
        %v922 = vadd.f32 %v834, %v921
        %v923 = vpop.f32.mrb[0].mxu0
        %924 = vdwg.mxu0
        %v925 = vld [vmem:[%s2] sm:$0x1]
        %v927 = vlaneseq
        %v928 = vshrl.u32 %v927, 7
        %v929 = vsub.s32 0, %v928
        %v930 = vrot.slane %v925, %v929
        %v932 = vadd.f32 %v811, %v930
        %v933 = vadd.f32 %v812, %v930
        %v934 = vmax.f32 %v932, 0.0
        %v935 = vmax.f32 %v933, 0.0
        %v936 = vpack.c.bf16 %v935, %v934
        %937 = vst [vmem:[#allocation2] sm:$0xff] 0
        %938 = vst [vmem:[#allocation2 + $0x8] sm:$0xff] %v936
        %v939 = vld [vmem:[#allocation2] sm:$0x80]
        %v940 = vld [vmem:[#allocation2 + $0x8] sm:$0x7f]
        %v941 = vld [vmem:[#allocation6] sm:$0xf]
        %v942 = vld [vmem:[#allocation6 + $0x4] sm:$0xf]
        %v943 = vld [vmem:[#allocation6 + $0x8] sm:$0xf]
        %v944 = vld [vmem:[#allocation6 + $0xc] sm:$0xf]
        %v945 = vld [vmem:[#allocation6 + $0x10] sm:$0xf]
        %v946 = vld [vmem:[#allocation6 + $0x14] sm:$0xf]
        %v947 = vld [vmem:[#allocation6 + $0x18] sm:$0xf]
        %v948 = vld [vmem:[#allocation6 + $0x1c] sm:$0xf]
        %v949 = vld [vmem:[#allocation6 + $0x20] sm:$0xf]
        %v950 = vld [vmem:[#allocation6 + $0x24] sm:$0xf]
        %v951 = vld [vmem:[#allocation6 + $0x28] sm:$0xf]
        %v952 = vld [vmem:[#allocation6 + $0x2c] sm:$0xf]
        %v953 = vld [vmem:[#allocation6 + $0x30] sm:$0xf]
        %v954 = vld [vmem:[#allocation6 + $0x34] sm:$0xf]
        %v955 = vld [vmem:[#allocation6 + $0x38] sm:$0xf]
        %v956 = vld [vmem:[#allocation6 + $0x3c] sm:$0xf]
        %v957 = vld [vmem:[#allocation2 + $0x8] sm:$0xff]
        %s958 = scalar_lea.vmem [#allocation6], 64
        %v959 = vld [vmem:[%s958] sm:$0xf]
        %v960 = vld [vmem:[%s958 + $0x4] sm:$0xf]
        %v961 = vld [vmem:[%s958 + $0x8] sm:$0xf]
        %v962 = vld [vmem:[%s958 + $0xc] sm:$0xf]
        %v963 = vld [vmem:[%s958 + $0x10] sm:$0xf]
        %v964 = vld [vmem:[%s958 + $0x14] sm:$0xf]
        %v965 = vld [vmem:[%s958 + $0x18] sm:$0xf]
        %v966 = vld [vmem:[%s958 + $0x1c] sm:$0xf]
        %v967 = vld [vmem:[%s958 + $0x20] sm:$0xf]
        %v968 = vld [vmem:[%s958 + $0x24] sm:$0xf]
        %v969 = vld [vmem:[%s958 + $0x28] sm:$0xf]
        %v970 = vld [vmem:[%s958 + $0x2c] sm:$0xf]
        %v971 = vld [vmem:[%s958 + $0x30] sm:$0xf]
        %v972 = vld [vmem:[%s958 + $0x34] sm:$0xf]
        %v973 = vld [vmem:[%s958 + $0x38] sm:$0xf]
        %v974 = vld [vmem:[%s958 + $0x3c] sm:$0xf]
        %vm975 = vsmask.f32 256
        %v977 = vshrl.u32 %v939, 16
        %v979 = vrot.slane %v977, 7
        %v981 = vshrl.u32 %v957, 16
        %v983 = vrot.slane %v981, 7
        %v984 = vshll.u32 %v957, 16
        %v986 = vor.u32 %v983, %v984
        %v987 = vsel %vm975, %v979, %v986
        %v1005 = vunpack.c.l.b16 %v959
        %v1006 = vunpack.c.l.b16 %v960
        %v1007 = vunpack.c.l.b16 %v961
        %v1008 = vunpack.c.l.b16 %v962
        %v1009 = vunpack.c.l.b16 %v963
        %v1010 = vunpack.c.l.b16 %v964
        %v1011 = vunpack.c.l.b16 %v965
        %v1012 = vunpack.c.l.b16 %v966
        %v1013 = vunpack.c.l.b16 %v967
        %v1014 = vunpack.c.l.b16 %v968
        %v1015 = vunpack.c.l.b16 %v969
        %v1016 = vunpack.c.l.b16 %v970
        %v1017 = vunpack.c.l.b16 %v971
        %v1018 = vunpack.c.l.b16 %v972
        %v1019 = vunpack.c.l.b16 %v973
        %v1020 = vunpack.c.l.b16 %v974
        %v1021 = vpack.c.b16 %v1006, %v1005
        %v1022 = vpack.c.b16 %v1008, %v1007
        %v1023 = vpack.c.b16 %v1010, %v1009
        %v1024 = vpack.c.b16 %v1012, %v1011
        %v1025 = vpack.c.b16 %v1014, %v1013
        %v1026 = vpack.c.b16 %v1016, %v1015
        %v1027 = vpack.c.b16 %v1018, %v1017
        %v1028 = vpack.c.b16 %v1020, %v1019
        %1037 = vmatprep.subr.bf16.mxu0 0
        %1038 = vmatpush1.bf16.msra.mxu0 %v1021
        %1039 = vmatprep.subr.bf16.mxu0 0
        %1040 = vmatpush1.bf16.msra.mxu0 %v1022
        %1041 = vmatprep.subr.bf16.mxu0 0
        %1042 = vmatpush1.bf16.msra.mxu0 %v1023
        %1043 = vmatprep.subr.bf16.mxu0 0
        %1044 = vmatpush1.bf16.msra.mxu0 %v1024
        %1045 = vmatprep.subr.bf16.mxu0 0
        %1046 = vmatpush1.bf16.msra.mxu0 %v1025
        %1047 = vmatprep.subr.bf16.mxu0 0
        %1048 = vmatpush1.bf16.msra.mxu0 %v1026
        %1049 = vmatprep.subr.bf16.mxu0 0
        %1050 = vmatpush1.bf16.msra.mxu0 %v1027
        %1051 = vmatprep.subr.bf16.mxu0 0
        %1052 = vmatpush1.bf16.msra.mxu0 %v1028
        %1053 = vmatprep.subr.bf16.mxu0 0
        %1054 = vmatpush1.bf16.msra.mxu0 0
        %1055 = vmatprep.subr.bf16.mxu0 0
        %1056 = vmatpush1.bf16.msra.mxu0 0
        %1057 = vmatprep.subr.bf16.mxu0 0
        %1058 = vmatpush1.bf16.msra.mxu0 0
        %1059 = vmatprep.subr.bf16.mxu0 0
        %1060 = vmatpush1.bf16.msra.mxu0 0
        %1061 = vmatprep.subr.bf16.mxu0 0
        %1062 = vmatpush1.bf16.msra.mxu0 0
        %1063 = vmatprep.subr.bf16.mxu0 0
        %1064 = vmatpush1.bf16.msra.mxu0 0
        %1065 = vmatprep.subr.bf16.mxu0 0
        %1066 = vmatpush1.bf16.msra.mxu0 0
        %1067 = vmatprep.subr.bf16.mxu0 0
        %1068 = vmatpush1.bf16.msra.mxu0 0
        %1069 = vmatprep.mubr.bf16.mxu0 0
        %1070 = vmatmul.mubr.bf16.gmra.mrb[0].mxu0 %v987
        %v1071 = vpop.f32.mrb[0].mxu0
        %v1072 = vadd.f32 0.0, %v1071
        %v1073 = vpop.f32.mrb[0].mxu0
        %v1074 = vpop.f32.mrb[0].mxu0
        %v1075 = vadd.f32 0.0, %v1074
        %v1076 = vpop.f32.mrb[0].mxu0
        %1077 = vdwg.mxu0
        %vm1080 = vcmask 1040384
        %v1081 = vrot.slane %v939, 7
        %v1082 = vrot.slane %v940, 7
        %v1083 = vsel %vm1080, %v1081, %v1082
        %v1101 = vunpack.c.l.b16 %v941
        %v1102 = vunpack.c.l.b16 %v942
        %v1103 = vunpack.c.l.b16 %v943
        %v1104 = vunpack.c.l.b16 %v944
        %v1105 = vunpack.c.l.b16 %v945
        %v1106 = vunpack.c.l.b16 %v946
        %v1107 = vunpack.c.l.b16 %v947
        %v1108 = vunpack.c.l.b16 %v948
        %v1109 = vunpack.c.l.b16 %v949
        %v1110 = vunpack.c.l.b16 %v950
        %v1111 = vunpack.c.l.b16 %v951
        %v1112 = vunpack.c.l.b16 %v952
        %v1113 = vunpack.c.l.b16 %v953
        %v1114 = vunpack.c.l.b16 %v954
        %v1115 = vunpack.c.l.b16 %v955
        %v1116 = vunpack.c.l.b16 %v956
        %v1117 = vpack.c.b16 %v1102, %v1101
        %v1118 = vpack.c.b16 %v1104, %v1103
        %v1119 = vpack.c.b16 %v1106, %v1105
        %v1120 = vpack.c.b16 %v1108, %v1107
        %v1121 = vpack.c.b16 %v1110, %v1109
        %v1122 = vpack.c.b16 %v1112, %v1111
        %v1123 = vpack.c.b16 %v1114, %v1113
        %v1124 = vpack.c.b16 %v1116, %v1115
        %1133 = vmatprep.subr.bf16.mxu0 0
        %1134 = vmatpush1.bf16.msra.mxu0 %v1117
        %1135 = vmatprep.subr.bf16.mxu0 0
        %1136 = vmatpush1.bf16.msra.mxu0 %v1118
        %1137 = vmatprep.subr.bf16.mxu0 0
        %1138 = vmatpush1.bf16.msra.mxu0 %v1119
        %1139 = vmatprep.subr.bf16.mxu0 0
        %1140 = vmatpush1.bf16.msra.mxu0 %v1120
        %1141 = vmatprep.subr.bf16.mxu0 0
        %1142 = vmatpush1.bf16.msra.mxu0 %v1121
        %1143 = vmatprep.subr.bf16.mxu0 0
        %1144 = vmatpush1.bf16.msra.mxu0 %v1122
        %1145 = vmatprep.subr.bf16.mxu0 0
        %1146 = vmatpush1.bf16.msra.mxu0 %v1123
        %1147 = vmatprep.subr.bf16.mxu0 0
        %1148 = vmatpush1.bf16.msra.mxu0 %v1124
        %1149 = vmatprep.subr.bf16.mxu0 0
        %1150 = vmatpush1.bf16.msra.mxu0 0
        %1151 = vmatprep.subr.bf16.mxu0 0
        %1152 = vmatpush1.bf16.msra.mxu0 0
        %1153 = vmatprep.subr.bf16.mxu0 0
        %1154 = vmatpush1.bf16.msra.mxu0 0
        %1155 = vmatprep.subr.bf16.mxu0 0
        %1156 = vmatpush1.bf16.msra.mxu0 0
        %1157 = vmatprep.subr.bf16.mxu0 0
        %1158 = vmatpush1.bf16.msra.mxu0 0
        %1159 = vmatprep.subr.bf16.mxu0 0
        %1160 = vmatpush1.bf16.msra.mxu0 0
        %1161 = vmatprep.subr.bf16.mxu0 0
        %1162 = vmatpush1.bf16.msra.mxu0 0
        %1163 = vmatprep.subr.bf16.mxu0 0
        %1164 = vmatpush1.bf16.msra.mxu0 0
        %1165 = vmatprep.mubr.bf16.mxu0 0
        %1166 = vmatmul.mubr.bf16.gmra.mrb[0].mxu0 %v1083
        %v1167 = vpop.f32.mrb[0].mxu0
        %v1168 = vadd.f32 %v1072, %v1167
        %v1169 = vpop.f32.mrb[0].mxu0
        %v1170 = vpop.f32.mrb[0].mxu0
        %v1171 = vadd.f32 %v1075, %v1170
        %v1172 = vpop.f32.mrb[0].mxu0
        %1173 = vdwg.mxu0
        %s1174 = scalar_lea.vmem [#allocation6], 128
        %v1175 = vld [vmem:[%s1174] sm:$0xf]
        %v1176 = vld [vmem:[%s1174 + $0x4] sm:$0xf]
        %v1177 = vld [vmem:[%s1174 + $0x8] sm:$0xf]
        %v1178 = vld [vmem:[%s1174 + $0xc] sm:$0xf]
        %v1179 = vld [vmem:[%s1174 + $0x10] sm:$0xf]
        %v1180 = vld [vmem:[%s1174 + $0x14] sm:$0xf]
        %v1181 = vld [vmem:[%s1174 + $0x18] sm:$0xf]
        %v1182 = vld [vmem:[%s1174 + $0x1c] sm:$0xf]
        %v1183 = vld [vmem:[%s1174 + $0x20] sm:$0xf]
        %v1184 = vld [vmem:[%s1174 + $0x24] sm:$0xf]
        %v1185 = vld [vmem:[%s1174 + $0x28] sm:$0xf]
        %v1186 = vld [vmem:[%s1174 + $0x2c] sm:$0xf]
        %v1187 = vld [vmem:[%s1174 + $0x30] sm:$0xf]
        %v1188 = vld [vmem:[%s1174 + $0x34] sm:$0xf]
        %v1189 = vld [vmem:[%s1174 + $0x38] sm:$0xf]
        %v1190 = vld [vmem:[%s1174 + $0x3c] sm:$0xf]
        %v1207 = vunpack.c.l.b16 %v1175
        %v1208 = vunpack.c.l.b16 %v1176
        %v1209 = vunpack.c.l.b16 %v1177
        %v1210 = vunpack.c.l.b16 %v1178
        %v1211 = vunpack.c.l.b16 %v1179
        %v1212 = vunpack.c.l.b16 %v1180
        %v1213 = vunpack.c.l.b16 %v1181
        %v1214 = vunpack.c.l.b16 %v1182
        %v1215 = vunpack.c.l.b16 %v1183
        %v1216 = vunpack.c.l.b16 %v1184
        %v1217 = vunpack.c.l.b16 %v1185
        %v1218 = vunpack.c.l.b16 %v1186
        %v1219 = vunpack.c.l.b16 %v1187
        %v1220 = vunpack.c.l.b16 %v1188
        %v1221 = vunpack.c.l.b16 %v1189
        %v1222 = vunpack.c.l.b16 %v1190
        %v1223 = vpack.c.b16 %v1208, %v1207
        %v1224 = vpack.c.b16 %v1210, %v1209
        %v1225 = vpack.c.b16 %v1212, %v1211
        %v1226 = vpack.c.b16 %v1214, %v1213
        %v1227 = vpack.c.b16 %v1216, %v1215
        %v1228 = vpack.c.b16 %v1218, %v1217
        %v1229 = vpack.c.b16 %v1220, %v1219
        %v1230 = vpack.c.b16 %v1222, %v1221
        %1239 = vmatprep.subr.bf16.mxu0 0
        %1240 = vmatpush1.bf16.msra.mxu0 %v1223
        %1241 = vmatprep.subr.bf16.mxu0 0
        %1242 = vmatpush1.bf16.msra.mxu0 %v1224
        %1243 = vmatprep.subr.bf16.mxu0 0
        %1244 = vmatpush1.bf16.msra.mxu0 %v1225
        %1245 = vmatprep.subr.bf16.mxu0 0
        %1246 = vmatpush1.bf16.msra.mxu0 %v1226
        %1247 = vmatprep.subr.bf16.mxu0 0
        %1248 = vmatpush1.bf16.msra.mxu0 %v1227
        %1249 = vmatprep.subr.bf16.mxu0 0
        %1250 = vmatpush1.bf16.msra.mxu0 %v1228
        %1251 = vmatprep.subr.bf16.mxu0 0
        %1252 = vmatpush1.bf16.msra.mxu0 %v1229
        %1253 = vmatprep.subr.bf16.mxu0 0
        %1254 = vmatpush1.bf16.msra.mxu0 %v1230
        %1255 = vmatprep.subr.bf16.mxu0 0
        %1256 = vmatpush1.bf16.msra.mxu0 0
        %1257 = vmatprep.subr.bf16.mxu0 0
        %1258 = vmatpush1.bf16.msra.mxu0 0
        %1259 = vmatprep.subr.bf16.mxu0 0
        %1260 = vmatpush1.bf16.msra.mxu0 0
        %1261 = vmatprep.subr.bf16.mxu0 0
        %1262 = vmatpush1.bf16.msra.mxu0 0
        %1263 = vmatprep.subr.bf16.mxu0 0
        %1264 = vmatpush1.bf16.msra.mxu0 0
        %1265 = vmatprep.subr.bf16.mxu0 0
        %1266 = vmatpush1.bf16.msra.mxu0 0
        %1267 = vmatprep.subr.bf16.mxu0 0
        %1268 = vmatpush1.bf16.msra.mxu0 0
        %1269 = vmatprep.subr.bf16.mxu0 0
        %1270 = vmatpush1.bf16.msra.mxu0 0
        %1271 = vmatprep.mubr.bf16.mxu0 0
        %1272 = vmatmul.mubr.bf16.gmra.mrb[0].mxu0 %v957
        %v1273 = vpop.f32.mrb[0].mxu0
        %v1274 = vadd.f32 0.0, %v1273
        %v1275 = vpop.f32.mrb[0].mxu0
        %v1276 = vpop.f32.mrb[0].mxu0
        %v1277 = vadd.f32 0.0, %v1276
        %v1278 = vpop.f32.mrb[0].mxu0
        %1279 = vdwg.mxu0
        %v1280 = vadd.f32 %v1168, %v1274
        %v1281 = vadd.f32 %v1171, %v1277
        %v1282 = vld [vmem:[%s4] sm:$0x1]
        %v1284 = vlaneseq
        %v1285 = vshrl.u32 %v1284, 7
        %v1286 = vsub.s32 0, %v1285
        %v1287 = vrot.slane %v1282, %v1286
        %v1289 = vadd.f32 %v1280, %v1287
        %v1290 = vadd.f32 %v1281, %v1287
        %v1291 = vmax.f32 %v1289, 0.0
        %v1292 = vmax.f32 %v1290, 0.0
        %v1293 = vpack.c.bf16 %v1292, %v1291
        %v1294 = vld [vmem:[#allocation9] sm:$0xff]
        %v1295 = vld [vmem:[#allocation9 + $0x8] sm:$0xff]
        %v1296 = vld [vmem:[#allocation9 + $0x10] sm:$0xff]
        %v1297 = vld [vmem:[#allocation9 + $0x18] sm:$0xff]
        %v1298 = vld [vmem:[#allocation9 + $0x20] sm:$0xff]
        %v1299 = vld [vmem:[#allocation9 + $0x28] sm:$0xff]
        %v1300 = vld [vmem:[#allocation9 + $0x30] sm:$0xff]
        %v1301 = vld [vmem:[#allocation9 + $0x38] sm:$0xff]
        %v1302 = vld [vmem:[#allocation9 + $0x40] sm:$0xff]
        %v1303 = vld [vmem:[#allocation9 + $0x48] sm:$0xff]
        %v1304 = vld [vmem:[#allocation9 + $0x50] sm:$0xff]
        %v1305 = vld [vmem:[#allocation9 + $0x58] sm:$0xff]
        %v1306 = vld [vmem:[#allocation9 + $0x60] sm:$0xff]
        %v1307 = vld [vmem:[#allocation9 + $0x68] sm:$0xff]
        %v1308 = vld [vmem:[#allocation9 + $0x70] sm:$0xff]
        %v1309 = vld [vmem:[#allocation9 + $0x78] sm:$0xff]
        %v1310 = vld [vmem:[#allocation9 + $0x80] sm:$0xff]
        %v1311 = vld [vmem:[#allocation9 + $0x88] sm:$0xff]
        %v1312 = vld [vmem:[#allocation9 + $0x90] sm:$0xff]
        %v1313 = vld [vmem:[#allocation9 + $0x98] sm:$0xff]
        %v1314 = vld [vmem:[#allocation9 + $0xa0] sm:$0xff]
        %v1315 = vld [vmem:[#allocation9 + $0xa8] sm:$0xff]
        %v1316 = vld [vmem:[#allocation9 + $0xb0] sm:$0xff]
        %v1317 = vld [vmem:[#allocation9 + $0xb8] sm:$0xff]
        %v1318 = vld [vmem:[#allocation9 + $0xc0] sm:$0xff]
        %v1319 = vld [vmem:[#allocation9 + $0xc8] sm:$0xff]
        %v1320 = vld [vmem:[#allocation9 + $0xd0] sm:$0xff]
        %v1321 = vld [vmem:[#allocation9 + $0xd8] sm:$0xff]
        %v1322 = vld [vmem:[#allocation9 + $0xe0] sm:$0xff]
        %v1323 = vld [vmem:[#allocation9 + $0xe8] sm:$0xff]
        %v1324 = vld [vmem:[#allocation9 + $0xf0] sm:$0xff]
        %v1325 = vld [vmem:[#allocation9 + $0xf8] sm:$0xff]
        %v1326 = vld [vmem:[#allocation9 + $0x100] sm:$0xff]
        %v1327 = vld [vmem:[#allocation9 + $0x108] sm:$0xff]
        %v1328 = vld [vmem:[#allocation9 + $0x110] sm:$0xff]
        %v1329 = vld [vmem:[#allocation9 + $0x118] sm:$0xff]
        %v1330 = vld [vmem:[#allocation9 + $0x120] sm:$0xff]
        %v1331 = vld [vmem:[#allocation9 + $0x128] sm:$0xff]
        %v1332 = vld [vmem:[#allocation9 + $0x130] sm:$0xff]
        %v1333 = vld [vmem:[#allocation9 + $0x138] sm:$0xff]
        %v1334 = vld [vmem:[#allocation9 + $0x140] sm:$0xff]
        %v1335 = vld [vmem:[#allocation9 + $0x148] sm:$0xff]
        %v1336 = vld [vmem:[#allocation9 + $0x150] sm:$0xff]
        %v1337 = vld [vmem:[#allocation9 + $0x158] sm:$0xff]
        %v1338 = vld [vmem:[#allocation9 + $0x160] sm:$0xff]
        %v1339 = vld [vmem:[#allocation9 + $0x168] sm:$0xff]
        %v1340 = vld [vmem:[#allocation9 + $0x170] sm:$0xff]
        %v1341 = vld [vmem:[#allocation9 + $0x178] sm:$0xff]
        %v1342 = vld [vmem:[#allocation9 + $0x180] sm:$0xff]
        %v1343 = vld [vmem:[#allocation9 + $0x188] sm:$0xff]
        %v1344 = vld [vmem:[#allocation9 + $0x190] sm:$0xff]
        %v1345 = vld [vmem:[#allocation9 + $0x198] sm:$0xff]
        %v1346 = vld [vmem:[#allocation9 + $0x1a0] sm:$0xff]
        %v1347 = vld [vmem:[#allocation9 + $0x1a8] sm:$0xff]
        %v1348 = vld [vmem:[#allocation9 + $0x1b0] sm:$0xff]
        %v1349 = vld [vmem:[#allocation9 + $0x1b8] sm:$0xff]
        %v1350 = vld [vmem:[#allocation9 + $0x1c0] sm:$0xff]
        %v1351 = vld [vmem:[#allocation9 + $0x1c8] sm:$0xff]
        %v1352 = vld [vmem:[#allocation9 + $0x1d0] sm:$0xff]
        %v1353 = vld [vmem:[#allocation9 + $0x1d8] sm:$0xff]
        %v1354 = vld [vmem:[#allocation9 + $0x1e0] sm:$0xff]
        %v1355 = vld [vmem:[#allocation9 + $0x1e8] sm:$0xff]
        %v1356 = vld [vmem:[#allocation9 + $0x1f0] sm:$0xff]
        %v1357 = vld [vmem:[#allocation9 + $0x1f8] sm:$0xff]
        %v1358 = vld [vmem:[#allocation9 + $0x200] sm:$0xff]
        %v1359 = vld [vmem:[#allocation9 + $0x208] sm:$0xff]
        %v1360 = vld [vmem:[#allocation9 + $0x210] sm:$0xff]
        %v1361 = vld [vmem:[#allocation9 + $0x218] sm:$0xff]
        %v1362 = vld [vmem:[#allocation9 + $0x220] sm:$0xff]
        %v1363 = vld [vmem:[#allocation9 + $0x228] sm:$0xff]
        %v1364 = vld [vmem:[#allocation9 + $0x230] sm:$0xff]
        %v1365 = vld [vmem:[#allocation9 + $0x238] sm:$0xff]
        %v1366 = vld [vmem:[#allocation9 + $0x240] sm:$0xff]
        %v1367 = vld [vmem:[#allocation9 + $0x248] sm:$0xff]
        %v1368 = vld [vmem:[#allocation9 + $0x250] sm:$0xff]
        %v1369 = vld [vmem:[#allocation9 + $0x258] sm:$0xff]
        %v1370 = vld [vmem:[#allocation9 + $0x260] sm:$0xff]
        %v1371 = vld [vmem:[#allocation9 + $0x268] sm:$0xff]
        %v1372 = vld [vmem:[#allocation9 + $0x270] sm:$0xff]
        %v1373 = vld [vmem:[#allocation9 + $0x278] sm:$0xff]
        %v1374 = vld [vmem:[#allocation9 + $0x280] sm:$0xff]
        %v1375 = vld [vmem:[#allocation9 + $0x288] sm:$0xff]
        %v1376 = vld [vmem:[#allocation9 + $0x290] sm:$0xff]
        %v1377 = vld [vmem:[#allocation9 + $0x298] sm:$0xff]
        %v1378 = vld [vmem:[#allocation9 + $0x2a0] sm:$0xff]
        %v1379 = vld [vmem:[#allocation9 + $0x2a8] sm:$0xff]
        %v1380 = vld [vmem:[#allocation9 + $0x2b0] sm:$0xff]
        %v1381 = vld [vmem:[#allocation9 + $0x2b8] sm:$0xff]
        %v1382 = vld [vmem:[#allocation9 + $0x2c0] sm:$0xff]
        %v1383 = vld [vmem:[#allocation9 + $0x2c8] sm:$0xff]
        %v1384 = vld [vmem:[#allocation9 + $0x2d0] sm:$0xff]
        %v1385 = vld [vmem:[#allocation9 + $0x2d8] sm:$0xff]
        %v1386 = vld [vmem:[#allocation9 + $0x2e0] sm:$0xff]
        %v1387 = vld [vmem:[#allocation9 + $0x2e8] sm:$0xff]
        %v1388 = vld [vmem:[#allocation9 + $0x2f0] sm:$0xff]
        %v1389 = vld [vmem:[#allocation9 + $0x2f8] sm:$0xff]
        %v1390 = vld [vmem:[%s8] sm:$0xff]
        %v1391 = vld [vmem:[%s8 + $0x8] sm:$0xf]
        %v1394 = vlaneseq
        %v1395 = vshrl.u32 %v1394, 7
        %v1396 = vsub.s32 0, %v1395
        %v1397 = vrot.slane %v1390, %v1396
        %v1398 = vlaneseq
        %v1399 = vshrl.u32 %v1398, 7
        %v1400 = vsub.s32 1, %v1399
        %v1401 = vrot.slane %v1390, %v1400
        %v1402 = vlaneseq
        %v1403 = vshrl.u32 %v1402, 7
        %v1404 = vsub.s32 2, %v1403
        %v1405 = vrot.slane %v1390, %v1404
        %v1406 = vlaneseq
        %v1407 = vshrl.u32 %v1406, 7
        %v1408 = vsub.s32 3, %v1407
        %v1409 = vrot.slane %v1390, %v1408
        %v1410 = vlaneseq
        %v1411 = vshrl.u32 %v1410, 7
        %v1412 = vsub.s32 4, %v1411
        %v1413 = vrot.slane %v1390, %v1412
        %v1414 = vlaneseq
        %v1415 = vshrl.u32 %v1414, 7
        %v1416 = vsub.s32 5, %v1415
        %v1417 = vrot.slane %v1390, %v1416
        %v1418 = vlaneseq
        %v1419 = vshrl.u32 %v1418, 7
        %v1420 = vsub.s32 6, %v1419
        %v1421 = vrot.slane %v1390, %v1420
        %v1422 = vlaneseq
        %v1423 = vshrl.u32 %v1422, 7
        %v1424 = vsub.s32 7, %v1423
        %v1425 = vrot.slane %v1390, %v1424
        %v1426 = vlaneseq
        %v1427 = vshrl.u32 %v1426, 7
        %v1428 = vsub.s32 0, %v1427
        %v1429 = vrot.slane %v1391, %v1428
        %v1430 = vlaneseq
        %v1431 = vshrl.u32 %v1430, 7
        %v1432 = vsub.s32 1, %v1431
        %v1433 = vrot.slane %v1391, %v1432
        %v1434 = vlaneseq
        %v1435 = vshrl.u32 %v1434, 7
        %v1436 = vsub.s32 2, %v1435
        %v1437 = vrot.slane %v1391, %v1436
        %v1438 = vlaneseq
        %v1439 = vshrl.u32 %v1438, 7
        %v1440 = vsub.s32 3, %v1439
        %v1441 = vrot.slane %v1391, %v1440
        %v1550 = vunpack.c.l.b16 %v1294
        %v1551 = vunpack.c.h.b16 %v1294
        %v1552 = vunpack.c.l.b16 %v1295
        %v1553 = vunpack.c.h.b16 %v1295
        %v1554 = vunpack.c.l.b16 %v1296
        %v1555 = vunpack.c.h.b16 %v1296
        %v1556 = vunpack.c.l.b16 %v1297
        %v1557 = vunpack.c.h.b16 %v1297
        %v1558 = vunpack.c.l.b16 %v1298
        %v1559 = vunpack.c.h.b16 %v1298
        %v1560 = vunpack.c.l.b16 %v1299
        %v1561 = vunpack.c.h.b16 %v1299
        %v1562 = vunpack.c.l.b16 %v1300
        %v1563 = vunpack.c.h.b16 %v1300
        %v1564 = vunpack.c.l.b16 %v1301
        %v1565 = vunpack.c.h.b16 %v1301
        %v1566 = vunpack.c.l.b16 %v1302
        %v1567 = vunpack.c.h.b16 %v1302
        %v1568 = vunpack.c.l.b16 %v1303
        %v1569 = vunpack.c.h.b16 %v1303
        %v1570 = vunpack.c.l.b16 %v1304
        %v1571 = vunpack.c.h.b16 %v1304
        %v1572 = vunpack.c.l.b16 %v1305
        %v1573 = vunpack.c.h.b16 %v1305
        %v1574 = vunpack.c.l.b16 %v1306
        %v1575 = vunpack.c.h.b16 %v1306
        %v1576 = vunpack.c.l.b16 %v1307
        %v1577 = vunpack.c.h.b16 %v1307
        %v1578 = vunpack.c.l.b16 %v1308
        %v1579 = vunpack.c.h.b16 %v1308
        %v1580 = vunpack.c.l.b16 %v1309
        %v1581 = vunpack.c.h.b16 %v1309
        %v1582 = vunpack.c.l.b16 %v1310
        %v1583 = vunpack.c.h.b16 %v1310
        %v1584 = vunpack.c.l.b16 %v1311
        %v1585 = vunpack.c.h.b16 %v1311
        %v1586 = vunpack.c.l.b16 %v1312
        %v1587 = vunpack.c.h.b16 %v1312
        %v1588 = vunpack.c.l.b16 %v1313
        %v1589 = vunpack.c.h.b16 %v1313
        %v1590 = vunpack.c.l.b16 %v1314
        %v1591 = vunpack.c.h.b16 %v1314
        %v1592 = vunpack.c.l.b16 %v1315
        %v1593 = vunpack.c.h.b16 %v1315
        %v1594 = vunpack.c.l.b16 %v1316
        %v1595 = vunpack.c.h.b16 %v1316
        %v1596 = vunpack.c.l.b16 %v1317
        %v1597 = vunpack.c.h.b16 %v1317
        %v1598 = vunpack.c.l.b16 %v1318
        %v1599 = vunpack.c.h.b16 %v1318
        %v1600 = vunpack.c.l.b16 %v1319
        %v1601 = vunpack.c.h.b16 %v1319
        %v1602 = vunpack.c.l.b16 %v1320
        %v1603 = vunpack.c.h.b16 %v1320
        %v1604 = vunpack.c.l.b16 %v1321
        %v1605 = vunpack.c.h.b16 %v1321
        %v1606 = vunpack.c.l.b16 %v1322
        %v1607 = vunpack.c.h.b16 %v1322
        %v1608 = vunpack.c.l.b16 %v1323
        %v1609 = vunpack.c.h.b16 %v1323
        %v1610 = vunpack.c.l.b16 %v1324
        %v1611 = vunpack.c.h.b16 %v1324
        %v1612 = vunpack.c.l.b16 %v1325
        %v1613 = vunpack.c.h.b16 %v1325
        %v1614 = vunpack.c.l.b16 %v1326
        %v1615 = vunpack.c.h.b16 %v1326
        %v1616 = vunpack.c.l.b16 %v1327
        %v1617 = vunpack.c.h.b16 %v1327
        %v1618 = vunpack.c.l.b16 %v1328
        %v1619 = vunpack.c.h.b16 %v1328
        %v1620 = vunpack.c.l.b16 %v1329
        %v1621 = vunpack.c.h.b16 %v1329
        %v1622 = vunpack.c.l.b16 %v1330
        %v1623 = vunpack.c.h.b16 %v1330
        %v1624 = vunpack.c.l.b16 %v1331
        %v1625 = vunpack.c.h.b16 %v1331
        %v1626 = vunpack.c.l.b16 %v1332
        %v1627 = vunpack.c.h.b16 %v1332
        %v1628 = vunpack.c.l.b16 %v1333
        %v1629 = vunpack.c.h.b16 %v1333
        %v1630 = vunpack.c.l.b16 %v1334
        %v1631 = vunpack.c.h.b16 %v1334
        %v1632 = vunpack.c.l.b16 %v1335
        %v1633 = vunpack.c.h.b16 %v1335
        %v1634 = vunpack.c.l.b16 %v1336
        %v1635 = vunpack.c.h.b16 %v1336
        %v1636 = vunpack.c.l.b16 %v1337
        %v1637 = vunpack.c.h.b16 %v1337
        %v1638 = vunpack.c.l.b16 %v1338
        %v1639 = vunpack.c.h.b16 %v1338
        %v1640 = vunpack.c.l.b16 %v1339
        %v1641 = vunpack.c.h.b16 %v1339
        %v1642 = vunpack.c.l.b16 %v1340
        %v1643 = vunpack.c.h.b16 %v1340
        %v1644 = vunpack.c.l.b16 %v1341
        %v1645 = vunpack.c.h.b16 %v1341
        %v1646 = vunpack.c.l.b16 %v1342
        %v1647 = vunpack.c.h.b16 %v1342
        %v1648 = vunpack.c.l.b16 %v1343
        %v1649 = vunpack.c.h.b16 %v1343
        %v1650 = vunpack.c.l.b16 %v1344
        %v1651 = vunpack.c.h.b16 %v1344
        %v1652 = vunpack.c.l.b16 %v1345
        %v1653 = vunpack.c.h.b16 %v1345
        %v1654 = vunpack.c.l.b16 %v1346
        %v1655 = vunpack.c.h.b16 %v1346
        %v1656 = vunpack.c.l.b16 %v1347
        %v1657 = vunpack.c.h.b16 %v1347
        %v1658 = vunpack.c.l.b16 %v1348
        %v1659 = vunpack.c.h.b16 %v1348
        %v1660 = vunpack.c.l.b16 %v1349
        %v1661 = vunpack.c.h.b16 %v1349
        %v1662 = vunpack.c.l.b16 %v1350
        %v1663 = vunpack.c.h.b16 %v1350
        %v1664 = vunpack.c.l.b16 %v1351
        %v1665 = vunpack.c.h.b16 %v1351
        %v1666 = vunpack.c.l.b16 %v1352
        %v1667 = vunpack.c.h.b16 %v1352
        %v1668 = vunpack.c.l.b16 %v1353
        %v1669 = vunpack.c.h.b16 %v1353
        %v1670 = vunpack.c.l.b16 %v1354
        %v1671 = vunpack.c.h.b16 %v1354
        %v1672 = vunpack.c.l.b16 %v1355
        %v1673 = vunpack.c.h.b16 %v1355
        %v1674 = vunpack.c.l.b16 %v1356
        %v1675 = vunpack.c.h.b16 %v1356
        %v1676 = vunpack.c.l.b16 %v1357
        %v1677 = vunpack.c.h.b16 %v1357
        %v1678 = vunpack.c.l.b16 %v1358
        %v1679 = vunpack.c.h.b16 %v1358
        %v1680 = vunpack.c.l.b16 %v1359
        %v1681 = vunpack.c.h.b16 %v1359
        %v1682 = vunpack.c.l.b16 %v1360
        %v1683 = vunpack.c.h.b16 %v1360
        %v1684 = vunpack.c.l.b16 %v1361
        %v1685 = vunpack.c.h.b16 %v1361
        %v1686 = vunpack.c.l.b16 %v1362
        %v1687 = vunpack.c.h.b16 %v1362
        %v1688 = vunpack.c.l.b16 %v1363
        %v1689 = vunpack.c.h.b16 %v1363
        %v1690 = vunpack.c.l.b16 %v1364
        %v1691 = vunpack.c.h.b16 %v1364
        %v1692 = vunpack.c.l.b16 %v1365
        %v1693 = vunpack.c.h.b16 %v1365
        %v1694 = vunpack.c.l.b16 %v1366
        %v1695 = vunpack.c.h.b16 %v1366
        %v1696 = vunpack.c.l.b16 %v1367
        %v1697 = vunpack.c.h.b16 %v1367
        %v1698 = vunpack.c.l.b16 %v1368
        %v1699 = vunpack.c.h.b16 %v1368
        %v1700 = vunpack.c.l.b16 %v1369
        %v1701 = vunpack.c.h.b16 %v1369
        %v1702 = vunpack.c.l.b16 %v1370
        %v1703 = vunpack.c.h.b16 %v1370
        %v1704 = vunpack.c.l.b16 %v1371
        %v1705 = vunpack.c.h.b16 %v1371
        %v1706 = vunpack.c.l.b16 %v1372
        %v1707 = vunpack.c.h.b16 %v1372
        %v1708 = vunpack.c.l.b16 %v1373
        %v1709 = vunpack.c.h.b16 %v1373
        %v1710 = vunpack.c.l.b16 %v1374
        %v1711 = vunpack.c.h.b16 %v1374
        %v1712 = vunpack.c.l.b16 %v1375
        %v1713 = vunpack.c.h.b16 %v1375
        %v1714 = vunpack.c.l.b16 %v1376
        %v1715 = vunpack.c.h.b16 %v1376
        %v1716 = vunpack.c.l.b16 %v1377
        %v1717 = vunpack.c.h.b16 %v1377
        %v1718 = vunpack.c.l.b16 %v1378
        %v1719 = vunpack.c.h.b16 %v1378
        %v1720 = vunpack.c.l.b16 %v1379
        %v1721 = vunpack.c.h.b16 %v1379
        %v1722 = vunpack.c.l.b16 %v1380
        %v1723 = vunpack.c.h.b16 %v1380
        %v1724 = vunpack.c.l.b16 %v1381
        %v1725 = vunpack.c.h.b16 %v1381
        %v1726 = vunpack.c.l.b16 %v1382
        %v1727 = vunpack.c.h.b16 %v1382
        %v1728 = vunpack.c.l.b16 %v1383
        %v1729 = vunpack.c.h.b16 %v1383
        %v1730 = vunpack.c.l.b16 %v1384
        %v1731 = vunpack.c.h.b16 %v1384
        %v1732 = vunpack.c.l.b16 %v1385
        %v1733 = vunpack.c.h.b16 %v1385
        %v1734 = vunpack.c.l.b16 %v1386
        %v1735 = vunpack.c.h.b16 %v1386
        %v1736 = vunpack.c.l.b16 %v1387
        %v1737 = vunpack.c.h.b16 %v1387
        %v1738 = vunpack.c.l.b16 %v1388
        %v1739 = vunpack.c.h.b16 %v1388
        %v1740 = vunpack.c.l.b16 %v1389
        %v1741 = vunpack.c.h.b16 %v1389
        %v1742 = vpack.c.b16 %v1562, %v1550
        %v1743 = vpack.c.b16 %v1563, %v1551
        %v1744 = vpack.c.b16 %v1564, %v1552
        %v1745 = vpack.c.b16 %v1565, %v1553
        %v1746 = vpack.c.b16 %v1566, %v1554
        %v1747 = vpack.c.b16 %v1567, %v1555
        %v1748 = vpack.c.b16 %v1568, %v1556
        %v1749 = vpack.c.b16 %v1569, %v1557
        %v1750 = vpack.c.b16 %v1570, %v1558
        %v1751 = vpack.c.b16 %v1571, %v1559
        %v1752 = vpack.c.b16 %v1572, %v1560
        %v1753 = vpack.c.b16 %v1573, %v1561
        %v1754 = vpack.c.b16 %v1586, %v1574
        %v1755 = vpack.c.b16 %v1587, %v1575
        %v1756 = vpack.c.b16 %v1588, %v1576
        %v1757 = vpack.c.b16 %v1589, %v1577
        %v1758 = vpack.c.b16 %v1590, %v1578
        %v1759 = vpack.c.b16 %v1591, %v1579
        %v1760 = vpack.c.b16 %v1592, %v1580
        %v1761 = vpack.c.b16 %v1593, %v1581
        %v1762 = vpack.c.b16 %v1594, %v1582
        %v1763 = vpack.c.b16 %v1595, %v1583
        %v1764 = vpack.c.b16 %v1596, %v1584
        %v1765 = vpack.c.b16 %v1597, %v1585
        %v1766 = vpack.c.b16 %v1610, %v1598
        %v1767 = vpack.c.b16 %v1611, %v1599
        %v1768 = vpack.c.b16 %v1612, %v1600
        %v1769 = vpack.c.b16 %v1613, %v1601
        %v1770 = vpack.c.b16 %v1614, %v1602
        %v1771 = vpack.c.b16 %v1615, %v1603
        %v1772 = vpack.c.b16 %v1616, %v1604
        %v1773 = vpack.c.b16 %v1617, %v1605
        %v1774 = vpack.c.b16 %v1618, %v1606
        %v1775 = vpack.c.b16 %v1619, %v1607
        %v1776 = vpack.c.b16 %v1620, %v1608
        %v1777 = vpack.c.b16 %v1621, %v1609
        %v1778 = vpack.c.b16 %v1634, %v1622
        %v1779 = vpack.c.b16 %v1635, %v1623
        %v1780 = vpack.c.b16 %v1636, %v1624
        %v1781 = vpack.c.b16 %v1637, %v1625
        %v1782 = vpack.c.b16 %v1638, %v1626
        %v1783 = vpack.c.b16 %v1639, %v1627
        %v1784 = vpack.c.b16 %v1640, %v1628
        %v1785 = vpack.c.b16 %v1641, %v1629
        %v1786 = vpack.c.b16 %v1642, %v1630
        %v1787 = vpack.c.b16 %v1643, %v1631
        %v1788 = vpack.c.b16 %v1644, %v1632
        %v1789 = vpack.c.b16 %v1645, %v1633
        %v1790 = vpack.c.b16 %v1658, %v1646
        %v1791 = vpack.c.b16 %v1659, %v1647
        %v1792 = vpack.c.b16 %v1660, %v1648
        %v1793 = vpack.c.b16 %v1661, %v1649
        %v1794 = vpack.c.b16 %v1662, %v1650
        %v1795 = vpack.c.b16 %v1663, %v1651
        %v1796 = vpack.c.b16 %v1664, %v1652
        %v1797 = vpack.c.b16 %v1665, %v1653
        %v1798 = vpack.c.b16 %v1666, %v1654
        %v1799 = vpack.c.b16 %v1667, %v1655
        %v1800 = vpack.c.b16 %v1668, %v1656
        %v1801 = vpack.c.b16 %v1669, %v1657
        %v1802 = vpack.c.b16 %v1682, %v1670
        %v1803 = vpack.c.b16 %v1683, %v1671
        %v1804 = vpack.c.b16 %v1684, %v1672
        %v1805 = vpack.c.b16 %v1685, %v1673
        %v1806 = vpack.c.b16 %v1686, %v1674
        %v1807 = vpack.c.b16 %v1687, %v1675
        %v1808 = vpack.c.b16 %v1688, %v1676
        %v1809 = vpack.c.b16 %v1689, %v1677
        %v1810 = vpack.c.b16 %v1690, %v1678
        %v1811 = vpack.c.b16 %v1691, %v1679
        %v1812 = vpack.c.b16 %v1692, %v1680
        %v1813 = vpack.c.b16 %v1693, %v1681
        %v1814 = vpack.c.b16 %v1706, %v1694
        %v1815 = vpack.c.b16 %v1707, %v1695
        %v1816 = vpack.c.b16 %v1708, %v1696
        %v1817 = vpack.c.b16 %v1709, %v1697
        %v1818 = vpack.c.b16 %v1710, %v1698
        %v1819 = vpack.c.b16 %v1711, %v1699
        %v1820 = vpack.c.b16 %v1712, %v1700
        %v1821 = vpack.c.b16 %v1713, %v1701
        %v1822 = vpack.c.b16 %v1714, %v1702
        %v1823 = vpack.c.b16 %v1715, %v1703
        %v1824 = vpack.c.b16 %v1716, %v1704
        %v1825 = vpack.c.b16 %v1717, %v1705
        %v1826 = vpack.c.b16 %v1730, %v1718
        %v1827 = vpack.c.b16 %v1731, %v1719
        %v1828 = vpack.c.b16 %v1732, %v1720
        %v1829 = vpack.c.b16 %v1733, %v1721
        %v1830 = vpack.c.b16 %v1734, %v1722
        %v1831 = vpack.c.b16 %v1735, %v1723
        %v1832 = vpack.c.b16 %v1736, %v1724
        %v1833 = vpack.c.b16 %v1737, %v1725
        %v1834 = vpack.c.b16 %v1738, %v1726
        %v1835 = vpack.c.b16 %v1739, %v1727
        %v1836 = vpack.c.b16 %v1740, %v1728
        %v1837 = vpack.c.b16 %v1741, %v1729
        %1934 = vmatprep.subr.bf16.mxu0 %v1743
        %1935 = vmatpush1.bf16.msra.mxu0 %v1742
        %1936 = vmatprep.subr.bf16.mxu0 %v1755
        %1937 = vmatpush1.bf16.msra.mxu0 %v1754
        %1938 = vmatprep.subr.bf16.mxu0 %v1767
        %1939 = vmatpush1.bf16.msra.mxu0 %v1766
        %1940 = vmatprep.subr.bf16.mxu0 %v1779
        %1941 = vmatpush1.bf16.msra.mxu0 %v1778
        %1942 = vmatprep.subr.bf16.mxu0 %v1791
        %1943 = vmatpush1.bf16.msra.mxu0 %v1790
        %1944 = vmatprep.subr.bf16.mxu0 %v1803
        %1945 = vmatpush1.bf16.msra.mxu0 %v1802
        %1946 = vmatprep.subr.bf16.mxu0 %v1815
        %1947 = vmatpush1.bf16.msra.mxu0 %v1814
        %1948 = vmatprep.subr.bf16.mxu0 %v1827
        %1949 = vmatpush1.bf16.msra.mxu0 %v1826
        %1950 = vmatprep.subr.bf16.mxu0 0
        %1951 = vmatpush1.bf16.msra.mxu0 0
        %1952 = vmatprep.subr.bf16.mxu0 0
        %1953 = vmatpush1.bf16.msra.mxu0 0
        %1954 = vmatprep.subr.bf16.mxu0 0
        %1955 = vmatpush1.bf16.msra.mxu0 0
        %1956 = vmatprep.subr.bf16.mxu0 0
        %1957 = vmatpush1.bf16.msra.mxu0 0
        %1958 = vmatprep.subr.bf16.mxu0 0
        %1959 = vmatpush1.bf16.msra.mxu0 0
        %1960 = vmatprep.subr.bf16.mxu0 0
        %1961 = vmatpush1.bf16.msra.mxu0 0
        %1962 = vmatprep.subr.bf16.mxu0 0
        %1963 = vmatpush1.bf16.msra.mxu0 0
        %1964 = vmatprep.subr.bf16.mxu0 0
        %1965 = vmatpush1.bf16.msra.mxu0 0
        %1966 = vmatprep.mubr.bf16.mxu0 0
        %1967 = vmatmul.mubr.bf16.gmra.mrb[0].mxu0 %v1293
        %v1968 = vpop.f32.mrb[0].mxu0
        %v1969 = vadd.f32 %v1397, %v1968
        %v1970 = vpop.f32.mrb[0].mxu0
        %v1971 = vadd.f32 %v1401, %v1970
        %v1972 = vpop.f32.mrb[0].mxu0
        %v1973 = vadd.f32 %v1397, %v1972
        %v1974 = vpop.f32.mrb[0].mxu0
        %v1975 = vadd.f32 %v1401, %v1974
        %1976 = vdwg.mxu0
        %1977 = vmatprep.subr.bf16.mxu0 %v1745
        %1978 = vmatpush1.bf16.msra.mxu0 %v1744
        %1979 = vmatprep.subr.bf16.mxu0 %v1757
        %1980 = vmatpush1.bf16.msra.mxu0 %v1756
        %1981 = vmatprep.subr.bf16.mxu0 %v1769
        %1982 = vmatpush1.bf16.msra.mxu0 %v1768
        %1983 = vmatprep.subr.bf16.mxu0 %v1781
        %1984 = vmatpush1.bf16.msra.mxu0 %v1780
        %1985 = vmatprep.subr.bf16.mxu0 %v1793
        %1986 = vmatpush1.bf16.msra.mxu0 %v1792
        %1987 = vmatprep.subr.bf16.mxu0 %v1805
        %1988 = vmatpush1.bf16.msra.mxu0 %v1804
        %1989 = vmatprep.subr.bf16.mxu0 %v1817
        %1990 = vmatpush1.bf16.msra.mxu0 %v1816
        %1991 = vmatprep.subr.bf16.mxu0 %v1829
        %1992 = vmatpush1.bf16.msra.mxu0 %v1828
        %1993 = vmatprep.subr.bf16.mxu0 0
        %1994 = vmatpush1.bf16.msra.mxu0 0
        %1995 = vmatprep.subr.bf16.mxu0 0
        %1996 = vmatpush1.bf16.msra.mxu0 0
        %1997 = vmatprep.subr.bf16.mxu0 0
        %1998 = vmatpush1.bf16.msra.mxu0 0
        %1999 = vmatprep.subr.bf16.mxu0 0
        %2000 = vmatpush1.bf16.msra.mxu0 0
        %2001 = vmatprep.subr.bf16.mxu0 0
        %2002 = vmatpush1.bf16.msra.mxu0 0
        %2003 = vmatprep.subr.bf16.mxu0 0
        %2004 = vmatpush1.bf16.msra.mxu0 0
        %2005 = vmatprep.subr.bf16.mxu0 0
        %2006 = vmatpush1.bf16.msra.mxu0 0
        %2007 = vmatprep.subr.bf16.mxu0 0
        %2008 = vmatpush1.bf16.msra.mxu0 0
        %2009 = vmatprep.mubr.bf16.mxu0 0
        %2010 = vmatmul.mubr.bf16.gmra.mrb[0].mxu0 %v1293
        %v2011 = vpop.f32.mrb[0].mxu0
        %v2012 = vadd.f32 %v1405, %v2011
        %v2013 = vpop.f32.mrb[0].mxu0
        %v2014 = vadd.f32 %v1409, %v2013
        %v2015 = vpop.f32.mrb[0].mxu0
        %v2016 = vadd.f32 %v1405, %v2015
        %v2017 = vpop.f32.mrb[0].mxu0
        %v2018 = vadd.f32 %v1409, %v2017
        %2019 = vdwg.mxu0
        %2020 = vmatprep.subr.bf16.mxu0 %v1747
        %2021 = vmatpush1.bf16.msra.mxu0 %v1746
        %2022 = vmatprep.subr.bf16.mxu0 %v1759
        %2023 = vmatpush1.bf16.msra.mxu0 %v1758
        %2024 = vmatprep.subr.bf16.mxu0 %v1771
        %2025 = vmatpush1.bf16.msra.mxu0 %v1770
        %2026 = vmatprep.subr.bf16.mxu0 %v1783
        %2027 = vmatpush1.bf16.msra.mxu0 %v1782
        %2028 = vmatprep.subr.bf16.mxu0 %v1795
        %2029 = vmatpush1.bf16.msra.mxu0 %v1794
        %2030 = vmatprep.subr.bf16.mxu0 %v1807
        %2031 = vmatpush1.bf16.msra.mxu0 %v1806
        %2032 = vmatprep.subr.bf16.mxu0 %v1819
        %2033 = vmatpush1.bf16.msra.mxu0 %v1818
        %2034 = vmatprep.subr.bf16.mxu0 %v1831
        %2035 = vmatpush1.bf16.msra.mxu0 %v1830
        %2036 = vmatprep.subr.bf16.mxu0 0
        %2037 = vmatpush1.bf16.msra.mxu0 0
        %2038 = vmatprep.subr.bf16.mxu0 0
        %2039 = vmatpush1.bf16.msra.mxu0 0
        %2040 = vmatprep.subr.bf16.mxu0 0
        %2041 = vmatpush1.bf16.msra.mxu0 0
        %2042 = vmatprep.subr.bf16.mxu0 0
        %2043 = vmatpush1.bf16.msra.mxu0 0
        %2044 = vmatprep.subr.bf16.mxu0 0
        %2045 = vmatpush1.bf16.msra.mxu0 0
        %2046 = vmatprep.subr.bf16.mxu0 0
        %2047 = vmatpush1.bf16.msra.mxu0 0
        %2048 = vmatprep.subr.bf16.mxu0 0
        %2049 = vmatpush1.bf16.msra.mxu0 0
        %2050 = vmatprep.subr.bf16.mxu0 0
        %2051 = vmatpush1.bf16.msra.mxu0 0
        %2052 = vmatprep.mubr.bf16.mxu0 0
        %2053 = vmatmul.mubr.bf16.gmra.mrb[0].mxu0 %v1293
        %v2054 = vpop.f32.mrb[0].mxu0
        %v2055 = vadd.f32 %v1413, %v2054
        %v2056 = vpop.f32.mrb[0].mxu0
        %v2057 = vadd.f32 %v1417, %v2056
        %v2058 = vpop.f32.mrb[0].mxu0
        %v2059 = vadd.f32 %v1413, %v2058
        %v2060 = vpop.f32.mrb[0].mxu0
        %v2061 = vadd.f32 %v1417, %v2060
        %2062 = vdwg.mxu0
        %2063 = vmatprep.subr.bf16.mxu0 %v1749
        %2064 = vmatpush1.bf16.msra.mxu0 %v1748
        %2065 = vmatprep.subr.bf16.mxu0 %v1761
        %2066 = vmatpush1.bf16.msra.mxu0 %v1760
        %2067 = vmatprep.subr.bf16.mxu0 %v1773
        %2068 = vmatpush1.bf16.msra.mxu0 %v1772
        %2069 = vmatprep.subr.bf16.mxu0 %v1785
        %2070 = vmatpush1.bf16.msra.mxu0 %v1784
        %2071 = vmatprep.subr.bf16.mxu0 %v1797
        %2072 = vmatpush1.bf16.msra.mxu0 %v1796
        %2073 = vmatprep.subr.bf16.mxu0 %v1809
        %2074 = vmatpush1.bf16.msra.mxu0 %v1808
        %2075 = vmatprep.subr.bf16.mxu0 %v1821
        %2076 = vmatpush1.bf16.msra.mxu0 %v1820
        %2077 = vmatprep.subr.bf16.mxu0 %v1833
        %2078 = vmatpush1.bf16.msra.mxu0 %v1832
        %2079 = vmatprep.subr.bf16.mxu0 0
        %2080 = vmatpush1.bf16.msra.mxu0 0
        %2081 = vmatprep.subr.bf16.mxu0 0
        %2082 = vmatpush1.bf16.msra.mxu0 0
        %2083 = vmatprep.subr.bf16.mxu0 0
        %2084 = vmatpush1.bf16.msra.mxu0 0
        %2085 = vmatprep.subr.bf16.mxu0 0
        %2086 = vmatpush1.bf16.msra.mxu0 0
        %2087 = vmatprep.subr.bf16.mxu0 0
        %2088 = vmatpush1.bf16.msra.mxu0 0
        %2089 = vmatprep.subr.bf16.mxu0 0
        %2090 = vmatpush1.bf16.msra.mxu0 0
        %2091 = vmatprep.subr.bf16.mxu0 0
        %2092 = vmatpush1.bf16.msra.mxu0 0
        %2093 = vmatprep.subr.bf16.mxu0 0
        %2094 = vmatpush1.bf16.msra.mxu0 0
        %2095 = vmatprep.mubr.bf16.mxu0 0
        %2096 = vmatmul.mubr.bf16.gmra.mrb[0].mxu0 %v1293
        %v2097 = vpop.f32.mrb[0].mxu0
        %v2098 = vadd.f32 %v1421, %v2097
        %v2099 = vpop.f32.mrb[0].mxu0
        %v2100 = vadd.f32 %v1425, %v2099
        %v2101 = vpop.f32.mrb[0].mxu0
        %v2102 = vadd.f32 %v1421, %v2101
        %v2103 = vpop.f32.mrb[0].mxu0
        %v2104 = vadd.f32 %v1425, %v2103
        %2105 = vdwg.mxu0
        %2106 = vmatprep.subr.bf16.mxu0 %v1751
        %2107 = vmatpush1.bf16.msra.mxu0 %v1750
        %2108 = vmatprep.subr.bf16.mxu0 %v1763
        %2109 = vmatpush1.bf16.msra.mxu0 %v1762
        %2110 = vmatprep.subr.bf16.mxu0 %v1775
        %2111 = vmatpush1.bf16.msra.mxu0 %v1774
        %2112 = vmatprep.subr.bf16.mxu0 %v1787
        %2113 = vmatpush1.bf16.msra.mxu0 %v1786
        %2114 = vmatprep.subr.bf16.mxu0 %v1799
        %2115 = vmatpush1.bf16.msra.mxu0 %v1798
        %2116 = vmatprep.subr.bf16.mxu0 %v1811
        %2117 = vmatpush1.bf16.msra.mxu0 %v1810
        %2118 = vmatprep.subr.bf16.mxu0 %v1823
        %2119 = vmatpush1.bf16.msra.mxu0 %v1822
        %2120 = vmatprep.subr.bf16.mxu0 %v1835
        %2121 = vmatpush1.bf16.msra.mxu0 %v1834
        %2122 = vmatprep.subr.bf16.mxu0 0
        %2123 = vmatpush1.bf16.msra.mxu0 0
        %2124 = vmatprep.subr.bf16.mxu0 0
        %2125 = vmatpush1.bf16.msra.mxu0 0
        %2126 = vmatprep.subr.bf16.mxu0 0
        %2127 = vmatpush1.bf16.msra.mxu0 0
        %2128 = vmatprep.subr.bf16.mxu0 0
        %2129 = vmatpush1.bf16.msra.mxu0 0
        %2130 = vmatprep.subr.bf16.mxu0 0
        %2131 = vmatpush1.bf16.msra.mxu0 0
        %2132 = vmatprep.subr.bf16.mxu0 0
        %2133 = vmatpush1.bf16.msra.mxu0 0
        %2134 = vmatprep.subr.bf16.mxu0 0
        %2135 = vmatpush1.bf16.msra.mxu0 0
        %2136 = vmatprep.subr.bf16.mxu0 0
        %2137 = vmatpush1.bf16.msra.mxu0 0
        %2138 = vmatprep.mubr.bf16.mxu0 0
        %2139 = vmatmul.mubr.bf16.gmra.mrb[0].mxu0 %v1293
        %v2140 = vpop.f32.mrb[0].mxu0
        %v2141 = vadd.f32 %v1429, %v2140
        %v2142 = vpop.f32.mrb[0].mxu0
        %v2143 = vadd.f32 %v1433, %v2142
        %v2144 = vpop.f32.mrb[0].mxu0
        %v2145 = vadd.f32 %v1429, %v2144
        %v2146 = vpop.f32.mrb[0].mxu0
        %v2147 = vadd.f32 %v1433, %v2146
        %2148 = vdwg.mxu0
        %2149 = vmatprep.subr.bf16.mxu0 %v1753
        %2150 = vmatpush1.bf16.msra.mxu0 %v1752
        %2151 = vmatprep.subr.bf16.mxu0 %v1765
        %2152 = vmatpush1.bf16.msra.mxu0 %v1764
        %2153 = vmatprep.subr.bf16.mxu0 %v1777
        %2154 = vmatpush1.bf16.msra.mxu0 %v1776
        %2155 = vmatprep.subr.bf16.mxu0 %v1789
        %2156 = vmatpush1.bf16.msra.mxu0 %v1788
        %2157 = vmatprep.subr.bf16.mxu0 %v1801
        %2158 = vmatpush1.bf16.msra.mxu0 %v1800
        %2159 = vmatprep.subr.bf16.mxu0 %v1813
        %2160 = vmatpush1.bf16.msra.mxu0 %v1812
        %2161 = vmatprep.subr.bf16.mxu0 %v1825
        %2162 = vmatpush1.bf16.msra.mxu0 %v1824
        %2163 = vmatprep.subr.bf16.mxu0 %v1837
        %2164 = vmatpush1.bf16.msra.mxu0 %v1836
        %2165 = vmatprep.subr.bf16.mxu0 0
        %2166 = vmatpush1.bf16.msra.mxu0 0
        %2167 = vmatprep.subr.bf16.mxu0 0
        %2168 = vmatpush1.bf16.msra.mxu0 0
        %2169 = vmatprep.subr.bf16.mxu0 0
        %2170 = vmatpush1.bf16.msra.mxu0 0
        %2171 = vmatprep.subr.bf16.mxu0 0
        %2172 = vmatpush1.bf16.msra.mxu0 0
        %2173 = vmatprep.subr.bf16.mxu0 0
        %2174 = vmatpush1.bf16.msra.mxu0 0
        %2175 = vmatprep.subr.bf16.mxu0 0
        %2176 = vmatpush1.bf16.msra.mxu0 0
        %2177 = vmatprep.subr.bf16.mxu0 0
        %2178 = vmatpush1.bf16.msra.mxu0 0
        %2179 = vmatprep.subr.bf16.mxu0 0
        %2180 = vmatpush1.bf16.msra.mxu0 0
        %2181 = vmatprep.mubr.bf16.mxu0 0
        %2182 = vmatmul.mubr.bf16.gmra.mrb[0].mxu0 %v1293
        %v2183 = vpop.f32.mrb[0].mxu0
        %v2184 = vadd.f32 %v1437, %v2183
        %v2185 = vpop.f32.mrb[0].mxu0
        %v2186 = vadd.f32 %v1441, %v2185
        %v2187 = vpop.f32.mrb[0].mxu0
        %v2188 = vadd.f32 %v1437, %v2187
        %v2189 = vpop.f32.mrb[0].mxu0
        %v2190 = vadd.f32 %v1441, %v2189
        %2191 = vdwg.mxu0
        %v2192 = vpack.c.bf16 %v1973, %v1969
        %v2193 = vpack.c.bf16 %v1975, %v1971
        %v2194 = vpack.c.bf16 %v2016, %v2012
        %v2195 = vpack.c.bf16 %v2018, %v2014
        %v2196 = vpack.c.bf16 %v2059, %v2055
        %v2197 = vpack.c.bf16 %v2061, %v2057
        %v2198 = vpack.c.bf16 %v2102, %v2098
        %v2199 = vpack.c.bf16 %v2104, %v2100
        %v2200 = vpack.c.bf16 %v2145, %v2141
        %v2201 = vpack.c.bf16 %v2147, %v2143
        %v2202 = vpack.c.bf16 %v2188, %v2184
        %v2203 = vpack.c.bf16 %v2190, %v2186
        %2204 = vmatprep.subr.bf16.mxu0 0
        %2205 = vmatpush1.bf16.xpose.msra.mxu0 %v2196
        %2206 = vmatprep.subr.bf16.mxu0 0
        %2207 = vmatpush1.bf16.xpose.msra.mxu0 0
        %2208 = vmatprep.subr.bf16.mxu0 0
        %2209 = vmatpush1.bf16.xpose.msra.mxu0 0
        %2210 = vmatprep.subr.bf16.mxu0 0
        %2211 = vmatpush1.bf16.xpose.msra.mxu0 0
        %2212 = vmatprep.subr.bf16.mxu0 0
        %2213 = vmatpush1.bf16.xpose.msra.mxu0 0
        %2214 = vmatprep.subr.bf16.mxu0 0
        %2215 = vmatpush1.bf16.xpose.msra.mxu0 0
        %2216 = vmatprep.subr.bf16.mxu0 0
        %2217 = vmatpush1.bf16.xpose.msra.mxu0 0
        %2218 = vmatprep.subr.bf16.mxu0 0
        %2219 = vmatpush1.bf16.xpose.msra.mxu0 0
        %2220 = vmatprep.subr.bf16.mxu0 0
        %2221 = vmatpush1.bf16.xpose.msra.mxu0 0
        %2222 = vmatprep.subr.bf16.mxu0 0
        %2223 = vmatpush1.bf16.xpose.msra.mxu0 0
        %2224 = vmatprep.subr.bf16.mxu0 0
        %2225 = vmatpush1.bf16.xpose.msra.mxu0 0
        %2226 = vmatprep.subr.bf16.mxu0 0
        %2227 = vmatpush1.bf16.xpose.msra.mxu0 0
        %2228 = vmatprep.subr.bf16.mxu0 0
        %2229 = vmatpush1.bf16.xpose.msra.mxu0 0
        %2230 = vmatprep.subr.bf16.mxu0 0
        %2231 = vmatpush1.bf16.xpose.msra.mxu0 0
        %2232 = vmatprep.subr.bf16.mxu0 0
        %2233 = vmatpush1.bf16.xpose.msra.mxu0 0
        %2234 = vmatprep.subr.bf16.mxu0 0
        %2235 = vmatpush1.bf16.xpose.msra.mxu0 0
        %2236 = vmatprep.mubr.bf16.mxu0 0
        %2237 = vmatmul.mubr.bf16.gmra.mrb[0].mxu0 %v2192
        %v2238 = vpop.f32.mrb[0].mxu0
        %v2239 = vadd.f32 0.0, %v2238
        %v2240 = vpop.f32.mrb[0].mxu0
        %v2241 = vpop.f32.mrb[0].mxu0
        %v2242 = vadd.f32 0.0, %v2241
        %v2243 = vpop.f32.mrb[0].mxu0
        %2244 = vdwg.mxu0
        %vm2245 = vcmask 130048
        %v2246 = vsel %vm2245, %v2239, -inf
        %2247 = vmax.xlane.f32.xlu0 %v2246
        %v2248 = vpop.xlane.xlu0 %2247
        %v2249 = vsel %vm2245, %v2242, -inf
        %2250 = vmax.xlane.f32.xlu0 %v2249
        %v2251 = vpop.xlane.xlu0 %2250
        %v2252 = vmax.f32 %v2248, -1e+30
        %v2253 = vmax.f32 %v2251, -1e+30
        %v2254 = vsub.f32 -1e+30, %v2252
        %v2255 = vsub.f32 -1e+30, %v2253
        %v2256 = vmul.f32 %v2254, 1.442695
        %v2257 = vpow.pop %v2256
        %v2258 = vmul.f32 %v2255, 1.442695
        %v2259 = vpow.pop %v2258
        %v2260 = vsub.f32 %v2239, %v2252
        %v2261 = vsub.f32 %v2242, %v2253
        %v2262 = vmul.f32 %v2260, 1.442695
        %v2263 = vpow.pop %v2262
        %v2264 = vmul.f32 %v2261, 1.442695
        %v2265 = vpow.pop %v2264
        %v2266 = vmul.f32 %v2257, 0.0
        %v2267 = vmul.f32 %v2259, 0.0
        %v2268 = vsel %vm2245, %v2263, 0.0
        %2269 = vadd.xlane.f32.xlu0 %v2268
        %v2270 = vpop.xlane.xlu0 %2269
        %v2271 = vsel %vm2245, %v2265, 0.0
        %2272 = vadd.xlane.f32.xlu0 %v2271
        %v2273 = vpop.xlane.xlu0 %2272
        %v2274 = vadd.f32 %v2266, %v2270
        %v2275 = vadd.f32 %v2267, %v2273
        %v2276 = vpack.c.bf16 %v2265, %v2263
        %v2278 = vsel %vm2245, %v2276, 0
        %2280 = vmatprep.subr.bf16.mxu0 0
        %2281 = vmatpush1.bf16.msra.mxu0 %v2200
        %2282 = vmatprep.subr.bf16.mxu0 0
        %2283 = vmatpush1.bf16.msra.mxu0 0
        %2284 = vmatprep.subr.bf16.mxu0 0
        %2285 = vmatpush1.bf16.msra.mxu0 0
        %2286 = vmatprep.subr.bf16.mxu0 0
        %2287 = vmatpush1.bf16.msra.mxu0 0
        %2288 = vmatprep.subr.bf16.mxu0 0
        %2289 = vmatpush1.bf16.msra.mxu0 0
        %2290 = vmatprep.subr.bf16.mxu0 0
        %2291 = vmatpush1.bf16.msra.mxu0 0
        %2292 = vmatprep.subr.bf16.mxu0 0
        %2293 = vmatpush1.bf16.msra.mxu0 0
        %2294 = vmatprep.subr.bf16.mxu0 0
        %2295 = vmatpush1.bf16.msra.mxu0 0
        %2296 = vmatprep.subr.bf16.mxu0 0
        %2297 = vmatpush1.bf16.msra.mxu0 0
        %2298 = vmatprep.subr.bf16.mxu0 0
        %2299 = vmatpush1.bf16.msra.mxu0 0
        %2300 = vmatprep.subr.bf16.mxu0 0
        %2301 = vmatpush1.bf16.msra.mxu0 0
        %2302 = vmatprep.subr.bf16.mxu0 0
        %2303 = vmatpush1.bf16.msra.mxu0 0
        %2304 = vmatprep.subr.bf16.mxu0 0
        %2305 = vmatpush1.bf16.msra.mxu0 0
        %2306 = vmatprep.subr.bf16.mxu0 0
        %2307 = vmatpush1.bf16.msra.mxu0 0
        %2308 = vmatprep.subr.bf16.mxu0 0
        %2309 = vmatpush1.bf16.msra.mxu0 0
        %2310 = vmatprep.subr.bf16.mxu0 0
        %2311 = vmatpush1.bf16.msra.mxu0 0
        %2312 = vmatprep.mubr.bf16.mxu0 0
        %2313 = vmatmul.mubr.bf16.gmra.mrb[0].mxu0 %v2278
        %v2314 = vpop.f32.mrb[0].mxu0
        %v2315 = vadd.f32 0.0, %v2314
        %v2316 = vpop.f32.mrb[0].mxu0
        %v2317 = vpop.f32.mrb[0].mxu0
        %v2318 = vadd.f32 0.0, %v2317
        %v2319 = vpop.f32.mrb[0].mxu0
        %2320 = vdwg.mxu0
        %v2321 = vadd.f32 %v2266, %v2315
        %v2322 = vadd.f32 %v2267, %v2318
        %v2323 = vrcp.pop %v2274
        %v2324 = vrcp.pop %v2275
        %v2325 = vmul.f32 %v2321, %v2323
        %v2326 = vmul.f32 %v2322, %v2324
        %v2327 = vpack.c.bf16 %v2326, %v2325
        %v2328 = vld [vmem:[#allocation11] sm:$0xf]
        %v2329 = vld [vmem:[#allocation11 + $0x4] sm:$0xf]
        %v2330 = vld [vmem:[#allocation11 + $0x8] sm:$0xf]
        %v2331 = vld [vmem:[#allocation11 + $0xc] sm:$0xf]
        %v2332 = vld [vmem:[#allocation11 + $0x10] sm:$0xf]
        %v2333 = vld [vmem:[#allocation11 + $0x14] sm:$0xf]
        %v2334 = vld [vmem:[#allocation11 + $0x18] sm:$0xf]
        %v2335 = vld [vmem:[#allocation11 + $0x1c] sm:$0xf]
        %v2336 = vld [vmem:[#allocation11 + $0x20] sm:$0xf]
        %v2337 = vld [vmem:[#allocation11 + $0x24] sm:$0xf]
        %v2338 = vld [vmem:[#allocation11 + $0x28] sm:$0xf]
        %v2339 = vld [vmem:[#allocation11 + $0x2c] sm:$0xf]
        %v2340 = vld [vmem:[#allocation11 + $0x30] sm:$0xf]
        %v2341 = vld [vmem:[#allocation11 + $0x34] sm:$0xf]
        %v2342 = vld [vmem:[#allocation11 + $0x38] sm:$0xf]
        %v2343 = vld [vmem:[#allocation11 + $0x3c] sm:$0xf]
        %v2360 = vunpack.c.l.b16 %v2328
        %v2361 = vunpack.c.l.b16 %v2329
        %v2362 = vunpack.c.l.b16 %v2330
        %v2363 = vunpack.c.l.b16 %v2331
        %v2364 = vunpack.c.l.b16 %v2332
        %v2365 = vunpack.c.l.b16 %v2333
        %v2366 = vunpack.c.l.b16 %v2334
        %v2367 = vunpack.c.l.b16 %v2335
        %v2368 = vunpack.c.l.b16 %v2336
        %v2369 = vunpack.c.l.b16 %v2337
        %v2370 = vunpack.c.l.b16 %v2338
        %v2371 = vunpack.c.l.b16 %v2339
        %v2372 = vunpack.c.l.b16 %v2340
        %v2373 = vunpack.c.l.b16 %v2341
        %v2374 = vunpack.c.l.b16 %v2342
        %v2375 = vunpack.c.l.b16 %v2343
        %v2376 = vpack.c.b16 %v2361, %v2360
        %v2377 = vpack.c.b16 %v2363, %v2362
        %v2378 = vpack.c.b16 %v2365, %v2364
        %v2379 = vpack.c.b16 %v2367, %v2366
        %v2380 = vpack.c.b16 %v2369, %v2368
        %v2381 = vpack.c.b16 %v2371, %v2370
        %v2382 = vpack.c.b16 %v2373, %v2372
        %v2383 = vpack.c.b16 %v2375, %v2374
        %2392 = vmatprep.subr.bf16.mxu0 0
        %2393 = vmatpush1.bf16.msra.mxu0 %v2376
        %2394 = vmatprep.subr.bf16.mxu0 0
        %2395 = vmatpush1.bf16.msra.mxu0 %v2377
        %2396 = vmatprep.subr.bf16.mxu0 0
        %2397 = vmatpush1.bf16.msra.mxu0 %v2378
        %2398 = vmatprep.subr.bf16.mxu0 0
        %2399 = vmatpush1.bf16.msra.mxu0 %v2379
        %2400 = vmatprep.subr.bf16.mxu0 0
        %2401 = vmatpush1.bf16.msra.mxu0 %v2380
        %2402 = vmatprep.subr.bf16.mxu0 0
        %2403 = vmatpush1.bf16.msra.mxu0 %v2381
        %2404 = vmatprep.subr.bf16.mxu0 0
        %2405 = vmatpush1.bf16.msra.mxu0 %v2382
        %2406 = vmatprep.subr.bf16.mxu0 0
        %2407 = vmatpush1.bf16.msra.mxu0 %v2383
        %2408 = vmatprep.subr.bf16.mxu0 0
        %2409 = vmatpush1.bf16.msra.mxu0 0
        %2410 = vmatprep.subr.bf16.mxu0 0
        %2411 = vmatpush1.bf16.msra.mxu0 0
        %2412 = vmatprep.subr.bf16.mxu0 0
        %2413 = vmatpush1.bf16.msra.mxu0 0
        %2414 = vmatprep.subr.bf16.mxu0 0
        %2415 = vmatpush1.bf16.msra.mxu0 0
        %2416 = vmatprep.subr.bf16.mxu0 0
        %2417 = vmatpush1.bf16.msra.mxu0 0
        %2418 = vmatprep.subr.bf16.mxu0 0
        %2419 = vmatpush1.bf16.msra.mxu0 0
        %2420 = vmatprep.subr.bf16.mxu0 0
        %2421 = vmatpush1.bf16.msra.mxu0 0
        %2422 = vmatprep.subr.bf16.mxu0 0
        %2423 = vmatpush1.bf16.msra.mxu0 0
        %2424 = vmatprep.mubr.bf16.mxu0 0
        %2425 = vmatmul.mubr.bf16.gmra.mrb[0].mxu0 %v2327
        %v2426 = vpop.f32.mrb[0].mxu0
        %v2427 = vadd.f32 0.0, %v2426
        %v2428 = vpop.f32.mrb[0].mxu0
        %v2429 = vpop.f32.mrb[0].mxu0
        %v2430 = vadd.f32 0.0, %v2429
        %v2431 = vpop.f32.mrb[0].mxu0
        %2432 = vdwg.mxu0
        %v2433 = vadd.f32 %v919, %v2427
        %v2434 = vadd.f32 %v922, %v2430
        %2435 = vmatprep.subr.bf16.mxu0 0
        %2436 = vmatpush1.bf16.xpose.msra.mxu0 %v2197
        %2437 = vmatprep.subr.bf16.mxu0 0
        %2438 = vmatpush1.bf16.xpose.msra.mxu0 0
        %2439 = vmatprep.subr.bf16.mxu0 0
        %2440 = vmatpush1.bf16.xpose.msra.mxu0 0
        %2441 = vmatprep.subr.bf16.mxu0 0
        %2442 = vmatpush1.bf16.xpose.msra.mxu0 0
        %2443 = vmatprep.subr.bf16.mxu0 0
        %2444 = vmatpush1.bf16.xpose.msra.mxu0 0
        %2445 = vmatprep.subr.bf16.mxu0 0
        %2446 = vmatpush1.bf16.xpose.msra.mxu0 0
        %2447 = vmatprep.subr.bf16.mxu0 0
        %2448 = vmatpush1.bf16.xpose.msra.mxu0 0
        %2449 = vmatprep.subr.bf16.mxu0 0
        %2450 = vmatpush1.bf16.xpose.msra.mxu0 0
        %2451 = vmatprep.subr.bf16.mxu0 0
        %2452 = vmatpush1.bf16.xpose.msra.mxu0 0
        %2453 = vmatprep.subr.bf16.mxu0 0
        %2454 = vmatpush1.bf16.xpose.msra.mxu0 0
        %2455 = vmatprep.subr.bf16.mxu0 0
        %2456 = vmatpush1.bf16.xpose.msra.mxu0 0
        %2457 = vmatprep.subr.bf16.mxu0 0
        %2458 = vmatpush1.bf16.xpose.msra.mxu0 0
        %2459 = vmatprep.subr.bf16.mxu0 0
        %2460 = vmatpush1.bf16.xpose.msra.mxu0 0
        %2461 = vmatprep.subr.bf16.mxu0 0
        %2462 = vmatpush1.bf16.xpose.msra.mxu0 0
        %2463 = vmatprep.subr.bf16.mxu0 0
        %2464 = vmatpush1.bf16.xpose.msra.mxu0 0
        %2465 = vmatprep.subr.bf16.mxu0 0
        %2466 = vmatpush1.bf16.xpose.msra.mxu0 0
        %2467 = vmatprep.mubr.bf16.mxu0 0
        %2468 = vmatmul.mubr.bf16.gmra.mrb[0].mxu0 %v2193
        %v2469 = vpop.f32.mrb[0].mxu0
        %v2470 = vadd.f32 0.0, %v2469
        %v2471 = vpop.f32.mrb[0].mxu0
        %v2472 = vpop.f32.mrb[0].mxu0
        %v2473 = vadd.f32 0.0, %v2472
        %v2474 = vpop.f32.mrb[0].mxu0
        %2475 = vdwg.mxu0
        %v2476 = vsel %vm2245, %v2470, -inf
        %2477 = vmax.xlane.f32.xlu0 %v2476
        %v2478 = vpop.xlane.xlu0 %2477
        %v2479 = vsel %vm2245, %v2473, -inf
        %2480 = vmax.xlane.f32.xlu0 %v2479
        %v2481 = vpop.xlane.xlu0 %2480
        %v2482 = vmax.f32 %v2478, -1e+30
        %v2483 = vmax.f32 %v2481, -1e+30
        %v2484 = vsub.f32 -1e+30, %v2482
        %v2485 = vsub.f32 -1e+30, %v2483
        %v2486 = vmul.f32 %v2484, 1.442695
        %v2487 = vpow.pop %v2486
        %v2488 = vmul.f32 %v2485, 1.442695
        %v2489 = vpow.pop %v2488
        %v2490 = vsub.f32 %v2470, %v2482
        %v2491 = vsub.f32 %v2473, %v2483
        %v2492 = vmul.f32 %v2490, 1.442695
        %v2493 = vpow.pop %v2492
        %v2494 = vmul.f32 %v2491, 1.442695
        %v2495 = vpow.pop %v2494
        %v2496 = vmul.f32 %v2487, 0.0
        %v2497 = vmul.f32 %v2489, 0.0
        %v2498 = vsel %vm2245, %v2493, 0.0
        %2499 = vadd.xlane.f32.xlu0 %v2498
        %v2500 = vpop.xlane.xlu0 %2499
        %v2501 = vsel %vm2245, %v2495, 0.0
        %2502 = vadd.xlane.f32.xlu0 %v2501
        %v2503 = vpop.xlane.xlu0 %2502
        %v2504 = vadd.f32 %v2496, %v2500
        %v2505 = vadd.f32 %v2497, %v2503
        %v2506 = vpack.c.bf16 %v2495, %v2493
        %v2508 = vsel %vm2245, %v2506, 0
        %2510 = vmatprep.subr.bf16.mxu0 0
        %2511 = vmatpush1.bf16.msra.mxu0 %v2201
        %2512 = vmatprep.subr.bf16.mxu0 0
        %2513 = vmatpush1.bf16.msra.mxu0 0
        %2514 = vmatprep.subr.bf16.mxu0 0
        %2515 = vmatpush1.bf16.msra.mxu0 0
        %2516 = vmatprep.subr.bf16.mxu0 0
        %2517 = vmatpush1.bf16.msra.mxu0 0
        %2518 = vmatprep.subr.bf16.mxu0 0
        %2519 = vmatpush1.bf16.msra.mxu0 0
        %2520 = vmatprep.subr.bf16.mxu0 0
        %2521 = vmatpush1.bf16.msra.mxu0 0
        %2522 = vmatprep.subr.bf16.mxu0 0
        %2523 = vmatpush1.bf16.msra.mxu0 0
        %2524 = vmatprep.subr.bf16.mxu0 0
        %2525 = vmatpush1.bf16.msra.mxu0 0
        %2526 = vmatprep.subr.bf16.mxu0 0
        %2527 = vmatpush1.bf16.msra.mxu0 0
        %2528 = vmatprep.subr.bf16.mxu0 0
        %2529 = vmatpush1.bf16.msra.mxu0 0
        %2530 = vmatprep.subr.bf16.mxu0 0
        %2531 = vmatpush1.bf16.msra.mxu0 0
        %2532 = vmatprep.subr.bf16.mxu0 0
        %2533 = vmatpush1.bf16.msra.mxu0 0
        %2534 = vmatprep.subr.bf16.mxu0 0
        %2535 = vmatpush1.bf16.msra.mxu0 0
        %2536 = vmatprep.subr.bf16.mxu0 0
        %2537 = vmatpush1.bf16.msra.mxu0 0
        %2538 = vmatprep.subr.bf16.mxu0 0
        %2539 = vmatpush1.bf16.msra.mxu0 0
        %2540 = vmatprep.subr.bf16.mxu0 0
        %2541 = vmatpush1.bf16.msra.mxu0 0
        %2542 = vmatprep.mubr.bf16.mxu0 0
        %2543 = vmatmul.mubr.bf16.gmra.mrb[0].mxu0 %v2508
        %v2544 = vpop.f32.mrb[0].mxu0
        %v2545 = vadd.f32 0.0, %v2544
        %v2546 = vpop.f32.mrb[0].mxu0
        %v2547 = vpop.f32.mrb[0].mxu0
        %v2548 = vadd.f32 0.0, %v2547
        %v2549 = vpop.f32.mrb[0].mxu0
        %2550 = vdwg.mxu0
        %v2551 = vadd.f32 %v2496, %v2545
        %v2552 = vadd.f32 %v2497, %v2548
        %v2553 = vrcp.pop %v2504
        %v2554 = vrcp.pop %v2505
        %v2555 = vmul.f32 %v2551, %v2553
        %v2556 = vmul.f32 %v2552, %v2554
        %v2557 = vpack.c.bf16 %v2556, %v2555
        %s2558 = scalar_lea.vmem [#allocation11], 64
        %v2559 = vld [vmem:[%s2558] sm:$0xf]
        %v2560 = vld [vmem:[%s2558 + $0x4] sm:$0xf]
        %v2561 = vld [vmem:[%s2558 + $0x8] sm:$0xf]
        %v2562 = vld [vmem:[%s2558 + $0xc] sm:$0xf]
        %v2563 = vld [vmem:[%s2558 + $0x10] sm:$0xf]
        %v2564 = vld [vmem:[%s2558 + $0x14] sm:$0xf]
        %v2565 = vld [vmem:[%s2558 + $0x18] sm:$0xf]
        %v2566 = vld [vmem:[%s2558 + $0x1c] sm:$0xf]
        %v2567 = vld [vmem:[%s2558 + $0x20] sm:$0xf]
        %v2568 = vld [vmem:[%s2558 + $0x24] sm:$0xf]
        %v2569 = vld [vmem:[%s2558 + $0x28] sm:$0xf]
        %v2570 = vld [vmem:[%s2558 + $0x2c] sm:$0xf]
        %v2571 = vld [vmem:[%s2558 + $0x30] sm:$0xf]
        %v2572 = vld [vmem:[%s2558 + $0x34] sm:$0xf]
        %v2573 = vld [vmem:[%s2558 + $0x38] sm:$0xf]
        %v2574 = vld [vmem:[%s2558 + $0x3c] sm:$0xf]
        %v2591 = vunpack.c.l.b16 %v2559
        %v2592 = vunpack.c.l.b16 %v2560
        %v2593 = vunpack.c.l.b16 %v2561
        %v2594 = vunpack.c.l.b16 %v2562
        %v2595 = vunpack.c.l.b16 %v2563
        %v2596 = vunpack.c.l.b16 %v2564
        %v2597 = vunpack.c.l.b16 %v2565
        %v2598 = vunpack.c.l.b16 %v2566
        %v2599 = vunpack.c.l.b16 %v2567
        %v2600 = vunpack.c.l.b16 %v2568
        %v2601 = vunpack.c.l.b16 %v2569
        %v2602 = vunpack.c.l.b16 %v2570
        %v2603 = vunpack.c.l.b16 %v2571
        %v2604 = vunpack.c.l.b16 %v2572
        %v2605 = vunpack.c.l.b16 %v2573
        %v2606 = vunpack.c.l.b16 %v2574
        %v2607 = vpack.c.b16 %v2592, %v2591
        %v2608 = vpack.c.b16 %v2594, %v2593
        %v2609 = vpack.c.b16 %v2596, %v2595
        %v2610 = vpack.c.b16 %v2598, %v2597
        %v2611 = vpack.c.b16 %v2600, %v2599
        %v2612 = vpack.c.b16 %v2602, %v2601
        %v2613 = vpack.c.b16 %v2604, %v2603
        %v2614 = vpack.c.b16 %v2606, %v2605
        %2623 = vmatprep.subr.bf16.mxu0 0
        %2624 = vmatpush1.bf16.msra.mxu0 %v2607
        %2625 = vmatprep.subr.bf16.mxu0 0
        %2626 = vmatpush1.bf16.msra.mxu0 %v2608
        %2627 = vmatprep.subr.bf16.mxu0 0
        %2628 = vmatpush1.bf16.msra.mxu0 %v2609
        %2629 = vmatprep.subr.bf16.mxu0 0
        %2630 = vmatpush1.bf16.msra.mxu0 %v2610
        %2631 = vmatprep.subr.bf16.mxu0 0
        %2632 = vmatpush1.bf16.msra.mxu0 %v2611
        %2633 = vmatprep.subr.bf16.mxu0 0
        %2634 = vmatpush1.bf16.msra.mxu0 %v2612
        %2635 = vmatprep.subr.bf16.mxu0 0
        %2636 = vmatpush1.bf16.msra.mxu0 %v2613
        %2637 = vmatprep.subr.bf16.mxu0 0
        %2638 = vmatpush1.bf16.msra.mxu0 %v2614
        %2639 = vmatprep.subr.bf16.mxu0 0
        %2640 = vmatpush1.bf16.msra.mxu0 0
        %2641 = vmatprep.subr.bf16.mxu0 0
        %2642 = vmatpush1.bf16.msra.mxu0 0
        %2643 = vmatprep.subr.bf16.mxu0 0
        %2644 = vmatpush1.bf16.msra.mxu0 0
        %2645 = vmatprep.subr.bf16.mxu0 0
        %2646 = vmatpush1.bf16.msra.mxu0 0
        %2647 = vmatprep.subr.bf16.mxu0 0
        %2648 = vmatpush1.bf16.msra.mxu0 0
        %2649 = vmatprep.subr.bf16.mxu0 0
        %2650 = vmatpush1.bf16.msra.mxu0 0
        %2651 = vmatprep.subr.bf16.mxu0 0
        %2652 = vmatpush1.bf16.msra.mxu0 0
        %2653 = vmatprep.subr.bf16.mxu0 0
        %2654 = vmatpush1.bf16.msra.mxu0 0
        %2655 = vmatprep.mubr.bf16.mxu0 0
        %2656 = vmatmul.mubr.bf16.gmra.mrb[0].mxu0 %v2557
        %v2657 = vpop.f32.mrb[0].mxu0
        %v2658 = vadd.f32 0.0, %v2657
        %v2659 = vpop.f32.mrb[0].mxu0
        %v2660 = vpop.f32.mrb[0].mxu0
        %v2661 = vadd.f32 0.0, %v2660
        %v2662 = vpop.f32.mrb[0].mxu0
        %2663 = vdwg.mxu0
        %v2664 = vadd.f32 %v2433, %v2658
        %v2665 = vadd.f32 %v2434, %v2661
        %2666 = vmatprep.subr.bf16.mxu0 0
        %2667 = vmatpush1.bf16.xpose.msra.mxu0 %v2198
        %2668 = vmatprep.subr.bf16.mxu0 0
        %2669 = vmatpush1.bf16.xpose.msra.mxu0 0
        %2670 = vmatprep.subr.bf16.mxu0 0
        %2671 = vmatpush1.bf16.xpose.msra.mxu0 0
        %2672 = vmatprep.subr.bf16.mxu0 0
        %2673 = vmatpush1.bf16.xpose.msra.mxu0 0
        %2674 = vmatprep.subr.bf16.mxu0 0
        %2675 = vmatpush1.bf16.xpose.msra.mxu0 0
        %2676 = vmatprep.subr.bf16.mxu0 0
        %2677 = vmatpush1.bf16.xpose.msra.mxu0 0
        %2678 = vmatprep.subr.bf16.mxu0 0
        %2679 = vmatpush1.bf16.xpose.msra.mxu0 0
        %2680 = vmatprep.subr.bf16.mxu0 0
        %2681 = vmatpush1.bf16.xpose.msra.mxu0 0
        %2682 = vmatprep.subr.bf16.mxu0 0
        %2683 = vmatpush1.bf16.xpose.msra.mxu0 0
        %2684 = vmatprep.subr.bf16.mxu0 0
        %2685 = vmatpush1.bf16.xpose.msra.mxu0 0
        %2686 = vmatprep.subr.bf16.mxu0 0
        %2687 = vmatpush1.bf16.xpose.msra.mxu0 0
        %2688 = vmatprep.subr.bf16.mxu0 0
        %2689 = vmatpush1.bf16.xpose.msra.mxu0 0
        %2690 = vmatprep.subr.bf16.mxu0 0
        %2691 = vmatpush1.bf16.xpose.msra.mxu0 0
        %2692 = vmatprep.subr.bf16.mxu0 0
        %2693 = vmatpush1.bf16.xpose.msra.mxu0 0
        %2694 = vmatprep.subr.bf16.mxu0 0
        %2695 = vmatpush1.bf16.xpose.msra.mxu0 0
        %2696 = vmatprep.subr.bf16.mxu0 0
        %2697 = vmatpush1.bf16.xpose.msra.mxu0 0
        %2698 = vmatprep.mubr.bf16.mxu0 0
        %2699 = vmatmul.mubr.bf16.gmra.mrb[0].mxu0 %v2194
        %v2700 = vpop.f32.mrb[0].mxu0
        %v2701 = vadd.f32 0.0, %v2700
        %v2702 = vpop.f32.mrb[0].mxu0
        %v2703 = vpop.f32.mrb[0].mxu0
        %v2704 = vadd.f32 0.0, %v2703
        %v2705 = vpop.f32.mrb[0].mxu0
        %2706 = vdwg.mxu0
        %v2707 = vsel %vm2245, %v2701, -inf
        %2708 = vmax.xlane.f32.xlu0 %v2707
        %v2709 = vpop.xlane.xlu0 %2708
        %v2710 = vsel %vm2245, %v2704, -inf
        %2711 = vmax.xlane.f32.xlu0 %v2710
        %v2712 = vpop.xlane.xlu0 %2711
        %v2713 = vmax.f32 %v2709, -1e+30
        %v2714 = vmax.f32 %v2712, -1e+30
        %v2715 = vsub.f32 -1e+30, %v2713
        %v2716 = vsub.f32 -1e+30, %v2714
        %v2717 = vmul.f32 %v2715, 1.442695
        %v2718 = vpow.pop %v2717
        %v2719 = vmul.f32 %v2716, 1.442695
        %v2720 = vpow.pop %v2719
        %v2721 = vsub.f32 %v2701, %v2713
        %v2722 = vsub.f32 %v2704, %v2714
        %v2723 = vmul.f32 %v2721, 1.442695
        %v2724 = vpow.pop %v2723
        %v2725 = vmul.f32 %v2722, 1.442695
        %v2726 = vpow.pop %v2725
        %v2727 = vmul.f32 %v2718, 0.0
        %v2728 = vmul.f32 %v2720, 0.0
        %v2729 = vsel %vm2245, %v2724, 0.0
        %2730 = vadd.xlane.f32.xlu0 %v2729
        %v2731 = vpop.xlane.xlu0 %2730
        %v2732 = vsel %vm2245, %v2726, 0.0
        %2733 = vadd.xlane.f32.xlu0 %v2732
        %v2734 = vpop.xlane.xlu0 %2733
        %v2735 = vadd.f32 %v2727, %v2731
        %v2736 = vadd.f32 %v2728, %v2734
        %v2737 = vpack.c.bf16 %v2726, %v2724
        %v2739 = vsel %vm2245, %v2737, 0
        %2741 = vmatprep.subr.bf16.mxu0 0
        %2742 = vmatpush1.bf16.msra.mxu0 %v2202
        %2743 = vmatprep.subr.bf16.mxu0 0
        %2744 = vmatpush1.bf16.msra.mxu0 0
        %2745 = vmatprep.subr.bf16.mxu0 0
        %2746 = vmatpush1.bf16.msra.mxu0 0
        %2747 = vmatprep.subr.bf16.mxu0 0
        %2748 = vmatpush1.bf16.msra.mxu0 0
        %2749 = vmatprep.subr.bf16.mxu0 0
        %2750 = vmatpush1.bf16.msra.mxu0 0
        %2751 = vmatprep.subr.bf16.mxu0 0
        %2752 = vmatpush1.bf16.msra.mxu0 0
        %2753 = vmatprep.subr.bf16.mxu0 0
        %2754 = vmatpush1.bf16.msra.mxu0 0
        %2755 = vmatprep.subr.bf16.mxu0 0
        %2756 = vmatpush1.bf16.msra.mxu0 0
        %2757 = vmatprep.subr.bf16.mxu0 0
        %2758 = vmatpush1.bf16.msra.mxu0 0
        %2759 = vmatprep.subr.bf16.mxu0 0
        %2760 = vmatpush1.bf16.msra.mxu0 0
        %2761 = vmatprep.subr.bf16.mxu0 0
        %2762 = vmatpush1.bf16.msra.mxu0 0
        %2763 = vmatprep.subr.bf16.mxu0 0
        %2764 = vmatpush1.bf16.msra.mxu0 0
        %2765 = vmatprep.subr.bf16.mxu0 0
        %2766 = vmatpush1.bf16.msra.mxu0 0
        %2767 = vmatprep.subr.bf16.mxu0 0
        %2768 = vmatpush1.bf16.msra.mxu0 0
        %2769 = vmatprep.subr.bf16.mxu0 0
        %2770 = vmatpush1.bf16.msra.mxu0 0
        %2771 = vmatprep.subr.bf16.mxu0 0
        %2772 = vmatpush1.bf16.msra.mxu0 0
        %2773 = vmatprep.mubr.bf16.mxu0 0
        %2774 = vmatmul.mubr.bf16.gmra.mrb[0].mxu0 %v2739
        %v2775 = vpop.f32.mrb[0].mxu0
        %v2776 = vadd.f32 0.0, %v2775
        %v2777 = vpop.f32.mrb[0].mxu0
        %v2778 = vpop.f32.mrb[0].mxu0
        %v2779 = vadd.f32 0.0, %v2778
        %v2780 = vpop.f32.mrb[0].mxu0
        %2781 = vdwg.mxu0
        %v2782 = vadd.f32 %v2727, %v2776
        %v2783 = vadd.f32 %v2728, %v2779
        %v2784 = vrcp.pop %v2735
        %v2785 = vrcp.pop %v2736
        %v2786 = vmul.f32 %v2782, %v2784
        %v2787 = vmul.f32 %v2783, %v2785
        %v2788 = vpack.c.bf16 %v2787, %v2786
        %s2789 = scalar_lea.vmem [#allocation11], 128
        %v2790 = vld [vmem:[%s2789] sm:$0xf]
        %v2791 = vld [vmem:[%s2789 + $0x4] sm:$0xf]
        %v2792 = vld [vmem:[%s2789 + $0x8] sm:$0xf]
        %v2793 = vld [vmem:[%s2789 + $0xc] sm:$0xf]
        %v2794 = vld [vmem:[%s2789 + $0x10] sm:$0xf]
        %v2795 = vld [vmem:[%s2789 + $0x14] sm:$0xf]
        %v2796 = vld [vmem:[%s2789 + $0x18] sm:$0xf]
        %v2797 = vld [vmem:[%s2789 + $0x1c] sm:$0xf]
        %v2798 = vld [vmem:[%s2789 + $0x20] sm:$0xf]
        %v2799 = vld [vmem:[%s2789 + $0x24] sm:$0xf]
        %v2800 = vld [vmem:[%s2789 + $0x28] sm:$0xf]
        %v2801 = vld [vmem:[%s2789 + $0x2c] sm:$0xf]
        %v2802 = vld [vmem:[%s2789 + $0x30] sm:$0xf]
        %v2803 = vld [vmem:[%s2789 + $0x34] sm:$0xf]
        %v2804 = vld [vmem:[%s2789 + $0x38] sm:$0xf]
        %v2805 = vld [vmem:[%s2789 + $0x3c] sm:$0xf]
        %v2822 = vunpack.c.l.b16 %v2790
        %v2823 = vunpack.c.l.b16 %v2791
        %v2824 = vunpack.c.l.b16 %v2792
        %v2825 = vunpack.c.l.b16 %v2793
        %v2826 = vunpack.c.l.b16 %v2794
        %v2827 = vunpack.c.l.b16 %v2795
        %v2828 = vunpack.c.l.b16 %v2796
        %v2829 = vunpack.c.l.b16 %v2797
        %v2830 = vunpack.c.l.b16 %v2798
        %v2831 = vunpack.c.l.b16 %v2799
        %v2832 = vunpack.c.l.b16 %v2800
        %v2833 = vunpack.c.l.b16 %v2801
        %v2834 = vunpack.c.l.b16 %v2802
        %v2835 = vunpack.c.l.b16 %v2803
        %v2836 = vunpack.c.l.b16 %v2804
        %v2837 = vunpack.c.l.b16 %v2805
        %v2838 = vpack.c.b16 %v2823, %v2822
        %v2839 = vpack.c.b16 %v2825, %v2824
        %v2840 = vpack.c.b16 %v2827, %v2826
        %v2841 = vpack.c.b16 %v2829, %v2828
        %v2842 = vpack.c.b16 %v2831, %v2830
        %v2843 = vpack.c.b16 %v2833, %v2832
        %v2844 = vpack.c.b16 %v2835, %v2834
        %v2845 = vpack.c.b16 %v2837, %v2836
        %2854 = vmatprep.subr.bf16.mxu0 0
        %2855 = vmatpush1.bf16.msra.mxu0 %v2838
        %2856 = vmatprep.subr.bf16.mxu0 0
        %2857 = vmatpush1.bf16.msra.mxu0 %v2839
        %2858 = vmatprep.subr.bf16.mxu0 0
        %2859 = vmatpush1.bf16.msra.mxu0 %v2840
        %2860 = vmatprep.subr.bf16.mxu0 0
        %2861 = vmatpush1.bf16.msra.mxu0 %v2841
        %2862 = vmatprep.subr.bf16.mxu0 0
        %2863 = vmatpush1.bf16.msra.mxu0 %v2842
        %2864 = vmatprep.subr.bf16.mxu0 0
        %2865 = vmatpush1.bf16.msra.mxu0 %v2843
        %2866 = vmatprep.subr.bf16.mxu0 0
        %2867 = vmatpush1.bf16.msra.mxu0 %v2844
        %2868 = vmatprep.subr.bf16.mxu0 0
        %2869 = vmatpush1.bf16.msra.mxu0 %v2845
        %2870 = vmatprep.subr.bf16.mxu0 0
        %2871 = vmatpush1.bf16.msra.mxu0 0
        %2872 = vmatprep.subr.bf16.mxu0 0
        %2873 = vmatpush1.bf16.msra.mxu0 0
        %2874 = vmatprep.subr.bf16.mxu0 0
        %2875 = vmatpush1.bf16.msra.mxu0 0
        %2876 = vmatprep.subr.bf16.mxu0 0
        %2877 = vmatpush1.bf16.msra.mxu0 0
        %2878 = vmatprep.subr.bf16.mxu0 0
        %2879 = vmatpush1.bf16.msra.mxu0 0
        %2880 = vmatprep.subr.bf16.mxu0 0
        %2881 = vmatpush1.bf16.msra.mxu0 0
        %2882 = vmatprep.subr.bf16.mxu0 0
        %2883 = vmatpush1.bf16.msra.mxu0 0
        %2884 = vmatprep.subr.bf16.mxu0 0
        %2885 = vmatpush1.bf16.msra.mxu0 0
        %2886 = vmatprep.mubr.bf16.mxu0 0
        %2887 = vmatmul.mubr.bf16.gmra.mrb[0].mxu0 %v2788
        %v2888 = vpop.f32.mrb[0].mxu0
        %v2889 = vadd.f32 0.0, %v2888
        %v2890 = vpop.f32.mrb[0].mxu0
        %v2891 = vpop.f32.mrb[0].mxu0
        %v2892 = vadd.f32 0.0, %v2891
        %v2893 = vpop.f32.mrb[0].mxu0
        %2894 = vdwg.mxu0
        %v2895 = vadd.f32 %v2664, %v2889
        %v2896 = vadd.f32 %v2665, %v2892
        %2897 = vmatprep.subr.bf16.mxu0 0
        %2898 = vmatpush1.bf16.xpose.msra.mxu0 %v2199
        %2899 = vmatprep.subr.bf16.mxu0 0
        %2900 = vmatpush1.bf16.xpose.msra.mxu0 0
        %2901 = vmatprep.subr.bf16.mxu0 0
        %2902 = vmatpush1.bf16.xpose.msra.mxu0 0
        %2903 = vmatprep.subr.bf16.mxu0 0
        %2904 = vmatpush1.bf16.xpose.msra.mxu0 0
        %2905 = vmatprep.subr.bf16.mxu0 0
        %2906 = vmatpush1.bf16.xpose.msra.mxu0 0
        %2907 = vmatprep.subr.bf16.mxu0 0
        %2908 = vmatpush1.bf16.xpose.msra.mxu0 0
        %2909 = vmatprep.subr.bf16.mxu0 0
        %2910 = vmatpush1.bf16.xpose.msra.mxu0 0
        %2911 = vmatprep.subr.bf16.mxu0 0
        %2912 = vmatpush1.bf16.xpose.msra.mxu0 0
        %2913 = vmatprep.subr.bf16.mxu0 0
        %2914 = vmatpush1.bf16.xpose.msra.mxu0 0
        %2915 = vmatprep.subr.bf16.mxu0 0
        %2916 = vmatpush1.bf16.xpose.msra.mxu0 0
        %2917 = vmatprep.subr.bf16.mxu0 0
        %2918 = vmatpush1.bf16.xpose.msra.mxu0 0
        %2919 = vmatprep.subr.bf16.mxu0 0
        %2920 = vmatpush1.bf16.xpose.msra.mxu0 0
        %2921 = vmatprep.subr.bf16.mxu0 0
        %2922 = vmatpush1.bf16.xpose.msra.mxu0 0
        %2923 = vmatprep.subr.bf16.mxu0 0
        %2924 = vmatpush1.bf16.xpose.msra.mxu0 0
        %2925 = vmatprep.subr.bf16.mxu0 0
        %2926 = vmatpush1.bf16.xpose.msra.mxu0 0
        %2927 = vmatprep.subr.bf16.mxu0 0
        %2928 = vmatpush1.bf16.xpose.msra.mxu0 0
        %2929 = vmatprep.mubr.bf16.mxu0 0
        %2930 = vmatmul.mubr.bf16.gmra.mrb[0].mxu0 %v2195
        %v2931 = vpop.f32.mrb[0].mxu0
        %v2932 = vadd.f32 0.0, %v2931
        %v2933 = vpop.f32.mrb[0].mxu0
        %v2934 = vpop.f32.mrb[0].mxu0
        %v2935 = vadd.f32 0.0, %v2934
        %v2936 = vpop.f32.mrb[0].mxu0
        %2937 = vdwg.mxu0
        %v2938 = vsel %vm2245, %v2932, -inf
        %2939 = vmax.xlane.f32.xlu0 %v2938
        %v2940 = vpop.xlane.xlu0 %2939
        %v2941 = vsel %vm2245, %v2935, -inf
        %2942 = vmax.xlane.f32.xlu0 %v2941
        %v2943 = vpop.xlane.xlu0 %2942
        %v2944 = vmax.f32 %v2940, -1e+30
        %v2945 = vmax.f32 %v2943, -1e+30
        %v2946 = vsub.f32 -1e+30, %v2944
        %v2947 = vsub.f32 -1e+30, %v2945
        %v2948 = vmul.f32 %v2946, 1.442695
        %v2949 = vpow.pop %v2948
        %v2950 = vmul.f32 %v2947, 1.442695
        %v2951 = vpow.pop %v2950
        %v2952 = vsub.f32 %v2932, %v2944
        %v2953 = vsub.f32 %v2935, %v2945
        %v2954 = vmul.f32 %v2952, 1.442695
        %v2955 = vpow.pop %v2954
        %v2956 = vmul.f32 %v2953, 1.442695
        %v2957 = vpow.pop %v2956
        %v2958 = vmul.f32 %v2949, 0.0
        %v2959 = vmul.f32 %v2951, 0.0
        %v2960 = vsel %vm2245, %v2955, 0.0
        %2961 = vadd.xlane.f32.xlu0 %v2960
        %v2962 = vpop.xlane.xlu0 %2961
        %v2963 = vsel %vm2245, %v2957, 0.0
        %2964 = vadd.xlane.f32.xlu0 %v2963
        %v2965 = vpop.xlane.xlu0 %2964
        %v2966 = vadd.f32 %v2958, %v2962
        %v2967 = vadd.f32 %v2959, %v2965
        %v2968 = vpack.c.bf16 %v2957, %v2955
        %v2970 = vsel %vm2245, %v2968, 0
        %2972 = vmatprep.subr.bf16.mxu0 0
        %2973 = vmatpush1.bf16.msra.mxu0 %v2203
        %2974 = vmatprep.subr.bf16.mxu0 0
        %2975 = vmatpush1.bf16.msra.mxu0 0
        %2976 = vmatprep.subr.bf16.mxu0 0
        %2977 = vmatpush1.bf16.msra.mxu0 0
        %2978 = vmatprep.subr.bf16.mxu0 0
        %2979 = vmatpush1.bf16.msra.mxu0 0
        %2980 = vmatprep.subr.bf16.mxu0 0
        %2981 = vmatpush1.bf16.msra.mxu0 0
        %2982 = vmatprep.subr.bf16.mxu0 0
        %2983 = vmatpush1.bf16.msra.mxu0 0
        %2984 = vmatprep.subr.bf16.mxu0 0
        %2985 = vmatpush1.bf16.msra.mxu0 0
        %2986 = vmatprep.subr.bf16.mxu0 0
        %2987 = vmatpush1.bf16.msra.mxu0 0
        %2988 = vmatprep.subr.bf16.mxu0 0
        %2989 = vmatpush1.bf16.msra.mxu0 0
        %2990 = vmatprep.subr.bf16.mxu0 0
        %2991 = vmatpush1.bf16.msra.mxu0 0
        %2992 = vmatprep.subr.bf16.mxu0 0
        %2993 = vmatpush1.bf16.msra.mxu0 0
        %2994 = vmatprep.subr.bf16.mxu0 0
        %2995 = vmatpush1.bf16.msra.mxu0 0
        %2996 = vmatprep.subr.bf16.mxu0 0
        %2997 = vmatpush1.bf16.msra.mxu0 0
        %2998 = vmatprep.subr.bf16.mxu0 0
        %2999 = vmatpush1.bf16.msra.mxu0 0
        %3000 = vmatprep.subr.bf16.mxu0 0
        %3001 = vmatpush1.bf16.msra.mxu0 0
        %3002 = vmatprep.subr.bf16.mxu0 0
        %3003 = vmatpush1.bf16.msra.mxu0 0
        %3004 = vmatprep.mubr.bf16.mxu0 0
        %3005 = vmatmul.mubr.bf16.gmra.mrb[0].mxu0 %v2970
        %v3006 = vpop.f32.mrb[0].mxu0
        %v3007 = vadd.f32 0.0, %v3006
        %v3008 = vpop.f32.mrb[0].mxu0
        %v3009 = vpop.f32.mrb[0].mxu0
        %v3010 = vadd.f32 0.0, %v3009
        %v3011 = vpop.f32.mrb[0].mxu0
        %3012 = vdwg.mxu0
        %v3013 = vadd.f32 %v2958, %v3007
        %v3014 = vadd.f32 %v2959, %v3010
        %v3015 = vrcp.pop %v2966
        %v3016 = vrcp.pop %v2967
        %v3017 = vmul.f32 %v3013, %v3015
        %v3018 = vmul.f32 %v3014, %v3016
        %v3019 = vpack.c.bf16 %v3018, %v3017
        %s3020 = scalar_lea.vmem [#allocation11], 192
        %v3021 = vld [vmem:[%s3020] sm:$0xf]
        %v3022 = vld [vmem:[%s3020 + $0x4] sm:$0xf]
        %v3023 = vld [vmem:[%s3020 + $0x8] sm:$0xf]
        %v3024 = vld [vmem:[%s3020 + $0xc] sm:$0xf]
        %v3025 = vld [vmem:[%s3020 + $0x10] sm:$0xf]
        %v3026 = vld [vmem:[%s3020 + $0x14] sm:$0xf]
        %v3027 = vld [vmem:[%s3020 + $0x18] sm:$0xf]
        %v3028 = vld [vmem:[%s3020 + $0x1c] sm:$0xf]
        %v3029 = vld [vmem:[%s3020 + $0x20] sm:$0xf]
        %v3030 = vld [vmem:[%s3020 + $0x24] sm:$0xf]
        %v3031 = vld [vmem:[%s3020 + $0x28] sm:$0xf]
        %v3032 = vld [vmem:[%s3020 + $0x2c] sm:$0xf]
        %v3033 = vld [vmem:[%s3020 + $0x30] sm:$0xf]
        %v3034 = vld [vmem:[%s3020 + $0x34] sm:$0xf]
        %v3035 = vld [vmem:[%s3020 + $0x38] sm:$0xf]
        %v3036 = vld [vmem:[%s3020 + $0x3c] sm:$0xf]
        %v3053 = vunpack.c.l.b16 %v3021
        %v3054 = vunpack.c.l.b16 %v3022
        %v3055 = vunpack.c.l.b16 %v3023
        %v3056 = vunpack.c.l.b16 %v3024
        %v3057 = vunpack.c.l.b16 %v3025
        %v3058 = vunpack.c.l.b16 %v3026
        %v3059 = vunpack.c.l.b16 %v3027
        %v3060 = vunpack.c.l.b16 %v3028
        %v3061 = vunpack.c.l.b16 %v3029
        %v3062 = vunpack.c.l.b16 %v3030
        %v3063 = vunpack.c.l.b16 %v3031
        %v3064 = vunpack.c.l.b16 %v3032
        %v3065 = vunpack.c.l.b16 %v3033
        %v3066 = vunpack.c.l.b16 %v3034
        %v3067 = vunpack.c.l.b16 %v3035
        %v3068 = vunpack.c.l.b16 %v3036
        %v3069 = vpack.c.b16 %v3054, %v3053
        %v3070 = vpack.c.b16 %v3056, %v3055
        %v3071 = vpack.c.b16 %v3058, %v3057
        %v3072 = vpack.c.b16 %v3060, %v3059
        %v3073 = vpack.c.b16 %v3062, %v3061
        %v3074 = vpack.c.b16 %v3064, %v3063
        %v3075 = vpack.c.b16 %v3066, %v3065
        %v3076 = vpack.c.b16 %v3068, %v3067
        %3085 = vmatprep.subr.bf16.mxu0 0
        %3086 = vmatpush1.bf16.msra.mxu0 %v3069
        %3087 = vmatprep.subr.bf16.mxu0 0
        %3088 = vmatpush1.bf16.msra.mxu0 %v3070
        %3089 = vmatprep.subr.bf16.mxu0 0
        %3090 = vmatpush1.bf16.msra.mxu0 %v3071
        %3091 = vmatprep.subr.bf16.mxu0 0
        %3092 = vmatpush1.bf16.msra.mxu0 %v3072
        %3093 = vmatprep.subr.bf16.mxu0 0
        %3094 = vmatpush1.bf16.msra.mxu0 %v3073
        %3095 = vmatprep.subr.bf16.mxu0 0
        %3096 = vmatpush1.bf16.msra.mxu0 %v3074
        %3097 = vmatprep.subr.bf16.mxu0 0
        %3098 = vmatpush1.bf16.msra.mxu0 %v3075
        %3099 = vmatprep.subr.bf16.mxu0 0
        %3100 = vmatpush1.bf16.msra.mxu0 %v3076
        %3101 = vmatprep.subr.bf16.mxu0 0
        %3102 = vmatpush1.bf16.msra.mxu0 0
        %3103 = vmatprep.subr.bf16.mxu0 0
        %3104 = vmatpush1.bf16.msra.mxu0 0
        %3105 = vmatprep.subr.bf16.mxu0 0
        %3106 = vmatpush1.bf16.msra.mxu0 0
        %3107 = vmatprep.subr.bf16.mxu0 0
        %3108 = vmatpush1.bf16.msra.mxu0 0
        %3109 = vmatprep.subr.bf16.mxu0 0
        %3110 = vmatpush1.bf16.msra.mxu0 0
        %3111 = vmatprep.subr.bf16.mxu0 0
        %3112 = vmatpush1.bf16.msra.mxu0 0
        %3113 = vmatprep.subr.bf16.mxu0 0
        %3114 = vmatpush1.bf16.msra.mxu0 0
        %3115 = vmatprep.subr.bf16.mxu0 0
        %3116 = vmatpush1.bf16.msra.mxu0 0
        %3117 = vmatprep.mubr.bf16.mxu0 0
        %3118 = vmatmul.mubr.bf16.gmra.mrb[0].mxu0 %v3019
        %v3119 = vpop.f32.mrb[0].mxu0
        %v3120 = vadd.f32 0.0, %v3119
        %v3121 = vpop.f32.mrb[0].mxu0
        %v3122 = vpop.f32.mrb[0].mxu0
        %v3123 = vadd.f32 0.0, %v3122
        %v3124 = vpop.f32.mrb[0].mxu0
        %3125 = vdwg.mxu0
        %v3126 = vadd.f32 %v2895, %v3120
        %v3127 = vadd.f32 %v2896, %v3123
        %v3128 = vld [vmem:[%s10] sm:$0x1]
        %v3130 = vlaneseq
        %v3131 = vshrl.u32 %v3130, 7
        %v3132 = vsub.s32 0, %v3131
        %v3133 = vrot.slane %v3128, %v3132
        %v3135 = vadd.f32 %v3126, %v3133
        %v3136 = vadd.f32 %v3127, %v3133
        %v3137 = vmax.f32 %v3135, 0.0
        %v3138 = vmax.f32 %v3136, 0.0
        %3139 = vst [vmem:[%s452] sm:$0xff] %v3137
        %3140 = vst [vmem:[%s452 + $0x8] sm:$0xff] %v3138
        %s3141 = sand.u32 %s272, 1
        %s3142 = scalar_lea.sflag [#allocation5], %s3141
        %s3143 = sand.u32 %s272, 1
        %s3144 = smul.addr %s3143, 16
        %s3145 = scalar_lea.vmem [#allocation12], %s3144
        // Predicated region
        $region85: #{tpu_custom_call.1} parent=63 // pred_check
          %p3146 = pneg %p282
        $region86: #{tpu_custom_call.1} parent=63 // pred_check_branch
          %3148 = sbr.rel (%p3146) target = $region88
        $region87: #{tpu_custom_call.1} parent=63 // pred_region
          %s3150 = ssub.s32 256, 256
          %3151 = vsyncadd %s3142, %s3150
          %s3152 = smul.addr %s28, 2
          %s3153 = smul.addr %s3152, 128
          %s3154 = scalar_lea.hbm %s11, %s3153
          %s3155 = sshll.u32 %s3145, 4
          %s3156 = int_to_ptr.vmem [resolvable:$true] %s3155
          %3161 = dma.vmem_to_hbm [thread:$0]  %s3156, 256, %s3154, %s3142, 128, 128, 8
        $region88: #{tpu_custom_call.1} parent=63 // pred_fallthru
          _
      $region64: #{tpu_custom_call.1} parent=5 // pred_fallthru
        _
      %p3162 = scmp.le.s32.totalorder 2, %s23
      // Predicated region
      $region89: #{tpu_custom_call.1} parent=5 // pred_check
        %p3163 = pneg %p3162
      $region90: #{tpu_custom_call.1} parent=5 // pred_check_branch
        %3165 = sbr.rel (%p3163) target = $region92
      $region91: #{tpu_custom_call.1} parent=5 // pred_region
        %s3166 = ssub.s32 %s23, 2
        // Predicated region
        $region93: #{tpu_custom_call.1} parent=91 // pred_check
          %p3167 = pneg %p288
        $region94: #{tpu_custom_call.1} parent=91 // pred_check_branch
          %3169 = sbr.rel (%p3167) target = $region96
        $region95: #{tpu_custom_call.1} parent=91 // pred_region
          %s3170 = sand.u32 %s273, 1
          %s3171 = scalar_lea.sflag [#allocation5], %s3170
          %s3172 = sand.u32 %s273, 1
          %s3173 = smul.addr %s3172, 16
          %s3174 = scalar_lea.vmem [#allocation12], %s3173
          %3175 = dma.done %s3171, 256
        $region96: #{tpu_custom_call.1} parent=91 // pred_fallthru
          _
      $region92: #{tpu_custom_call.1} parent=5 // pred_fallthru
        _
    $region6: #{tpu_custom_call.1} parent=1 // loop_footer
      %s27 = sadd.s32 1, %s23
    $region7: #{tpu_custom_call.1} parent=1 // loop_footer_branch
      %22 = sbr.rel target = $region3
    $region8: #{tpu_custom_call.1} parent=1 // loop_exit
      _
    %3176 = vsyncpa [#allocation4], 1
    %s3177 = scalar_lea.sflag [#allocation4], 1
    %3178 = vsyncpa %s3177, 1
    %3179 = vsyncpa [#allocation7], 1
    %3180 = vsyncpa [#allocation10], 1
    %3181 = vsyncpa [#allocation5], 1
    %s3182 = scalar_lea.sflag [#allocation5], 1
    %3183 = vsyncpa %s3182, 1

</llo_original>
